<compile_context>
chip_gen: v6e
topology: v6e:2x2x1
jax: 0.10.0
libtpu: 0.0.40
codegen_flags: <defaults>
</compile_context>

<pallas_src>
import functools

import jax
import jax.numpy as jnp
from jax.experimental import pallas as pl
from jax.experimental.pallas import tpu as pltpu

N_EMBD = 60
N_HEAD = 6
HEAD_SIZE = N_EMBD // N_HEAD          # 10
HIDDEN = 4 * N_EMBD                   # 240
HIDDEN_PAD = 256                      # lane-dense FFN hidden (multiple of 128)
LN_EPS = 1e-5
NEG_INF = -1e30                       # finite mask value (robust vs -inf)


def _layernorm(x, g, b):
    mu = jnp.mean(x, axis=-1, keepdims=True)
    var = jnp.mean(jnp.square(x - mu), axis=-1, keepdims=True)
    return (x - mu) * jax.lax.rsqrt(var + LN_EPS) * g + b


def block_kernel(x_ref, vec_ref, wqkvb_ref, woh_ref, w1b_ref, w2_ref, o_ref,
                 *, bc, seq_len):
    """One chunk of `bc` batch elements, flattened to (bc*seq_len, C) rows."""
    N, C = x_ref.shape                        # N = bc * seq_len
    T = seq_len
    assert N == bc * T
    W = 3 * HEAD_SIZE                         # per-head fused q|k|v width

    x = x_ref[...]                            # (N, C)

    ln1_g = vec_ref[0:1, :]
    ln1_b = vec_ref[1:2, :]
    ln2_g = vec_ref[2:3, :]
    ln2_b = vec_ref[3:4, :]
    bo    = vec_ref[4:5, :]
    b2    = vec_ref[5:6, :]

    # ---------------- self-attention branch ----------------
    xn = _layernorm(x, ln1_g, ln1_b)
    wqkv = wqkvb_ref[:C, :]                   # (C, 3C), head-major [q|k|v] blocks
    bqkv = wqkvb_ref[C:C + 1, :]              # (1, 3C)
    qkv = jnp.dot(xn, wqkv, preferred_element_type=jnp.float32) + bqkv   # (N, 3C)

    # Stack heads along a leading (batch) dim: (H, N, 3*hs).
    qkv_h = jnp.stack([qkv[:, h * W:(h + 1) * W] for h in range(N_HEAD)], axis=0)
    # Split rows back into (batch, time) so attention stays per batch element:
    # (H, bc*T, 3*hs) -> (H*bc, T, 3*hs).  T is a multiple of the 8-row sublane
    # tile, so this reshape is tile-order preserving.
    qkv_h = qkv_h.reshape(N_HEAD * bc, T, W)
    q = qkv_h[:, :, :HEAD_SIZE]               # scale already folded into weights
    k = qkv_h[:, :, HEAD_SIZE:2 * HEAD_SIZE]
    v = qkv_h[:, :, 2 * HEAD_SIZE:]

    row = jax.lax.broadcasted_iota(jnp.int32, (T, T), 0)
    col = jax.lax.broadcasted_iota(jnp.int32, (T, T), 1)
    causal = (col <= row)[None, :, :]         # shared by every (head, batch) slab

    # Batched over all H*bc (head, batch) slabs at once.
    s = jnp.einsum('nqd,nkd->nqk', q, k, preferred_element_type=jnp.float32)
    s = jnp.where(causal, s, NEG_INF)
    s = s - jnp.max(s, axis=-1, keepdims=True)
    p = jnp.exp(s)
    p = p * pl.reciprocal(jnp.sum(p, axis=-1, keepdims=True), approx=True)
    # TODO(synk): attention/proj/ffwd dropout treated as identity (eval mode).
    pv = jnp.einsum('nqk,nkd->nqd', p, v, preferred_element_type=jnp.float32)

    # Output projection without concatenating heads:
    #   concat_h(pv_h) @ wo  ==  sum_h  pv_h @ wo[h*hs:(h+1)*hs, :]
    pv = pv.reshape(N_HEAD, N, HEAD_SIZE)
    proj = jnp.einsum('hnd,hdc->hnc', pv, woh_ref[...],
                      preferred_element_type=jnp.float32)
    sa = jnp.sum(proj, axis=0) + bo
    x = x + sa

    # ---------------- feed-forward branch ----------------
    xn2 = _layernorm(x, ln2_g, ln2_b)
    w1 = w1b_ref[:C, :]                       # (C, HIDDEN_PAD), zero-padded cols
    b1 = w1b_ref[C:C + 1, :]                  # (1, HIDDEN_PAD), zero-padded
    h1 = jnp.maximum(jnp.dot(xn2, w1, preferred_element_type=jnp.float32) + b1, 0.0)
    ff = jnp.dot(h1, w2_ref[...], preferred_element_type=jnp.float32) + b2

    o_ref[...] = x + ff


def pack_params(params):
    """Restructure the 16 logical tensors into 5 packed kernel operands."""
    (ln1_g, ln1_b, wq, bq, wk, bk, wv, bv, wo, bo,
     ln2_g, ln2_b, w1, b1, w2, b2) = params
    scale = HEAD_SIZE ** -0.5

    # Fused QKV weight, head-major column order [q_h | k_h | v_h] per head,
    # with the attention scale folded into the q columns / bias (exactly
    # equivalent to scaling q@k^T afterwards).
    wcols, bcols = [], []
    for h in range(N_HEAD):
        s = slice(h * HEAD_SIZE, (h + 1) * HEAD_SIZE)
        wcols += [wq[:, s] * scale, wk[:, s], wv[:, s]]
        bcols += [bq[0, s] * scale, bk[0, s], bv[0, s]]
    wqkv = jnp.concatenate(wcols, axis=1)                       # (C, 3C)
    bqkv = jnp.concatenate(bcols, axis=0)[None, :]              # (1, 3C)
    wqkv_b = jnp.concatenate([wqkv, bqkv], axis=0)              # (C+1, 3C)

    wo_h = wo.reshape(N_HEAD, HEAD_SIZE, N_EMBD)                # (H, hs, C)

    vec = jnp.stack([ln1_g[0], ln1_b[0], ln2_g[0], ln2_b[0], bo[0], b2[0]],
                    axis=0)                                     # (6, C)

    pad = HIDDEN_PAD - HIDDEN
    w1p = jnp.pad(w1, ((0, 0), (0, pad)))                       # (C, 256)
    b1p = jnp.pad(b1[0], (0, pad))[None, :]                     # (1, 256)
    w1_b = jnp.concatenate([w1p, b1p], axis=0)                  # (C+1, 256)
    w2p = jnp.pad(w2, ((0, pad), (0, 0)))                       # (256, C)

    return vec, wqkv_b, wo_h, w1_b, w2p


def transformer_block(x, params, *, num_chunks=None):
    B, T, C = x.shape
    assert C == N_EMBD
    if T % 8 != 0:
        raise NotImplementedError(
            "kernel assumes T is a multiple of the 8-row sublane tile")
    if num_chunks is None:
        # Up to 2 "parallel" grid steps keep both v7x TensorCores busy; each
        # step still folds bc = B/num_chunks batch elements into one slab.
        num_chunks = 2 if (B % 2 == 0 and B >= 4) else 1
    assert B % num_chunks == 0
    bc = B // num_chunks
    rows = bc * T

    vec, wqkv_b, wo_h, w1_b, w2p = pack_params(params)
    xf = x.reshape(B * T, C)                  # free relayout at the XLA level

    def rep(shape):
        nd = len(shape)
        return pl.BlockSpec(shape, lambda g, _nd=nd: (0,) * _nd)

    kernel = functools.partial(block_kernel, bc=bc, seq_len=T)
    out = pl.pallas_call(
        kernel,
        out_shape=jax.ShapeDtypeStruct((B * T, C), x.dtype),
        grid_spec=pltpu.PrefetchScalarGridSpec(
            num_scalar_prefetch=0,
            grid=(num_chunks,),
            in_specs=[pl.BlockSpec((rows, C), lambda g: (g, 0)),
                      rep(vec.shape), rep(wqkv_b.shape), rep(wo_h.shape),
                      rep(w1_b.shape), rep(w2p.shape)],
            out_specs=pl.BlockSpec((rows, C), lambda g: (g, 0)),
        ),
        compiler_params=pltpu.CompilerParams(dimension_semantics=("parallel",)),
    )(xf, vec, wqkv_b, wo_h, w1_b, w2p)
    return out.reshape(B, T, C)


def init_params(key):
    """Deterministic PyTorch-style (uniform +-1/sqrt(fan_in)) initialization."""
    ks = iter(jax.random.split(key, 32))

    def linear(fan_in, fan_out):
        bound = 1.0 / (fan_in ** 0.5)
        w = jax.random.uniform(next(ks), (fan_in, fan_out), jnp.float32, -bound, bound)
        b = jax.random.uniform(next(ks), (1, fan_out), jnp.float32, -bound, bound)
        return w, b

    ln1_g = jnp.ones((1, N_EMBD), jnp.float32)
    ln1_b = jnp.zeros((1, N_EMBD), jnp.float32)
    ln2_g = jnp.ones((1, N_EMBD), jnp.float32)
    ln2_b = jnp.zeros((1, N_EMBD), jnp.float32)

    # per-head key/query/value projections packed column-wise into (C, C)
    wq, bq = linear(N_EMBD, N_EMBD)
    wk, bk = linear(N_EMBD, N_EMBD)
    wv, bv = linear(N_EMBD, N_EMBD)
    wo, bo = linear(N_EMBD, N_EMBD)          # MultiHeadAttention.proj
    w1, b1 = linear(N_EMBD, HIDDEN)          # FeedForward first linear
    w2, b2 = linear(HIDDEN, N_EMBD)          # FeedForward second linear

    return [ln1_g, ln1_b, wq, bq, wk, bk, wv, bv, wo, bo,
            ln2_g, ln2_b, w1, b1, w2, b2]


def reference_block(x, params):
    """Pure-JAX reference matching the PyTorch forward (dropout = identity)."""
    (ln1_g, ln1_b, wq, bq, wk, bk, wv, bv, wo, bo,
     ln2_g, ln2_b, w1, b1, w2, b2) = params
    B, T, C = x.shape

    def ln(y, g, b):
        mu = jnp.mean(y, axis=-1, keepdims=True)
        var = jnp.mean(jnp.square(y - mu), axis=-1, keepdims=True)
        return (y - mu) / jnp.sqrt(var + LN_EPS) * g[0] + b[0]

    xn = ln(x, ln1_g, ln1_b)
    q = xn @ wq + bq[0]
    k = xn @ wk + bk[0]
    v = xn @ wv + bv[0]
    mask = jnp.tril(jnp.ones((T, T), bool))
    outs = []
    for h in range(N_HEAD):
        s = slice(h * HEAD_SIZE, (h + 1) * HEAD_SIZE)
        wei = jnp.einsum('btd,bsd->bts', q[:, :, s], k[:, :, s]) * HEAD_SIZE ** -0.5
        wei = jnp.where(mask, wei, -jnp.inf)
        wei = jax.nn.softmax(wei, axis=-1)
        outs.append(jnp.einsum('bts,bsd->btd', wei, v[:, :, s]))
    sa = jnp.concatenate(outs, axis=-1) @ wo + bo[0]
    x = x + sa
    xn2 = ln(x, ln2_g, ln2_b)
    ff = jnp.maximum(xn2 @ w1 + b1[0], 0.0) @ w2 + b2[0]
    return x + ff


if __name__ == "__main__":
    key = jax.random.PRNGKey(0)
    k_param, k_x = jax.random.split(key)

    B, T = 4, 8                                # small shapes (T <= block_size=256)
    x = jax.random.normal(k_x, (B, T, N_EMBD), jnp.float32)
    params = init_params(k_param)

    out = transformer_block(x, params)         # 2 parallel chunks of 2 batches each
    out = jax.block_until_ready(out)

    ref = reference_block(x, params)
    assert out.shape == (B, T, N_EMBD)
    # Tolerance slightly above 1e-3 only because the softmax denominator uses the
    # EUP approximate reciprocal (pl.reciprocal(approx=True)); math is otherwise exact.
    assert jnp.allclose(out, ref, atol=2e-3, rtol=2e-3), "mismatch vs JAX reference"

    print("KERNEL_OK")
</pallas_src>

<mosaic_0001>
module attributes {stable_mosaic.version = 11 : i64} {
  func.func @block_kernel(%arg0: i32, %arg1: memref<16x60xf32, #tpu.memory_space<vmem>>, %arg2: memref<6x60xf32, #tpu.memory_space<vmem>>, %arg3: memref<61x180xf32, #tpu.memory_space<vmem>>, %arg4: memref<6x10x60xf32, #tpu.memory_space<vmem>>, %arg5: memref<61x256xf32, #tpu.memory_space<vmem>>, %arg6: memref<256x60xf32, #tpu.memory_space<vmem>>, %arg7: memref<16x60xf32, #tpu.memory_space<vmem>>) attributes {dimension_semantics = [#tpu.dimension_semantics<parallel>], iteration_bounds = array<i64: 2>, scalar_prefetch = 0 : i64, scratch_operands = 0 : i64, tpu.core_type = #tpu.core_type<tc>, window_params = [{transform_indices = @transform_0, window_bounds = array<i64: 16, 60>}, {pipeline_mode = #tpu.pipeline_mode<synchronous>, transform_indices = @transform_1, window_bounds = array<i64: 6, 60>}, {pipeline_mode = #tpu.pipeline_mode<synchronous>, transform_indices = @transform_2, window_bounds = array<i64: 61, 180>}, {pipeline_mode = #tpu.pipeline_mode<synchronous>, transform_indices = @transform_3, window_bounds = array<i64: 6, 10, 60>}, {pipeline_mode = #tpu.pipeline_mode<synchronous>, transform_indices = @transform_4, window_bounds = array<i64: 61, 256>}, {pipeline_mode = #tpu.pipeline_mode<synchronous>, transform_indices = @transform_5, window_bounds = array<i64: 256, 60>}, {transform_indices = @transform_6, window_bounds = array<i64: 16, 60>}]} {
    %c0 = arith.constant 0 : index
    %c0_0 = arith.constant 0 : index
    %0 = vector.load %arg1[%c0, %c0_0] : memref<16x60xf32, #tpu.memory_space<vmem>>, vector<16x60xf32>
    %c0_1 = arith.constant 0 : index
    %c0_2 = arith.constant 0 : index
    %1 = vector.load %arg2[%c0_1, %c0_2] : memref<6x60xf32, #tpu.memory_space<vmem>>, vector<1x60xf32>
    %c1 = arith.constant 1 : index
    %c0_3 = arith.constant 0 : index
    %2 = vector.load %arg2[%c1, %c0_3] : memref<6x60xf32, #tpu.memory_space<vmem>>, vector<1x60xf32>
    %c2 = arith.constant 2 : index
    %c0_4 = arith.constant 0 : index
    %3 = vector.load %arg2[%c2, %c0_4] : memref<6x60xf32, #tpu.memory_space<vmem>>, vector<1x60xf32>
    %c3 = arith.constant 3 : index
    %c0_5 = arith.constant 0 : index
    %4 = vector.load %arg2[%c3, %c0_5] : memref<6x60xf32, #tpu.memory_space<vmem>>, vector<1x60xf32>
    %c4 = arith.constant 4 : index
    %c0_6 = arith.constant 0 : index
    %5 = vector.load %arg2[%c4, %c0_6] : memref<6x60xf32, #tpu.memory_space<vmem>>, vector<1x60xf32>
    %c5 = arith.constant 5 : index
    %c0_7 = arith.constant 0 : index
    %6 = vector.load %arg2[%c5, %c0_7] : memref<6x60xf32, #tpu.memory_space<vmem>>, vector<1x60xf32>
    %cst = arith.constant dense<0.000000e+00> : vector<16xf32>
    %7 = vector.multi_reduction <add>, %0, %cst [1] : vector<16x60xf32> to vector<16xf32>
    %8 = vector.shape_cast %7 : vector<16xf32> to vector<16x1xf32>
    %cst_8 = arith.constant 6.000000e+01 : f32
    %9 = vector.broadcast %cst_8 : f32 to vector<16x1xf32>
    %10 = arith.divf %8, %9 : vector<16x1xf32>
    %11 = vector.broadcast %10 : vector<16x1xf32> to vector<16x60xf32>
    %12 = arith.subf %0, %11 : vector<16x60xf32>
    %13 = arith.mulf %12, %12 : vector<16x60xf32>
    %cst_9 = arith.constant dense<0.000000e+00> : vector<16xf32>
    %14 = vector.multi_reduction <add>, %13, %cst_9 [1] : vector<16x60xf32> to vector<16xf32>
    %15 = vector.shape_cast %14 : vector<16xf32> to vector<16x1xf32>
    %cst_10 = arith.constant 6.000000e+01 : f32
    %16 = vector.broadcast %cst_10 : f32 to vector<16x1xf32>
    %17 = arith.divf %15, %16 : vector<16x1xf32>
    %18 = vector.broadcast %10 : vector<16x1xf32> to vector<16x60xf32>
    %19 = arith.subf %0, %18 : vector<16x60xf32>
    %cst_11 = arith.constant 9.99999974E-6 : f32
    %20 = vector.broadcast %cst_11 : f32 to vector<16x1xf32>
    %21 = arith.addf %17, %20 : vector<16x1xf32>
    %22 = math.rsqrt %21 : vector<16x1xf32>
    %23 = vector.broadcast %22 : vector<16x1xf32> to vector<16x60xf32>
    %24 = arith.mulf %19, %23 : vector<16x60xf32>
    %25 = vector.broadcast %1 : vector<1x60xf32> to vector<16x60xf32>
    %26 = arith.mulf %24, %25 : vector<16x60xf32>
    %27 = vector.broadcast %2 : vector<1x60xf32> to vector<16x60xf32>
    %28 = arith.addf %26, %27 : vector<16x60xf32>
    %c0_12 = arith.constant 0 : index
    %c0_13 = arith.constant 0 : index
    %29 = vector.load %arg3[%c0_12, %c0_13] : memref<61x180xf32, #tpu.memory_space<vmem>>, vector<60x180xf32>
    %c60 = arith.constant 60 : index
    %c0_14 = arith.constant 0 : index
    %30 = vector.load %arg3[%c60, %c0_14] : memref<61x180xf32, #tpu.memory_space<vmem>>, vector<1x180xf32>
    %cst_15 = arith.constant dense<0.000000e+00> : vector<16x180xf32>
    %31 = tpu.matmul %28, %29, %cst_15 {dimension_numbers = #tpu.dot_dimension_numbers<[1], [0], [0], [1], [0, 0, 1, 1], [], []>} : vector<16x60xf32>, vector<60x180xf32>, vector<16x180xf32> -> vector<16x180xf32>
    %32 = vector.broadcast %30 : vector<1x180xf32> to vector<16x180xf32>
    %33 = arith.addf %31, %32 : vector<16x180xf32>
    %34 = vector.extract_strided_slice %33 {offsets = [0, 0], sizes = [16, 30], strides = [1, 1]} : vector<16x180xf32> to vector<16x30xf32>
    %35 = vector.extract_strided_slice %33 {offsets = [0, 30], sizes = [16, 30], strides = [1, 1]} : vector<16x180xf32> to vector<16x30xf32>
    %36 = vector.extract_strided_slice %33 {offsets = [0, 60], sizes = [16, 30], strides = [1, 1]} : vector<16x180xf32> to vector<16x30xf32>
    %37 = vector.extract_strided_slice %33 {offsets = [0, 90], sizes = [16, 30], strides = [1, 1]} : vector<16x180xf32> to vector<16x30xf32>
    %38 = vector.extract_strided_slice %33 {offsets = [0, 120], sizes = [16, 30], strides = [1, 1]} : vector<16x180xf32> to vector<16x30xf32>
    %39 = vector.extract_strided_slice %33 {offsets = [0, 150], sizes = [16, 30], strides = [1, 1]} : vector<16x180xf32> to vector<16x30xf32>
    %40 = vector.shape_cast %34 : vector<16x30xf32> to vector<1x16x30xf32>
    %41 = vector.shape_cast %35 : vector<16x30xf32> to vector<1x16x30xf32>
    %42 = vector.shape_cast %36 : vector<16x30xf32> to vector<1x16x30xf32>
    %43 = vector.shape_cast %37 : vector<16x30xf32> to vector<1x16x30xf32>
    %44 = vector.shape_cast %38 : vector<16x30xf32> to vector<1x16x30xf32>
    %45 = vector.shape_cast %39 : vector<16x30xf32> to vector<1x16x30xf32>
    %46 = tpu.concatenate %40, %41, %42, %43, %44, %45 in 0 : vector<1x16x30xf32>, vector<1x16x30xf32>, vector<1x16x30xf32>, vector<1x16x30xf32>, vector<1x16x30xf32>, vector<1x16x30xf32> -> vector<6x16x30xf32>
    %47 = vector.shape_cast %46 : vector<6x16x30xf32> to vector<12x8x30xf32>
    %48 = vector.extract_strided_slice %47 {offsets = [0, 0, 0], sizes = [12, 8, 10], strides = [1, 1, 1]} : vector<12x8x30xf32> to vector<12x8x10xf32>
    %49 = vector.extract_strided_slice %47 {offsets = [0, 0, 10], sizes = [12, 8, 10], strides = [1, 1, 1]} : vector<12x8x30xf32> to vector<12x8x10xf32>
    %50 = vector.extract_strided_slice %47 {offsets = [0, 0, 20], sizes = [12, 8, 10], strides = [1, 1, 1]} : vector<12x8x30xf32> to vector<12x8x10xf32>
    %51 = tpu.iota {dimensions = array<i32: 0>} : vector<8x8xi32>
    %52 = tpu.iota {dimensions = array<i32: 1>} : vector<8x8xi32>
    %53 = arith.cmpi sle, %52, %51 : vector<8x8xi32>
    %54 = vector.shape_cast %53 : vector<8x8xi1> to vector<1x8x8xi1>
    "tpu.trace_start"() <{level = 10 : i32, message = "nqd,nkd->nqk"}> : () -> ()
    %cst_16 = arith.constant dense<0.000000e+00> : vector<12x8x8xf32>
    %55 = tpu.matmul %48, %49, %cst_16 {dimension_numbers = #tpu.dot_dimension_numbers<[2], [2], [1], [1], [0, 0, 0, 1, 1, 1], [0], [0]>} : vector<12x8x10xf32>, vector<12x8x10xf32>, vector<12x8x8xf32> -> vector<12x8x8xf32>
    %cst_17 = arith.constant -1.000000e+30 : f32
    "tpu.trace_stop"() : () -> ()
    %56 = vector.shape_cast %54 : vector<1x8x8xi1> to vector<1x8x8xi1>
    %57 = vector.broadcast %56 : vector<1x8x8xi1> to vector<12x8x8xi1>
    %58 = vector.broadcast %cst_17 : f32 to vector<12x8x8xf32>
    %59 = arith.select %57, %55, %58 : vector<12x8x8xi1>, vector<12x8x8xf32>
    %cst_18 = arith.constant dense<0xFF800000> : vector<12x8xf32>
    %60 = vector.multi_reduction <maximumf>, %59, %cst_18 [2] : vector<12x8x8xf32> to vector<12x8xf32>
    %61 = vector.shape_cast %60 : vector<12x8xf32> to vector<12x8x1xf32>
    %62 = vector.broadcast %61 : vector<12x8x1xf32> to vector<12x8x8xf32>
    %63 = arith.subf %59, %62 : vector<12x8x8xf32>
    %64 = math.exp %63 : vector<12x8x8xf32>
    %cst_19 = arith.constant dense<0.000000e+00> : vector<12x8xf32>
    %65 = vector.multi_reduction <add>, %64, %cst_19 [2] : vector<12x8x8xf32> to vector<12x8xf32>
    %66 = vector.shape_cast %65 : vector<12x8xf32> to vector<12x8x1xf32>
    %67 = tpu.reciprocal %66 {approx = true} : vector<12x8x1xf32> -> vector<12x8x1xf32>
    %68 = vector.broadcast %67 : vector<12x8x1xf32> to vector<12x8x8xf32>
    %69 = arith.mulf %64, %68 : vector<12x8x8xf32>
    "tpu.trace_start"() <{level = 10 : i32, message = "nqk,nkd->nqd"}> : () -> ()
    %cst_20 = arith.constant dense<0.000000e+00> : vector<12x8x10xf32>
    %70 = tpu.matmul %69, %50, %cst_20 {dimension_numbers = #tpu.dot_dimension_numbers<[2], [1], [1], [2], [0, 0, 0, 1, 1, 2], [0], [0]>} : vector<12x8x8xf32>, vector<12x8x10xf32>, vector<12x8x10xf32> -> vector<12x8x10xf32>
    "tpu.trace_stop"() : () -> ()
    %71 = vector.shape_cast %70 : vector<12x8x10xf32> to vector<6x16x10xf32>
    %c0_21 = arith.constant 0 : index
    %c0_22 = arith.constant 0 : index
    %c0_23 = arith.constant 0 : index
    %72 = vector.load %arg4[%c0_21, %c0_22, %c0_23] : memref<6x10x60xf32, #tpu.memory_space<vmem>>, vector<6x10x60xf32>
    "tpu.trace_start"() <{level = 10 : i32, message = "hnd,hdc->hnc"}> : () -> ()
    %cst_24 = arith.constant dense<0.000000e+00> : vector<6x16x60xf32>
    %73 = tpu.matmul %71, %72, %cst_24 {dimension_numbers = #tpu.dot_dimension_numbers<[2], [1], [1], [2], [0, 0, 0, 1, 1, 2], [0], [0]>} : vector<6x16x10xf32>, vector<6x10x60xf32>, vector<6x16x60xf32> -> vector<6x16x60xf32>
    "tpu.trace_stop"() : () -> ()
    %cst_25 = arith.constant dense<0.000000e+00> : vector<16x60xf32>
    %74 = vector.multi_reduction <add>, %73, %cst_25 [0] : vector<6x16x60xf32> to vector<16x60xf32>
    %75 = vector.broadcast %5 : vector<1x60xf32> to vector<16x60xf32>
    %76 = arith.addf %74, %75 : vector<16x60xf32>
    %77 = arith.addf %0, %76 : vector<16x60xf32>
    %cst_26 = arith.constant dense<0.000000e+00> : vector<16xf32>
    %78 = vector.multi_reduction <add>, %77, %cst_26 [1] : vector<16x60xf32> to vector<16xf32>
    %79 = vector.shape_cast %78 : vector<16xf32> to vector<16x1xf32>
    %cst_27 = arith.constant 6.000000e+01 : f32
    %80 = vector.broadcast %cst_27 : f32 to vector<16x1xf32>
    %81 = arith.divf %79, %80 : vector<16x1xf32>
    %82 = vector.broadcast %81 : vector<16x1xf32> to vector<16x60xf32>
    %83 = arith.subf %77, %82 : vector<16x60xf32>
    %84 = arith.mulf %83, %83 : vector<16x60xf32>
    %cst_28 = arith.constant dense<0.000000e+00> : vector<16xf32>
    %85 = vector.multi_reduction <add>, %84, %cst_28 [1] : vector<16x60xf32> to vector<16xf32>
    %86 = vector.shape_cast %85 : vector<16xf32> to vector<16x1xf32>
    %cst_29 = arith.constant 6.000000e+01 : f32
    %87 = vector.broadcast %cst_29 : f32 to vector<16x1xf32>
    %88 = arith.divf %86, %87 : vector<16x1xf32>
    %89 = vector.broadcast %81 : vector<16x1xf32> to vector<16x60xf32>
    %90 = arith.subf %77, %89 : vector<16x60xf32>
    %cst_30 = arith.constant 9.99999974E-6 : f32
    %91 = vector.broadcast %cst_30 : f32 to vector<16x1xf32>
    %92 = arith.addf %88, %91 : vector<16x1xf32>
    %93 = math.rsqrt %92 : vector<16x1xf32>
    %94 = vector.broadcast %93 : vector<16x1xf32> to vector<16x60xf32>
    %95 = arith.mulf %90, %94 : vector<16x60xf32>
    %96 = vector.broadcast %3 : vector<1x60xf32> to vector<16x60xf32>
    %97 = arith.mulf %95, %96 : vector<16x60xf32>
    %98 = vector.broadcast %4 : vector<1x60xf32> to vector<16x60xf32>
    %99 = arith.addf %97, %98 : vector<16x60xf32>
    %c0_31 = arith.constant 0 : index
    %c0_32 = arith.constant 0 : index
    %100 = vector.load %arg5[%c0_31, %c0_32] : memref<61x256xf32, #tpu.memory_space<vmem>>, vector<60x256xf32>
    %c60_33 = arith.constant 60 : index
    %c0_34 = arith.constant 0 : index
    %101 = vector.load %arg5[%c60_33, %c0_34] : memref<61x256xf32, #tpu.memory_space<vmem>>, vector<1x256xf32>
    %cst_35 = arith.constant dense<0.000000e+00> : vector<16x256xf32>
    %102 = tpu.matmul %99, %100, %cst_35 {dimension_numbers = #tpu.dot_dimension_numbers<[1], [0], [0], [1], [0, 0, 1, 1], [], []>} : vector<16x60xf32>, vector<60x256xf32>, vector<16x256xf32> -> vector<16x256xf32>
    %103 = vector.broadcast %101 : vector<1x256xf32> to vector<16x256xf32>
    %104 = arith.addf %102, %103 : vector<16x256xf32>
    %cst_36 = arith.constant 0.000000e+00 : f32
    %105 = vector.broadcast %cst_36 : f32 to vector<16x256xf32>
    %106 = arith.maximumf %104, %105 : vector<16x256xf32>
    %c0_37 = arith.constant 0 : index
    %c0_38 = arith.constant 0 : index
    %107 = vector.load %arg6[%c0_37, %c0_38] : memref<256x60xf32, #tpu.memory_space<vmem>>, vector<256x60xf32>
    %cst_39 = arith.constant dense<0.000000e+00> : vector<16x60xf32>
    %108 = tpu.matmul %106, %107, %cst_39 {dimension_numbers = #tpu.dot_dimension_numbers<[1], [0], [0], [1], [0, 0, 1, 1], [], []>} : vector<16x256xf32>, vector<256x60xf32>, vector<16x60xf32> -> vector<16x60xf32>
    %109 = vector.broadcast %6 : vector<1x60xf32> to vector<16x60xf32>
    %110 = arith.addf %108, %109 : vector<16x60xf32>
    %111 = arith.addf %77, %110 : vector<16x60xf32>
    %c0_40 = arith.constant 0 : index
    %c0_41 = arith.constant 0 : index
    %112 = vector.load %arg7[%c0_40, %c0_41] : memref<16x60xf32, #tpu.memory_space<vmem>>, vector<16x60xf32>
    tpu.vector_store %arg7[%c0_40, %c0_41], %111 {strides = array<i32>} : memref<16x60xf32, #tpu.memory_space<vmem>>, vector<16x60xf32>,
    return
  }
  func.func @transform_0(%arg0: i32) -> (i32, i32) {
    %c0_i32 = arith.constant 0 : i32
    %c0_i32_0 = arith.constant 0 : i32
    return %arg0, %c0_i32 : i32, i32
  }
  func.func @transform_1(%arg0: i32) -> (i32, i32) {
    %c0_i32 = arith.constant 0 : i32
    %c0_i32_0 = arith.constant 0 : i32
    %c0_i32_1 = arith.constant 0 : i32
    return %c0_i32, %c0_i32_0 : i32, i32
  }
  func.func @transform_2(%arg0: i32) -> (i32, i32) {
    %c0_i32 = arith.constant 0 : i32
    %c0_i32_0 = arith.constant 0 : i32
    %c0_i32_1 = arith.constant 0 : i32
    return %c0_i32, %c0_i32_0 : i32, i32
  }
  func.func @transform_3(%arg0: i32) -> (i32, i32, i32) {
    %c0_i32 = arith.constant 0 : i32
    %c0_i32_0 = arith.constant 0 : i32
    %c0_i32_1 = arith.constant 0 : i32
    %c0_i32_2 = arith.constant 0 : i32
    return %c0_i32, %c0_i32_0, %c0_i32_1 : i32, i32, i32
  }
  func.func @transform_4(%arg0: i32) -> (i32, i32) {
    %c0_i32 = arith.constant 0 : i32
    %c0_i32_0 = arith.constant 0 : i32
    %c0_i32_1 = arith.constant 0 : i32
    return %c0_i32, %c0_i32_0 : i32, i32
  }
  func.func @transform_5(%arg0: i32) -> (i32, i32) {
    %c0_i32 = arith.constant 0 : i32
    %c0_i32_0 = arith.constant 0 : i32
    %c0_i32_1 = arith.constant 0 : i32
    return %c0_i32, %c0_i32_0 : i32, i32
  }
  func.func @transform_6(%arg0: i32) -> (i32, i32) {
    %c0_i32 = arith.constant 0 : i32
    %c0_i32_0 = arith.constant 0 : i32
    return %arg0, %c0_i32 : i32, i32
  }
}

</mosaic_0001>

<llo_original>
// kernel: tpu_custom_call.1
$region0: #{tpu_custom_call.1}
  #allocation0 [shape = 'u32[]', space=smem, size = 0x4, offset = 0x4, fixed_abs, tag = 'smem constant byte address 0x4 - core index']
  #allocation1 [shape = 'u32[144,128]{1,0:T(1,128)}', space=vmem, size = 0x12000, scoped, tag = 'internal scratch']
  %s0 = inlined_call_operand.vmem [shape: f32[32,60], index: 0, kind: input, shape index: {}]
  %s1 = inlined_call_operand.vmem [shape: f32[6,60], index: 1, kind: input, shape index: {}]
  %s2 = inlined_call_operand.vmem [shape: f32[61,180], index: 2, kind: input, shape index: {}]
  %s3 = inlined_call_operand.vmem [shape: f32[6,10,60], index: 3, kind: input, shape index: {}]
  %s4 = inlined_call_operand.vmem [shape: f32[61,256], index: 4, kind: input, shape index: {}]
  %s5 = inlined_call_operand.vmem [shape: f32[256,60], index: 5, kind: input, shape index: {}]
  %s6 = inlined_call_operand.hbm [shape: f32[32,60], index: 6, kind: output, shape index: {}]
  %s7 = sld [smem:[#allocation0]]
  $region57: #{tpu_custom_call.1} parent=0
    _
  %s9 = ssub.s32 1, %s7
  %s10 = scalar_select 0, %s9, %s7
  $region1: #{tpu_custom_call.1} parent=0
    #allocation2 [shape = 'u8[16384]{0}', space=vmem, size = 0x4000, scoped, tag = 'output window, operand 0']
    #allocation3 [shape = 's32[2]{0}', space=sflag, size = 0x8, scoped, tag = 'scoped memory for tpu_custom_call.1']
    %11 = vsyncpa [#allocation3], 0
    %s12 = scalar_lea.sflag [#allocation3], 1
    %13 = vsyncpa %s12, 0
    loop: start=0, step=1, limit=4
    $region2: #{tpu_custom_call.1} parent=1 // loop_pre_header
      _
    $region3: #{tpu_custom_call.1} parent=1 // loop_header
      %s15 = sphi 0, %s19
      %p16 = scmp.ge.s32.totalorder %s15, 4
      %s25 = sphi 0, %s27
      %s28 = sphi 0, %s25
      %s29 = sphi 0, %s28
      %s45 = sphi 0, %s29
      %s49 = sphi 0, %s49
      %s51 = sphi 0, %s49
      %s52 = sphi 0, %s51
      %s66 = sphi 0, %s52
      %s70 = sphi 0, %s70
      %s72 = sphi 0, %s70
      %s73 = sphi 0, %s72
      %s87 = sphi 0, %s73
      %s91 = sphi 0, %s91
      %s93 = sphi 0, %s91
      %s94 = sphi 0, %s93
      %s108 = sphi 0, %s94
      %s112 = sphi 0, %s112
      %s114 = sphi 0, %s112
      %s115 = sphi 0, %s114
      %s129 = sphi 0, %s115
      %s133 = sphi 0, %s133
      %s135 = sphi 0, %s133
      %s136 = sphi 0, %s135
      %s150 = sphi 0, %s136
      %s156 = sphi 0, %s158
      %s159 = sphi 0, %s156
      %s160 = sphi 0, %s159
      %s176 = sphi 0, %s160
    $region4: #{tpu_custom_call.1} parent=1 // loop_header_branch
      %18 = sbr.rel (%p16) target = $region8
    $region5: #{tpu_custom_call.1} parent=1 // loop_body
      %s20 = ssub.s32 %s15, 1
      %s21 = ssub.s32 %s15, 2
      %s22 = sadd.s32 %s15, 1
      %s23 = ssub.s32 %s15, %s22
      %p24 = scmp.eq.s32.totalorder %s23, 0
      %s26 = sadd.s32 %s25, 1
      %s27 = scalar_select %p24, %s25, %s26
      %p30 = pneg %p24
      %p31 = scmp.eq.s32.totalorder %s15, 1
      %p32 = por %p30, %p31
      %p33 = scmp.ne.s32.totalorder %s25, %s28
      %p34 = scmp.eq.s32.totalorder %s15, 0
      %p35 = por %p33, %p34
      %p36 = scmp.ne.s32.totalorder %s25, %s28
      %p37 = scmp.eq.s32.totalorder %s20, 1
      %p38 = por %p36, %p37
      %p39 = scmp.ne.s32.totalorder %s28, %s29
      %p40 = scmp.eq.s32.totalorder %s20, 0
      %p41 = por %p39, %p40
      %p42 = scmp.ne.s32.totalorder %s28, %s29
      %p43 = scmp.eq.s32.totalorder %s21, 1
      %p44 = por %p42, %p43
      %p46 = scmp.ne.s32.totalorder %s29, %s45
      %p47 = scmp.eq.s32.totalorder %s21, 0
      %p48 = por %p46, %p47
      %s50 = sadd.s32 %s49, 1
      %p53 = scmp.eq.s32.totalorder %s15, 1
      %p54 = scmp.ne.s32.totalorder %s49, %s51
      %p55 = scmp.eq.s32.totalorder %s15, 0
      %p56 = por %p54, %p55
      %p57 = scmp.ne.s32.totalorder %s49, %s51
      %p58 = scmp.eq.s32.totalorder %s20, 1
      %p59 = por %p57, %p58
      %p60 = scmp.ne.s32.totalorder %s51, %s52
      %p61 = scmp.eq.s32.totalorder %s20, 0
      %p62 = por %p60, %p61
      %p63 = scmp.ne.s32.totalorder %s51, %s52
      %p64 = scmp.eq.s32.totalorder %s21, 1
      %p65 = por %p63, %p64
      %p67 = scmp.ne.s32.totalorder %s52, %s66
      %p68 = scmp.eq.s32.totalorder %s21, 0
      %p69 = por %p67, %p68
      %s71 = sadd.s32 %s70, 1
      %p74 = scmp.eq.s32.totalorder %s15, 1
      %p75 = scmp.ne.s32.totalorder %s70, %s72
      %p76 = scmp.eq.s32.totalorder %s15, 0
      %p77 = por %p75, %p76
      %p78 = scmp.ne.s32.totalorder %s70, %s72
      %p79 = scmp.eq.s32.totalorder %s20, 1
      %p80 = por %p78, %p79
      %p81 = scmp.ne.s32.totalorder %s72, %s73
      %p82 = scmp.eq.s32.totalorder %s20, 0
      %p83 = por %p81, %p82
      %p84 = scmp.ne.s32.totalorder %s72, %s73
      %p85 = scmp.eq.s32.totalorder %s21, 1
      %p86 = por %p84, %p85
      %p88 = scmp.ne.s32.totalorder %s73, %s87
      %p89 = scmp.eq.s32.totalorder %s21, 0
      %p90 = por %p88, %p89
      %s92 = sadd.s32 %s91, 1
      %p95 = scmp.eq.s32.totalorder %s15, 1
      %p96 = scmp.ne.s32.totalorder %s91, %s93
      %p97 = scmp.eq.s32.totalorder %s15, 0
      %p98 = por %p96, %p97
      %p99 = scmp.ne.s32.totalorder %s91, %s93
      %p100 = scmp.eq.s32.totalorder %s20, 1
      %p101 = por %p99, %p100
      %p102 = scmp.ne.s32.totalorder %s93, %s94
      %p103 = scmp.eq.s32.totalorder %s20, 0
      %p104 = por %p102, %p103
      %p105 = scmp.ne.s32.totalorder %s93, %s94
      %p106 = scmp.eq.s32.totalorder %s21, 1
      %p107 = por %p105, %p106
      %p109 = scmp.ne.s32.totalorder %s94, %s108
      %p110 = scmp.eq.s32.totalorder %s21, 0
      %p111 = por %p109, %p110
      %s113 = sadd.s32 %s112, 1
      %p116 = scmp.eq.s32.totalorder %s15, 1
      %p117 = scmp.ne.s32.totalorder %s112, %s114
      %p118 = scmp.eq.s32.totalorder %s15, 0
      %p119 = por %p117, %p118
      %p120 = scmp.ne.s32.totalorder %s112, %s114
      %p121 = scmp.eq.s32.totalorder %s20, 1
      %p122 = por %p120, %p121
      %p123 = scmp.ne.s32.totalorder %s114, %s115
      %p124 = scmp.eq.s32.totalorder %s20, 0
      %p125 = por %p123, %p124
      %p126 = scmp.ne.s32.totalorder %s114, %s115
      %p127 = scmp.eq.s32.totalorder %s21, 1
      %p128 = por %p126, %p127
      %p130 = scmp.ne.s32.totalorder %s115, %s129
      %p131 = scmp.eq.s32.totalorder %s21, 0
      %p132 = por %p130, %p131
      %s134 = sadd.s32 %s133, 1
      %p137 = scmp.eq.s32.totalorder %s15, 1
      %p138 = scmp.ne.s32.totalorder %s133, %s135
      %p139 = scmp.eq.s32.totalorder %s15, 0
      %p140 = por %p138, %p139
      %p141 = scmp.ne.s32.totalorder %s133, %s135
      %p142 = scmp.eq.s32.totalorder %s20, 1
      %p143 = por %p141, %p142
      %p144 = scmp.ne.s32.totalorder %s135, %s136
      %p145 = scmp.eq.s32.totalorder %s20, 0
      %p146 = por %p144, %p145
      %p147 = scmp.ne.s32.totalorder %s135, %s136
      %p148 = scmp.eq.s32.totalorder %s21, 1
      %p149 = por %p147, %p148
      %p151 = scmp.ne.s32.totalorder %s136, %s150
      %p152 = scmp.eq.s32.totalorder %s21, 0
      %p153 = por %p151, %p152
      %s154 = ssub.s32 %s15, %s22
      %p155 = scmp.eq.s32.totalorder %s154, 0
      %s157 = sadd.s32 %s156, 1
      %s158 = scalar_select %p155, %s156, %s157
      %p161 = pneg %p155
      %p162 = scmp.eq.s32.totalorder %s15, 1
      %p163 = por %p161, %p162
      %p164 = scmp.ne.s32.totalorder %s156, %s159
      %p165 = scmp.eq.s32.totalorder %s15, 0
      %p166 = por %p164, %p165
      %p167 = scmp.ne.s32.totalorder %s156, %s159
      %p168 = scmp.eq.s32.totalorder %s20, 1
      %p169 = por %p167, %p168
      %p170 = scmp.ne.s32.totalorder %s159, %s160
      %p171 = scmp.eq.s32.totalorder %s20, 0
      %p172 = por %p170, %p171
      %p173 = scmp.ne.s32.totalorder %s159, %s160
      %p174 = scmp.eq.s32.totalorder %s21, 1
      %p175 = por %p173, %p174
      %p177 = scmp.ne.s32.totalorder %s160, %s176
      %p178 = scmp.eq.s32.totalorder %s21, 0
      %p179 = por %p177, %p178
      %p180 = scmp.le.s32.totalorder 1, %s15
      %p181 = scmp.lt.s32.totalorder %s15, 3
      %p182 = pnand %p180, %p181
      %p183 = pneg %p182
      // Predicated region
      $region9: #{tpu_custom_call.1} parent=5 // pred_check
        _
      $region10: #{tpu_custom_call.1} parent=5 // pred_check_branch
        %185 = sbr.rel (%p182) target = $region12
      $region11: #{tpu_custom_call.1} parent=5 // pred_region
        %s186 = ssub.s32 %s15, 1
        // Predicated region
        $region13: #{tpu_custom_call.1} parent=11 // pred_check
          %p187 = pneg %p62
        $region14: #{tpu_custom_call.1} parent=11 // pred_check_branch
          %189 = sbr.rel (%p187) target = $region16
        $region15: #{tpu_custom_call.1} parent=11 // pred_region
          _
        $region16: #{tpu_custom_call.1} parent=11 // pred_fallthru
          _
        // Predicated region
        $region17: #{tpu_custom_call.1} parent=11 // pred_check
          %p190 = pneg %p83
        $region18: #{tpu_custom_call.1} parent=11 // pred_check_branch
          %192 = sbr.rel (%p190) target = $region20
        $region19: #{tpu_custom_call.1} parent=11 // pred_region
          _
        $region20: #{tpu_custom_call.1} parent=11 // pred_fallthru
          _
        // Predicated region
        $region21: #{tpu_custom_call.1} parent=11 // pred_check
          %p193 = pneg %p104
        $region22: #{tpu_custom_call.1} parent=11 // pred_check_branch
          %195 = sbr.rel (%p193) target = $region24
        $region23: #{tpu_custom_call.1} parent=11 // pred_region
          _
        $region24: #{tpu_custom_call.1} parent=11 // pred_fallthru
          _
        // Predicated region
        $region25: #{tpu_custom_call.1} parent=11 // pred_check
          %p196 = pneg %p125
        $region26: #{tpu_custom_call.1} parent=11 // pred_check_branch
          %198 = sbr.rel (%p196) target = $region28
        $region27: #{tpu_custom_call.1} parent=11 // pred_region
          _
        $region28: #{tpu_custom_call.1} parent=11 // pred_fallthru
          _
        // Predicated region
        $region29: #{tpu_custom_call.1} parent=11 // pred_check
          %p199 = pneg %p146
        $region30: #{tpu_custom_call.1} parent=11 // pred_check_branch
          %201 = sbr.rel (%p199) target = $region32
        $region31: #{tpu_custom_call.1} parent=11 // pred_region
          _
        $region32: #{tpu_custom_call.1} parent=11 // pred_fallthru
          _
      $region12: #{tpu_custom_call.1} parent=5 // pred_fallthru
        _
      %p202 = scmp.lt.s32.totalorder %s15, 2
      // Predicated region
      $region33: #{tpu_custom_call.1} parent=5 // pred_check
        %p203 = pneg %p202
      $region34: #{tpu_custom_call.1} parent=5 // pred_check_branch
        %205 = sbr.rel (%p203) target = $region36
      $region35: #{tpu_custom_call.1} parent=5 // pred_region
        // Predicated region
        $region37: #{tpu_custom_call.1} parent=35 // pred_check
          %p206 = pneg %p35
        $region38: #{tpu_custom_call.1} parent=35 // pred_check_branch
          %208 = sbr.rel (%p206) target = $region40
        $region39: #{tpu_custom_call.1} parent=35 // pred_region
          %s209 = smul.u32 2, %s15
          %p210 = scmp.lt.s32.totalorder %s209, 3
          %s211 = scalar_select %p210, %s209, 3
          %s212 = smul.addr %s211, 8
          %s213 = scalar_lea.vmem %s0, %s212
          %s214 = smul.u32 2, %s15
        $region40: #{tpu_custom_call.1} parent=35 // pred_fallthru
          _
      $region36: #{tpu_custom_call.1} parent=5 // pred_fallthru
        _
      %p215 = scmp.le.s32.totalorder 1, %s15
      %p216 = scmp.lt.s32.totalorder %s15, 3
      %p217 = pnand %p215, %p216
      %p218 = pneg %p217
      // Predicated region
      $region41: #{tpu_custom_call.1} parent=5 // pred_check
        _
      $region42: #{tpu_custom_call.1} parent=5 // pred_check_branch
        %220 = sbr.rel (%p217) target = $region44
      $region43: #{tpu_custom_call.1} parent=5 // pred_region
        %s221 = ssub.s32 %s15, 1
        %s222 = smul.u32 2, %s20
        %p223 = scmp.lt.s32.totalorder %s222, 3
        %s224 = scalar_select %p223, %s222, 3
        %s225 = smul.addr %s224, 8
        %s226 = scalar_lea.vmem %s0, %s225
        %p227 = pneg %p41
        %p228 = pneg %p38
        %p229 = pneg %p62
        %p230 = pneg %p59
        %p231 = pneg %p83
        %p232 = pneg %p80
        %p233 = pneg %p104
        %p234 = pneg %p101
        %p235 = pneg %p125
        %p236 = pneg %p122
        %p237 = pneg %p146
        %p238 = pneg %p143
        %p239 = pneg %p172
        %p240 = pneg %p169
        %s241 = sand.u32 %s159, 1
        %s242 = scalar_lea.sflag [#allocation3], %s241
        %s243 = sand.u32 %s159, 1
        %s244 = smul.addr %s243, 16
        %s245 = scalar_lea.vmem [#allocation2], %s244
        %s246 = smul.u32 2, %s20
        %p247 = scmp.lt.s32.totalorder %s246, 3
        %s248 = scalar_select %p247, %s246, 3
        %s249 = smul.addr %s248, 8
        %s250 = scalar_lea.vmem %s0, %s249
        %s251 = smul.u32 2, %s20
        %s252 = smul.u32 2, %s20
        %v253 = vld [vmem:[%s250] sm:$0xff]
        %v254 = vld [vmem:[%s250 + $0x8] sm:$0xff]
        %v255 = vld [vmem:[%s1] sm:$0x1]
        %v256 = vld [vmem:[%s1 + $0x1] sm:$0x1]
        %v257 = vld [vmem:[%s1 + $0x2] sm:$0x1]
        %v258 = vld [vmem:[%s1 + $0x3] sm:$0x1]
        %v259 = vld [vmem:[%s1 + $0x4] sm:$0x1]
        %v260 = vld [vmem:[%s1 + $0x5] sm:$0x1]
        %vm261 = vcmask 490496
        %v262 = vsel %vm261, %v253, 0.0
        %263 = vadd.xlane.f32.xlu0 %v262
        %v264 = vpop.xlane.xlu0 %263
        %v265 = vsel %vm261, %v254, 0.0
        %266 = vadd.xlane.f32.xlu0 %v265
        %v267 = vpop.xlane.xlu0 %266
        %v268 = vrcp.pop 60.0
        %v269 = vmul.f32 %v264, %v268
        %v270 = vmul.f32 %v267, %v268
        %v271 = vsub.f32 %v253, %v269
        %v272 = vsub.f32 %v254, %v270
        %v273 = vmul.f32 %v271, %v271
        %v274 = vmul.f32 %v272, %v272
        %v275 = vsel %vm261, %v273, 0.0
        %276 = vadd.xlane.f32.xlu0 %v275
        %v277 = vpop.xlane.xlu0 %276
        %v278 = vsel %vm261, %v274, 0.0
        %279 = vadd.xlane.f32.xlu0 %v278
        %v280 = vpop.xlane.xlu0 %279
        %v281 = vmul.f32 %v277, %v268
        %v282 = vmul.f32 %v280, %v268
        %v283 = vadd.f32 %v281, 1e-05
        %v284 = vadd.f32 %v282, 1e-05
        %v285 = vrsqrt.pop %v283
        %v286 = vrsqrt.pop %v284
        %v287 = vmul.f32 %v271, %v285
        %v288 = vmul.f32 %v272, %v286
        %v289 = vlaneseq
        %v290 = vshrl.u32 %v289, 7
        %v291 = vsub.s32 0, %v290
        %v292 = vrot.slane %v255, %v291
        %v293 = vmul.f32 %v287, %v292
        %v294 = vmul.f32 %v288, %v292
        %v295 = vlaneseq
        %v296 = vshrl.u32 %v295, 7
        %v297 = vsub.s32 0, %v296
        %v298 = vrot.slane %v256, %v297
        %v299 = vadd.f32 %v293, %v298
        %v300 = vadd.f32 %v294, %v298
        %v301 = vld [vmem:[%s2] sm:$0xff]
        %v302 = vld [vmem:[%s2 + $0x8] sm:$0xff]
        %v303 = vld [vmem:[%s2 + $0x10] sm:$0xff]
        %v304 = vld [vmem:[%s2 + $0x18] sm:$0xff]
        %v305 = vld [vmem:[%s2 + $0x20] sm:$0xff]
        %v306 = vld [vmem:[%s2 + $0x28] sm:$0xff]
        %v307 = vld [vmem:[%s2 + $0x30] sm:$0xff]
        %v308 = vld [vmem:[%s2 + $0x38] sm:$0xff]
        %v309 = vld [vmem:[%s2 + $0x40] sm:$0xff]
        %v310 = vld [vmem:[%s2 + $0x48] sm:$0xff]
        %v311 = vld [vmem:[%s2 + $0x50] sm:$0xff]
        %v312 = vld [vmem:[%s2 + $0x58] sm:$0xff]
        %v313 = vld [vmem:[%s2 + $0x60] sm:$0xff]
        %v314 = vld [vmem:[%s2 + $0x68] sm:$0xff]
        %v315 = vld [vmem:[%s2 + $0x70] sm:$0xf]
        %v316 = vld [vmem:[%s2 + $0x78] sm:$0xf]
        %s317 = scalar_lea.vmem %s2, 116
        %v318 = vld [vmem:[%s317] ss:$8 sm:$0x3]
        %v320 = vlaneseq
        %v321 = vshrl.u32 %v320, 7
        %v322 = vsub.s32 0, %v321
        %v323 = vrot.slane %v318, %v322
        %v324 = vlaneseq
        %v325 = vshrl.u32 %v324, 7
        %v326 = vsub.s32 1, %v325
        %v327 = vrot.slane %v318, %v326
        %v331 = vsel %vm261, %v299, 0
        %v334 = vsel %vm261, %v300, 0
        %vm336 = vcmask 1043456
        %v338 = vsel %vm336, %v315, 0
        %v341 = vsel %vm336, %v316, 0
        %343 = vmatprep.subr.mxu0 0.0
        %344 = vmatpush1.msra.mxu0 0.0
        %345 = vmatprep.subr.mxu0 0.0
        %346 = vmatpush1.msra.mxu0 0.0
        %347 = vmatprep.subr.mxu0 0.0
        %348 = vmatpush1.msra.mxu0 0.0
        %349 = vmatprep.subr.mxu0 0.0
        %350 = vmatpush1.msra.mxu0 0.0
        %351 = vmatprep.subr.mxu0 0.0
        %352 = vmatpush1.msra.mxu0 0.0
        %353 = vmatprep.subr.mxu0 0.0
        %354 = vmatpush1.msra.mxu0 0.0
        %355 = vmatprep.subr.mxu0 0.0
        %356 = vmatpush1.msra.mxu0 0.0
        %357 = vmatprep.subr.mxu0 0.0
        %358 = vmatpush1.msra.mxu0 0.0
        %359 = vmatprep.subr.mxu0 %v341
        %360 = vmatpush1.msra.mxu0 %v338
        %361 = vmatprep.subr.mxu0 %v314
        %362 = vmatpush1.msra.mxu0 %v313
        %363 = vmatprep.subr.mxu0 %v312
        %364 = vmatpush1.msra.mxu0 %v311
        %365 = vmatprep.subr.mxu0 %v310
        %366 = vmatpush1.msra.mxu0 %v309
        %367 = vmatprep.subr.mxu0 %v308
        %368 = vmatpush1.msra.mxu0 %v307
        %369 = vmatprep.subr.mxu0 %v306
        %370 = vmatpush1.msra.mxu0 %v305
        %371 = vmatprep.subr.mxu0 %v304
        %372 = vmatpush1.msra.mxu0 %v303
        %373 = vmatprep.subr.mxu0 %v302
        %374 = vmatpush1.msra.mxu0 %v301
        %375 = vmatprep.subr.mxu0 0.0
        %376 = vmatpush2.msra.mxu0 0.0
        %377 = vmatprep.subr.mxu0 0.0
        %378 = vmatpush2.msra.mxu0 0.0
        %379 = vmatprep.subr.mxu0 0.0
        %380 = vmatpush2.msra.mxu0 0.0
        %381 = vmatprep.subr.mxu0 0.0
        %382 = vmatpush2.msra.mxu0 0.0
        %383 = vmatprep.subr.mxu0 0.0
        %384 = vmatpush2.msra.mxu0 0.0
        %385 = vmatprep.subr.mxu0 0.0
        %386 = vmatpush2.msra.mxu0 0.0
        %387 = vmatprep.subr.mxu0 0.0
        %388 = vmatpush2.msra.mxu0 0.0
        %389 = vmatprep.subr.mxu0 0.0
        %390 = vmatpush2.msra.mxu0 0.0
        %391 = vmatprep.subr.mxu0 0.0
        %392 = vmatpush2.msra.mxu0 0.0
        %393 = vmatprep.subr.mxu0 0.0
        %394 = vmatpush2.msra.mxu0 0.0
        %395 = vmatprep.subr.mxu0 0.0
        %396 = vmatpush2.msra.mxu0 0.0
        %397 = vmatprep.subr.mxu0 0.0
        %398 = vmatpush2.msra.mxu0 0.0
        %399 = vmatprep.subr.mxu0 0.0
        %400 = vmatpush2.msra.mxu0 0.0
        %401 = vmatprep.subr.mxu0 0.0
        %402 = vmatpush2.msra.mxu0 0.0
        %403 = vmatprep.subr.mxu0 0.0
        %404 = vmatpush2.msra.mxu0 0.0
        %405 = vmatprep.subr.mxu0 0.0
        %406 = vmatpush2.msra.mxu0 0.0
        %407 = vmatprep.mubr.f32.mxu0 0.0
        %408 = vmatmul.mubr.f32.gmra.mxu0 %v331
        %v409 = vpop.f32.mrf.mxu0
        %v410 = vadd.f32 %v323, %v409
        %v411 = vpop.f32.mrf.mxu0
        %v412 = vadd.f32 %v327, %v411
        %413 = vmatprep.mubr.f32.mxu0 0.0
        %414 = vmatmul.mubr.f32.gmra.mxu0 %v334
        %v415 = vpop.f32.mrf.mxu0
        %v416 = vadd.f32 %v323, %v415
        %v417 = vpop.f32.mrf.mxu0
        %v418 = vadd.f32 %v327, %v417
        %419 = vdwg.mxu0
        %422 = vrot.lane.b32.xlu0 %v410, 98
        %v423 = vpop.permute.xlu0 %422
        %424 = vrot.lane.b32.xlu0 %v416, 98
        %v425 = vpop.permute.xlu0 %424
        %426 = vrot.lane.b32.xlu0 %v410, 68
        %v427 = vpop.permute.xlu0 %426
        %428 = vrot.lane.b32.xlu0 %v416, 68
        %v429 = vpop.permute.xlu0 %428
        %430 = vrot.lane.b32.xlu0 %v410, 38
        %v431 = vpop.permute.xlu0 %430
        %432 = vrot.lane.b32.xlu0 %v416, 38
        %v433 = vpop.permute.xlu0 %432
        %436 = vrot.lane.b32.xlu0 %v410, 8
        %v437 = vpop.permute.xlu0 %436
        %438 = vrot.lane.b32.xlu0 %v412, 8
        %v439 = vpop.permute.xlu0 %438
        %440 = vrot.lane.b32.xlu0 %v416, 8
        %v441 = vpop.permute.xlu0 %440
        %442 = vrot.lane.b32.xlu0 %v418, 8
        %v443 = vpop.permute.xlu0 %442
        %vm444 = vcmask 64512
        %v445 = vsel %vm444, %v437, %v439
        %v446 = vsel %vm444, %v441, %v443
        %447 = vrot.lane.b32.xlu0 %v412, 106
        %v448 = vpop.permute.xlu0 %447
        %449 = vrot.lane.b32.xlu0 %v418, 106
        %v450 = vpop.permute.xlu0 %449
        %v451 = vlaneseq
        %v452 = vshrl.u32 %v451, 7
        %v453 = vlaneseq
        %v454 = vand.u32 %v453, 127
        %vm455 = vcmp.le.s32.totalorder %v454, %v452
        %456 = vrot.lane.b32.xlu0 %v410, 118
        %v457 = vpop.permute.xlu0 %456
        %vm458 = vcmask 80896
        %v459 = vsel %vm458, %v410, 0
        %v461 = vsel %vm458, %v457, 0
        %463 = vmatprep.subr.mxu0 0.0
        %464 = vmatpush1.xpose.msra.mxu0 0.0
        %465 = vmatprep.subr.mxu0 0.0
        %466 = vmatpush1.xpose.msra.mxu0 0.0
        %467 = vmatprep.subr.mxu0 0.0
        %468 = vmatpush1.xpose.msra.mxu0 0.0
        %469 = vmatprep.subr.mxu0 0.0
        %470 = vmatpush1.xpose.msra.mxu0 0.0
        %471 = vmatprep.subr.mxu0 0.0
        %472 = vmatpush1.xpose.msra.mxu0 0.0
        %473 = vmatprep.subr.mxu0 0.0
        %474 = vmatpush1.xpose.msra.mxu0 0.0
        %475 = vmatprep.subr.mxu0 0.0
        %476 = vmatpush1.xpose.msra.mxu0 0.0
        %477 = vmatprep.subr.mxu0 0.0
        %478 = vmatpush1.xpose.msra.mxu0 0.0
        %479 = vmatprep.subr.mxu0 0.0
        %480 = vmatpush1.xpose.msra.mxu0 0.0
        %481 = vmatprep.subr.mxu0 0.0
        %482 = vmatpush1.xpose.msra.mxu0 0.0
        %483 = vmatprep.subr.mxu0 0.0
        %484 = vmatpush1.xpose.msra.mxu0 0.0
        %485 = vmatprep.subr.mxu0 0.0
        %486 = vmatpush1.xpose.msra.mxu0 0.0
        %487 = vmatprep.subr.mxu0 0.0
        %488 = vmatpush1.xpose.msra.mxu0 0.0
        %489 = vmatprep.subr.mxu0 0.0
        %490 = vmatpush1.xpose.msra.mxu0 0.0
        %491 = vmatprep.subr.mxu0 0.0
        %492 = vmatpush1.xpose.msra.mxu0 0.0
        %493 = vmatprep.subr.mxu0 0.0
        %494 = vmatpush1.xpose.msra.mxu0 %v461
        %495 = vmatprep.subr.mxu0 0.0
        %496 = vmatpush2.xpose.msra.mxu0 0.0
        %497 = vmatprep.subr.mxu0 0.0
        %498 = vmatpush2.xpose.msra.mxu0 0.0
        %499 = vmatprep.subr.mxu0 0.0
        %500 = vmatpush2.xpose.msra.mxu0 0.0
        %501 = vmatprep.subr.mxu0 0.0
        %502 = vmatpush2.xpose.msra.mxu0 0.0
        %503 = vmatprep.subr.mxu0 0.0
        %504 = vmatpush2.xpose.msra.mxu0 0.0
        %505 = vmatprep.subr.mxu0 0.0
        %506 = vmatpush2.xpose.msra.mxu0 0.0
        %507 = vmatprep.subr.mxu0 0.0
        %508 = vmatpush2.xpose.msra.mxu0 0.0
        %509 = vmatprep.subr.mxu0 0.0
        %510 = vmatpush2.xpose.msra.mxu0 0.0
        %511 = vmatprep.subr.mxu0 0.0
        %512 = vmatpush2.xpose.msra.mxu0 0.0
        %513 = vmatprep.subr.mxu0 0.0
        %514 = vmatpush2.xpose.msra.mxu0 0.0
        %515 = vmatprep.subr.mxu0 0.0
        %516 = vmatpush2.xpose.msra.mxu0 0.0
        %517 = vmatprep.subr.mxu0 0.0
        %518 = vmatpush2.xpose.msra.mxu0 0.0
        %519 = vmatprep.subr.mxu0 0.0
        %520 = vmatpush2.xpose.msra.mxu0 0.0
        %521 = vmatprep.subr.mxu0 0.0
        %522 = vmatpush2.xpose.msra.mxu0 0.0
        %523 = vmatprep.subr.mxu0 0.0
        %524 = vmatpush2.xpose.msra.mxu0 0.0
        %525 = vmatprep.subr.mxu0 0.0
        %526 = vmatpush2.xpose.msra.mxu0 0.0
        %527 = vmatprep.mubr.f32.mxu0 0.0
        %528 = vmatmul.mubr.f32.gmra.mxu0 %v459
        %v529 = vpop.f32.mrf.mxu0
        %v530 = vadd.f32 0.0, %v529
        %v531 = vpop.f32.mrf.mxu0
        %532 = vdwg.mxu0
        %533 = vrot.lane.b32.xlu0 %v416, 118
        %v534 = vpop.permute.xlu0 %533
        %v535 = vsel %vm458, %v416, 0
        %v537 = vsel %vm458, %v534, 0
        %539 = vmatprep.subr.mxu0 0.0
        %540 = vmatpush1.xpose.msra.mxu0 0.0
        %541 = vmatprep.subr.mxu0 0.0
        %542 = vmatpush1.xpose.msra.mxu0 0.0
        %543 = vmatprep.subr.mxu0 0.0
        %544 = vmatpush1.xpose.msra.mxu0 0.0
        %545 = vmatprep.subr.mxu0 0.0
        %546 = vmatpush1.xpose.msra.mxu0 0.0
        %547 = vmatprep.subr.mxu0 0.0
        %548 = vmatpush1.xpose.msra.mxu0 0.0
        %549 = vmatprep.subr.mxu0 0.0
        %550 = vmatpush1.xpose.msra.mxu0 0.0
        %551 = vmatprep.subr.mxu0 0.0
        %552 = vmatpush1.xpose.msra.mxu0 0.0
        %553 = vmatprep.subr.mxu0 0.0
        %554 = vmatpush1.xpose.msra.mxu0 0.0
        %555 = vmatprep.subr.mxu0 0.0
        %556 = vmatpush1.xpose.msra.mxu0 0.0
        %557 = vmatprep.subr.mxu0 0.0
        %558 = vmatpush1.xpose.msra.mxu0 0.0
        %559 = vmatprep.subr.mxu0 0.0
        %560 = vmatpush1.xpose.msra.mxu0 0.0
        %561 = vmatprep.subr.mxu0 0.0
        %562 = vmatpush1.xpose.msra.mxu0 0.0
        %563 = vmatprep.subr.mxu0 0.0
        %564 = vmatpush1.xpose.msra.mxu0 0.0
        %565 = vmatprep.subr.mxu0 0.0
        %566 = vmatpush1.xpose.msra.mxu0 0.0
        %567 = vmatprep.subr.mxu0 0.0
        %568 = vmatpush1.xpose.msra.mxu0 0.0
        %569 = vmatprep.subr.mxu0 0.0
        %570 = vmatpush1.xpose.msra.mxu0 %v537
        %571 = vmatprep.subr.mxu0 0.0
        %572 = vmatpush2.xpose.msra.mxu0 0.0
        %573 = vmatprep.subr.mxu0 0.0
        %574 = vmatpush2.xpose.msra.mxu0 0.0
        %575 = vmatprep.subr.mxu0 0.0
        %576 = vmatpush2.xpose.msra.mxu0 0.0
        %577 = vmatprep.subr.mxu0 0.0
        %578 = vmatpush2.xpose.msra.mxu0 0.0
        %579 = vmatprep.subr.mxu0 0.0
        %580 = vmatpush2.xpose.msra.mxu0 0.0
        %581 = vmatprep.subr.mxu0 0.0
        %582 = vmatpush2.xpose.msra.mxu0 0.0
        %583 = vmatprep.subr.mxu0 0.0
        %584 = vmatpush2.xpose.msra.mxu0 0.0
        %585 = vmatprep.subr.mxu0 0.0
        %586 = vmatpush2.xpose.msra.mxu0 0.0
        %587 = vmatprep.subr.mxu0 0.0
        %588 = vmatpush2.xpose.msra.mxu0 0.0
        %589 = vmatprep.subr.mxu0 0.0
        %590 = vmatpush2.xpose.msra.mxu0 0.0
        %591 = vmatprep.subr.mxu0 0.0
        %592 = vmatpush2.xpose.msra.mxu0 0.0
        %593 = vmatprep.subr.mxu0 0.0
        %594 = vmatpush2.xpose.msra.mxu0 0.0
        %595 = vmatprep.subr.mxu0 0.0
        %596 = vmatpush2.xpose.msra.mxu0 0.0
        %597 = vmatprep.subr.mxu0 0.0
        %598 = vmatpush2.xpose.msra.mxu0 0.0
        %599 = vmatprep.subr.mxu0 0.0
        %600 = vmatpush2.xpose.msra.mxu0 0.0
        %601 = vmatprep.subr.mxu0 0.0
        %602 = vmatpush2.xpose.msra.mxu0 0.0
        %603 = vmatprep.mubr.f32.mxu0 0.0
        %604 = vmatmul.mubr.f32.gmra.mxu0 %v535
        %v605 = vpop.f32.mrf.mxu0
        %v606 = vadd.f32 0.0, %v605
        %v607 = vpop.f32.mrf.mxu0
        %608 = vdwg.mxu0
        %609 = vrot.lane.b32.xlu0 %v423, 118
        %v610 = vpop.permute.xlu0 %609
        %v611 = vsel %vm458, %v423, 0
        %v613 = vsel %vm458, %v610, 0
        %615 = vmatprep.subr.mxu0 0.0
        %616 = vmatpush1.xpose.msra.mxu0 0.0
        %617 = vmatprep.subr.mxu0 0.0
        %618 = vmatpush1.xpose.msra.mxu0 0.0
        %619 = vmatprep.subr.mxu0 0.0
        %620 = vmatpush1.xpose.msra.mxu0 0.0
        %621 = vmatprep.subr.mxu0 0.0
        %622 = vmatpush1.xpose.msra.mxu0 0.0
        %623 = vmatprep.subr.mxu0 0.0
        %624 = vmatpush1.xpose.msra.mxu0 0.0
        %625 = vmatprep.subr.mxu0 0.0
        %626 = vmatpush1.xpose.msra.mxu0 0.0
        %627 = vmatprep.subr.mxu0 0.0
        %628 = vmatpush1.xpose.msra.mxu0 0.0
        %629 = vmatprep.subr.mxu0 0.0
        %630 = vmatpush1.xpose.msra.mxu0 0.0
        %631 = vmatprep.subr.mxu0 0.0
        %632 = vmatpush1.xpose.msra.mxu0 0.0
        %633 = vmatprep.subr.mxu0 0.0
        %634 = vmatpush1.xpose.msra.mxu0 0.0
        %635 = vmatprep.subr.mxu0 0.0
        %636 = vmatpush1.xpose.msra.mxu0 0.0
        %637 = vmatprep.subr.mxu0 0.0
        %638 = vmatpush1.xpose.msra.mxu0 0.0
        %639 = vmatprep.subr.mxu0 0.0
        %640 = vmatpush1.xpose.msra.mxu0 0.0
        %641 = vmatprep.subr.mxu0 0.0
        %642 = vmatpush1.xpose.msra.mxu0 0.0
        %643 = vmatprep.subr.mxu0 0.0
        %644 = vmatpush1.xpose.msra.mxu0 0.0
        %645 = vmatprep.subr.mxu0 0.0
        %646 = vmatpush1.xpose.msra.mxu0 %v613
        %647 = vmatprep.subr.mxu0 0.0
        %648 = vmatpush2.xpose.msra.mxu0 0.0
        %649 = vmatprep.subr.mxu0 0.0
        %650 = vmatpush2.xpose.msra.mxu0 0.0
        %651 = vmatprep.subr.mxu0 0.0
        %652 = vmatpush2.xpose.msra.mxu0 0.0
        %653 = vmatprep.subr.mxu0 0.0
        %654 = vmatpush2.xpose.msra.mxu0 0.0
        %655 = vmatprep.subr.mxu0 0.0
        %656 = vmatpush2.xpose.msra.mxu0 0.0
        %657 = vmatprep.subr.mxu0 0.0
        %658 = vmatpush2.xpose.msra.mxu0 0.0
        %659 = vmatprep.subr.mxu0 0.0
        %660 = vmatpush2.xpose.msra.mxu0 0.0
        %661 = vmatprep.subr.mxu0 0.0
        %662 = vmatpush2.xpose.msra.mxu0 0.0
        %663 = vmatprep.subr.mxu0 0.0
        %664 = vmatpush2.xpose.msra.mxu0 0.0
        %665 = vmatprep.subr.mxu0 0.0
        %666 = vmatpush2.xpose.msra.mxu0 0.0
        %667 = vmatprep.subr.mxu0 0.0
        %668 = vmatpush2.xpose.msra.mxu0 0.0
        %669 = vmatprep.subr.mxu0 0.0
        %670 = vmatpush2.xpose.msra.mxu0 0.0
        %671 = vmatprep.subr.mxu0 0.0
        %672 = vmatpush2.xpose.msra.mxu0 0.0
        %673 = vmatprep.subr.mxu0 0.0
        %674 = vmatpush2.xpose.msra.mxu0 0.0
        %675 = vmatprep.subr.mxu0 0.0
        %676 = vmatpush2.xpose.msra.mxu0 0.0
        %677 = vmatprep.subr.mxu0 0.0
        %678 = vmatpush2.xpose.msra.mxu0 0.0
        %679 = vmatprep.mubr.f32.mxu0 0.0
        %680 = vmatmul.mubr.f32.gmra.mxu0 %v611
        %v681 = vpop.f32.mrf.mxu0
        %v682 = vadd.f32 0.0, %v681
        %v683 = vpop.f32.mrf.mxu0
        %684 = vdwg.mxu0
        %685 = vrot.lane.b32.xlu0 %v425, 118
        %v686 = vpop.permute.xlu0 %685
        %v687 = vsel %vm458, %v425, 0
        %v689 = vsel %vm458, %v686, 0
        %691 = vmatprep.subr.mxu0 0.0
        %692 = vmatpush1.xpose.msra.mxu0 0.0
        %693 = vmatprep.subr.mxu0 0.0
        %694 = vmatpush1.xpose.msra.mxu0 0.0
        %695 = vmatprep.subr.mxu0 0.0
        %696 = vmatpush1.xpose.msra.mxu0 0.0
        %697 = vmatprep.subr.mxu0 0.0
        %698 = vmatpush1.xpose.msra.mxu0 0.0
        %699 = vmatprep.subr.mxu0 0.0
        %700 = vmatpush1.xpose.msra.mxu0 0.0
        %701 = vmatprep.subr.mxu0 0.0
        %702 = vmatpush1.xpose.msra.mxu0 0.0
        %703 = vmatprep.subr.mxu0 0.0
        %704 = vmatpush1.xpose.msra.mxu0 0.0
        %705 = vmatprep.subr.mxu0 0.0
        %706 = vmatpush1.xpose.msra.mxu0 0.0
        %707 = vmatprep.subr.mxu0 0.0
        %708 = vmatpush1.xpose.msra.mxu0 0.0
        %709 = vmatprep.subr.mxu0 0.0
        %710 = vmatpush1.xpose.msra.mxu0 0.0
        %711 = vmatprep.subr.mxu0 0.0
        %712 = vmatpush1.xpose.msra.mxu0 0.0
        %713 = vmatprep.subr.mxu0 0.0
        %714 = vmatpush1.xpose.msra.mxu0 0.0
        %715 = vmatprep.subr.mxu0 0.0
        %716 = vmatpush1.xpose.msra.mxu0 0.0
        %717 = vmatprep.subr.mxu0 0.0
        %718 = vmatpush1.xpose.msra.mxu0 0.0
        %719 = vmatprep.subr.mxu0 0.0
        %720 = vmatpush1.xpose.msra.mxu0 0.0
        %721 = vmatprep.subr.mxu0 0.0
        %722 = vmatpush1.xpose.msra.mxu0 %v689
        %723 = vmatprep.subr.mxu0 0.0
        %724 = vmatpush2.xpose.msra.mxu0 0.0
        %725 = vmatprep.subr.mxu0 0.0
        %726 = vmatpush2.xpose.msra.mxu0 0.0
        %727 = vmatprep.subr.mxu0 0.0
        %728 = vmatpush2.xpose.msra.mxu0 0.0
        %729 = vmatprep.subr.mxu0 0.0
        %730 = vmatpush2.xpose.msra.mxu0 0.0
        %731 = vmatprep.subr.mxu0 0.0
        %732 = vmatpush2.xpose.msra.mxu0 0.0
        %733 = vmatprep.subr.mxu0 0.0
        %734 = vmatpush2.xpose.msra.mxu0 0.0
        %735 = vmatprep.subr.mxu0 0.0
        %736 = vmatpush2.xpose.msra.mxu0 0.0
        %737 = vmatprep.subr.mxu0 0.0
        %738 = vmatpush2.xpose.msra.mxu0 0.0
        %739 = vmatprep.subr.mxu0 0.0
        %740 = vmatpush2.xpose.msra.mxu0 0.0
        %741 = vmatprep.subr.mxu0 0.0
        %742 = vmatpush2.xpose.msra.mxu0 0.0
        %743 = vmatprep.subr.mxu0 0.0
        %744 = vmatpush2.xpose.msra.mxu0 0.0
        %745 = vmatprep.subr.mxu0 0.0
        %746 = vmatpush2.xpose.msra.mxu0 0.0
        %747 = vmatprep.subr.mxu0 0.0
        %748 = vmatpush2.xpose.msra.mxu0 0.0
        %749 = vmatprep.subr.mxu0 0.0
        %750 = vmatpush2.xpose.msra.mxu0 0.0
        %751 = vmatprep.subr.mxu0 0.0
        %752 = vmatpush2.xpose.msra.mxu0 0.0
        %753 = vmatprep.subr.mxu0 0.0
        %754 = vmatpush2.xpose.msra.mxu0 0.0
        %755 = vmatprep.mubr.f32.mxu0 0.0
        %756 = vmatmul.mubr.f32.gmra.mxu0 %v687
        %v757 = vpop.f32.mrf.mxu0
        %v758 = vadd.f32 0.0, %v757
        %v759 = vpop.f32.mrf.mxu0
        %760 = vdwg.mxu0
        %761 = vrot.lane.b32.xlu0 %v427, 118
        %v762 = vpop.permute.xlu0 %761
        %v763 = vsel %vm458, %v427, 0
        %v765 = vsel %vm458, %v762, 0
        %767 = vmatprep.subr.mxu0 0.0
        %768 = vmatpush1.xpose.msra.mxu0 0.0
        %769 = vmatprep.subr.mxu0 0.0
        %770 = vmatpush1.xpose.msra.mxu0 0.0
        %771 = vmatprep.subr.mxu0 0.0
        %772 = vmatpush1.xpose.msra.mxu0 0.0
        %773 = vmatprep.subr.mxu0 0.0
        %774 = vmatpush1.xpose.msra.mxu0 0.0
        %775 = vmatprep.subr.mxu0 0.0
        %776 = vmatpush1.xpose.msra.mxu0 0.0
        %777 = vmatprep.subr.mxu0 0.0
        %778 = vmatpush1.xpose.msra.mxu0 0.0
        %779 = vmatprep.subr.mxu0 0.0
        %780 = vmatpush1.xpose.msra.mxu0 0.0
        %781 = vmatprep.subr.mxu0 0.0
        %782 = vmatpush1.xpose.msra.mxu0 0.0
        %783 = vmatprep.subr.mxu0 0.0
        %784 = vmatpush1.xpose.msra.mxu0 0.0
        %785 = vmatprep.subr.mxu0 0.0
        %786 = vmatpush1.xpose.msra.mxu0 0.0
        %787 = vmatprep.subr.mxu0 0.0
        %788 = vmatpush1.xpose.msra.mxu0 0.0
        %789 = vmatprep.subr.mxu0 0.0
        %790 = vmatpush1.xpose.msra.mxu0 0.0
        %791 = vmatprep.subr.mxu0 0.0
        %792 = vmatpush1.xpose.msra.mxu0 0.0
        %793 = vmatprep.subr.mxu0 0.0
        %794 = vmatpush1.xpose.msra.mxu0 0.0
        %795 = vmatprep.subr.mxu0 0.0
        %796 = vmatpush1.xpose.msra.mxu0 0.0
        %797 = vmatprep.subr.mxu0 0.0
        %798 = vmatpush1.xpose.msra.mxu0 %v765
        %799 = vmatprep.subr.mxu0 0.0
        %800 = vmatpush2.xpose.msra.mxu0 0.0
        %801 = vmatprep.subr.mxu0 0.0
        %802 = vmatpush2.xpose.msra.mxu0 0.0
        %803 = vmatprep.subr.mxu0 0.0
        %804 = vmatpush2.xpose.msra.mxu0 0.0
        %805 = vmatprep.subr.mxu0 0.0
        %806 = vmatpush2.xpose.msra.mxu0 0.0
        %807 = vmatprep.subr.mxu0 0.0
        %808 = vmatpush2.xpose.msra.mxu0 0.0
        %809 = vmatprep.subr.mxu0 0.0
        %810 = vmatpush2.xpose.msra.mxu0 0.0
        %811 = vmatprep.subr.mxu0 0.0
        %812 = vmatpush2.xpose.msra.mxu0 0.0
        %813 = vmatprep.subr.mxu0 0.0
        %814 = vmatpush2.xpose.msra.mxu0 0.0
        %815 = vmatprep.subr.mxu0 0.0
        %816 = vmatpush2.xpose.msra.mxu0 0.0
        %817 = vmatprep.subr.mxu0 0.0
        %818 = vmatpush2.xpose.msra.mxu0 0.0
        %819 = vmatprep.subr.mxu0 0.0
        %820 = vmatpush2.xpose.msra.mxu0 0.0
        %821 = vmatprep.subr.mxu0 0.0
        %822 = vmatpush2.xpose.msra.mxu0 0.0
        %823 = vmatprep.subr.mxu0 0.0
        %824 = vmatpush2.xpose.msra.mxu0 0.0
        %825 = vmatprep.subr.mxu0 0.0
        %826 = vmatpush2.xpose.msra.mxu0 0.0
        %827 = vmatprep.subr.mxu0 0.0
        %828 = vmatpush2.xpose.msra.mxu0 0.0
        %829 = vmatprep.subr.mxu0 0.0
        %830 = vmatpush2.xpose.msra.mxu0 0.0
        %831 = vmatprep.mubr.f32.mxu0 0.0
        %832 = vmatmul.mubr.f32.gmra.mxu0 %v763
        %v833 = vpop.f32.mrf.mxu0
        %v834 = vadd.f32 0.0, %v833
        %v835 = vpop.f32.mrf.mxu0
        %836 = vdwg.mxu0
        %837 = vrot.lane.b32.xlu0 %v429, 118
        %v838 = vpop.permute.xlu0 %837
        %v839 = vsel %vm458, %v429, 0
        %v841 = vsel %vm458, %v838, 0
        %843 = vmatprep.subr.mxu0 0.0
        %844 = vmatpush1.xpose.msra.mxu0 0.0
        %845 = vmatprep.subr.mxu0 0.0
        %846 = vmatpush1.xpose.msra.mxu0 0.0
        %847 = vmatprep.subr.mxu0 0.0
        %848 = vmatpush1.xpose.msra.mxu0 0.0
        %849 = vmatprep.subr.mxu0 0.0
        %850 = vmatpush1.xpose.msra.mxu0 0.0
        %851 = vmatprep.subr.mxu0 0.0
        %852 = vmatpush1.xpose.msra.mxu0 0.0
        %853 = vmatprep.subr.mxu0 0.0
        %854 = vmatpush1.xpose.msra.mxu0 0.0
        %855 = vmatprep.subr.mxu0 0.0
        %856 = vmatpush1.xpose.msra.mxu0 0.0
        %857 = vmatprep.subr.mxu0 0.0
        %858 = vmatpush1.xpose.msra.mxu0 0.0
        %859 = vmatprep.subr.mxu0 0.0
        %860 = vmatpush1.xpose.msra.mxu0 0.0
        %861 = vmatprep.subr.mxu0 0.0
        %862 = vmatpush1.xpose.msra.mxu0 0.0
        %863 = vmatprep.subr.mxu0 0.0
        %864 = vmatpush1.xpose.msra.mxu0 0.0
        %865 = vmatprep.subr.mxu0 0.0
        %866 = vmatpush1.xpose.msra.mxu0 0.0
        %867 = vmatprep.subr.mxu0 0.0
        %868 = vmatpush1.xpose.msra.mxu0 0.0
        %869 = vmatprep.subr.mxu0 0.0
        %870 = vmatpush1.xpose.msra.mxu0 0.0
        %871 = vmatprep.subr.mxu0 0.0
        %872 = vmatpush1.xpose.msra.mxu0 0.0
        %873 = vmatprep.subr.mxu0 0.0
        %874 = vmatpush1.xpose.msra.mxu0 %v841
        %875 = vmatprep.subr.mxu0 0.0
        %876 = vmatpush2.xpose.msra.mxu0 0.0
        %877 = vmatprep.subr.mxu0 0.0
        %878 = vmatpush2.xpose.msra.mxu0 0.0
        %879 = vmatprep.subr.mxu0 0.0
        %880 = vmatpush2.xpose.msra.mxu0 0.0
        %881 = vmatprep.subr.mxu0 0.0
        %882 = vmatpush2.xpose.msra.mxu0 0.0
        %883 = vmatprep.subr.mxu0 0.0
        %884 = vmatpush2.xpose.msra.mxu0 0.0
        %885 = vmatprep.subr.mxu0 0.0
        %886 = vmatpush2.xpose.msra.mxu0 0.0
        %887 = vmatprep.subr.mxu0 0.0
        %888 = vmatpush2.xpose.msra.mxu0 0.0
        %889 = vmatprep.subr.mxu0 0.0
        %890 = vmatpush2.xpose.msra.mxu0 0.0
        %891 = vmatprep.subr.mxu0 0.0
        %892 = vmatpush2.xpose.msra.mxu0 0.0
        %893 = vmatprep.subr.mxu0 0.0
        %894 = vmatpush2.xpose.msra.mxu0 0.0
        %895 = vmatprep.subr.mxu0 0.0
        %896 = vmatpush2.xpose.msra.mxu0 0.0
        %897 = vmatprep.subr.mxu0 0.0
        %898 = vmatpush2.xpose.msra.mxu0 0.0
        %899 = vmatprep.subr.mxu0 0.0
        %900 = vmatpush2.xpose.msra.mxu0 0.0
        %901 = vmatprep.subr.mxu0 0.0
        %902 = vmatpush2.xpose.msra.mxu0 0.0
        %903 = vmatprep.subr.mxu0 0.0
        %904 = vmatpush2.xpose.msra.mxu0 0.0
        %905 = vmatprep.subr.mxu0 0.0
        %906 = vmatpush2.xpose.msra.mxu0 0.0
        %907 = vmatprep.mubr.f32.mxu0 0.0
        %908 = vmatmul.mubr.f32.gmra.mxu0 %v839
        %v909 = vpop.f32.mrf.mxu0
        %v910 = vadd.f32 0.0, %v909
        %v911 = vpop.f32.mrf.mxu0
        %912 = vdwg.mxu0
        %913 = vrot.lane.b32.xlu0 %v431, 118
        %v914 = vpop.permute.xlu0 %913
        %v915 = vsel %vm458, %v431, 0
        %v917 = vsel %vm458, %v914, 0
        %919 = vmatprep.subr.mxu0 0.0
        %920 = vmatpush1.xpose.msra.mxu0 0.0
        %921 = vmatprep.subr.mxu0 0.0
        %922 = vmatpush1.xpose.msra.mxu0 0.0
        %923 = vmatprep.subr.mxu0 0.0
        %924 = vmatpush1.xpose.msra.mxu0 0.0
        %925 = vmatprep.subr.mxu0 0.0
        %926 = vmatpush1.xpose.msra.mxu0 0.0
        %927 = vmatprep.subr.mxu0 0.0
        %928 = vmatpush1.xpose.msra.mxu0 0.0
        %929 = vmatprep.subr.mxu0 0.0
        %930 = vmatpush1.xpose.msra.mxu0 0.0
        %931 = vmatprep.subr.mxu0 0.0
        %932 = vmatpush1.xpose.msra.mxu0 0.0
        %933 = vmatprep.subr.mxu0 0.0
        %934 = vmatpush1.xpose.msra.mxu0 0.0
        %935 = vmatprep.subr.mxu0 0.0
        %936 = vmatpush1.xpose.msra.mxu0 0.0
        %937 = vmatprep.subr.mxu0 0.0
        %938 = vmatpush1.xpose.msra.mxu0 0.0
        %939 = vmatprep.subr.mxu0 0.0
        %940 = vmatpush1.xpose.msra.mxu0 0.0
        %941 = vmatprep.subr.mxu0 0.0
        %942 = vmatpush1.xpose.msra.mxu0 0.0
        %943 = vmatprep.subr.mxu0 0.0
        %944 = vmatpush1.xpose.msra.mxu0 0.0
        %945 = vmatprep.subr.mxu0 0.0
        %946 = vmatpush1.xpose.msra.mxu0 0.0
        %947 = vmatprep.subr.mxu0 0.0
        %948 = vmatpush1.xpose.msra.mxu0 0.0
        %949 = vmatprep.subr.mxu0 0.0
        %950 = vmatpush1.xpose.msra.mxu0 %v917
        %951 = vmatprep.subr.mxu0 0.0
        %952 = vmatpush2.xpose.msra.mxu0 0.0
        %953 = vmatprep.subr.mxu0 0.0
        %954 = vmatpush2.xpose.msra.mxu0 0.0
        %955 = vmatprep.subr.mxu0 0.0
        %956 = vmatpush2.xpose.msra.mxu0 0.0
        %957 = vmatprep.subr.mxu0 0.0
        %958 = vmatpush2.xpose.msra.mxu0 0.0
        %959 = vmatprep.subr.mxu0 0.0
        %960 = vmatpush2.xpose.msra.mxu0 0.0
        %961 = vmatprep.subr.mxu0 0.0
        %962 = vmatpush2.xpose.msra.mxu0 0.0
        %963 = vmatprep.subr.mxu0 0.0
        %964 = vmatpush2.xpose.msra.mxu0 0.0
        %965 = vmatprep.subr.mxu0 0.0
        %966 = vmatpush2.xpose.msra.mxu0 0.0
        %967 = vmatprep.subr.mxu0 0.0
        %968 = vmatpush2.xpose.msra.mxu0 0.0
        %969 = vmatprep.subr.mxu0 0.0
        %970 = vmatpush2.xpose.msra.mxu0 0.0
        %971 = vmatprep.subr.mxu0 0.0
        %972 = vmatpush2.xpose.msra.mxu0 0.0
        %973 = vmatprep.subr.mxu0 0.0
        %974 = vmatpush2.xpose.msra.mxu0 0.0
        %975 = vmatprep.subr.mxu0 0.0
        %976 = vmatpush2.xpose.msra.mxu0 0.0
        %977 = vmatprep.subr.mxu0 0.0
        %978 = vmatpush2.xpose.msra.mxu0 0.0
        %979 = vmatprep.subr.mxu0 0.0
        %980 = vmatpush2.xpose.msra.mxu0 0.0
        %981 = vmatprep.subr.mxu0 0.0
        %982 = vmatpush2.xpose.msra.mxu0 0.0
        %983 = vmatprep.mubr.f32.mxu0 0.0
        %984 = vmatmul.mubr.f32.gmra.mxu0 %v915
        %v985 = vpop.f32.mrf.mxu0
        %v986 = vadd.f32 0.0, %v985
        %v987 = vpop.f32.mrf.mxu0
        %988 = vdwg.mxu0
        %989 = vrot.lane.b32.xlu0 %v433, 118
        %v990 = vpop.permute.xlu0 %989
        %v991 = vsel %vm458, %v433, 0
        %v993 = vsel %vm458, %v990, 0
        %995 = vmatprep.subr.mxu0 0.0
        %996 = vmatpush1.xpose.msra.mxu0 0.0
        %997 = vmatprep.subr.mxu0 0.0
        %998 = vmatpush1.xpose.msra.mxu0 0.0
        %999 = vmatprep.subr.mxu0 0.0
        %1000 = vmatpush1.xpose.msra.mxu0 0.0
        %1001 = vmatprep.subr.mxu0 0.0
        %1002 = vmatpush1.xpose.msra.mxu0 0.0
        %1003 = vmatprep.subr.mxu0 0.0
        %1004 = vmatpush1.xpose.msra.mxu0 0.0
        %1005 = vmatprep.subr.mxu0 0.0
        %1006 = vmatpush1.xpose.msra.mxu0 0.0
        %1007 = vmatprep.subr.mxu0 0.0
        %1008 = vmatpush1.xpose.msra.mxu0 0.0
        %1009 = vmatprep.subr.mxu0 0.0
        %1010 = vmatpush1.xpose.msra.mxu0 0.0
        %1011 = vmatprep.subr.mxu0 0.0
        %1012 = vmatpush1.xpose.msra.mxu0 0.0
        %1013 = vmatprep.subr.mxu0 0.0
        %1014 = vmatpush1.xpose.msra.mxu0 0.0
        %1015 = vmatprep.subr.mxu0 0.0
        %1016 = vmatpush1.xpose.msra.mxu0 0.0
        %1017 = vmatprep.subr.mxu0 0.0
        %1018 = vmatpush1.xpose.msra.mxu0 0.0
        %1019 = vmatprep.subr.mxu0 0.0
        %1020 = vmatpush1.xpose.msra.mxu0 0.0
        %1021 = vmatprep.subr.mxu0 0.0
        %1022 = vmatpush1.xpose.msra.mxu0 0.0
        %1023 = vmatprep.subr.mxu0 0.0
        %1024 = vmatpush1.xpose.msra.mxu0 0.0
        %1025 = vmatprep.subr.mxu0 0.0
        %1026 = vmatpush1.xpose.msra.mxu0 %v993
        %1027 = vmatprep.subr.mxu0 0.0
        %1028 = vmatpush2.xpose.msra.mxu0 0.0
        %1029 = vmatprep.subr.mxu0 0.0
        %1030 = vmatpush2.xpose.msra.mxu0 0.0
        %1031 = vmatprep.subr.mxu0 0.0
        %1032 = vmatpush2.xpose.msra.mxu0 0.0
        %1033 = vmatprep.subr.mxu0 0.0
        %1034 = vmatpush2.xpose.msra.mxu0 0.0
        %1035 = vmatprep.subr.mxu0 0.0
        %1036 = vmatpush2.xpose.msra.mxu0 0.0
        %1037 = vmatprep.subr.mxu0 0.0
        %1038 = vmatpush2.xpose.msra.mxu0 0.0
        %1039 = vmatprep.subr.mxu0 0.0
        %1040 = vmatpush2.xpose.msra.mxu0 0.0
        %1041 = vmatprep.subr.mxu0 0.0
        %1042 = vmatpush2.xpose.msra.mxu0 0.0
        %1043 = vmatprep.subr.mxu0 0.0
        %1044 = vmatpush2.xpose.msra.mxu0 0.0
        %1045 = vmatprep.subr.mxu0 0.0
        %1046 = vmatpush2.xpose.msra.mxu0 0.0
        %1047 = vmatprep.subr.mxu0 0.0
        %1048 = vmatpush2.xpose.msra.mxu0 0.0
        %1049 = vmatprep.subr.mxu0 0.0
        %1050 = vmatpush2.xpose.msra.mxu0 0.0
        %1051 = vmatprep.subr.mxu0 0.0
        %1052 = vmatpush2.xpose.msra.mxu0 0.0
        %1053 = vmatprep.subr.mxu0 0.0
        %1054 = vmatpush2.xpose.msra.mxu0 0.0
        %1055 = vmatprep.subr.mxu0 0.0
        %1056 = vmatpush2.xpose.msra.mxu0 0.0
        %1057 = vmatprep.subr.mxu0 0.0
        %1058 = vmatpush2.xpose.msra.mxu0 0.0
        %1059 = vmatprep.mubr.f32.mxu0 0.0
        %1060 = vmatmul.mubr.f32.gmra.mxu0 %v991
        %v1061 = vpop.f32.mrf.mxu0
        %v1062 = vadd.f32 0.0, %v1061
        %v1063 = vpop.f32.mrf.mxu0
        %1064 = vdwg.mxu0
        %1065 = vrot.lane.b32.xlu0 %v445, 118
        %v1066 = vpop.permute.xlu0 %1065
        %v1067 = vsel %vm458, %v445, 0
        %v1069 = vsel %vm458, %v1066, 0
        %1071 = vmatprep.subr.mxu0 0.0
        %1072 = vmatpush1.xpose.msra.mxu0 0.0
        %1073 = vmatprep.subr.mxu0 0.0
        %1074 = vmatpush1.xpose.msra.mxu0 0.0
        %1075 = vmatprep.subr.mxu0 0.0
        %1076 = vmatpush1.xpose.msra.mxu0 0.0
        %1077 = vmatprep.subr.mxu0 0.0
        %1078 = vmatpush1.xpose.msra.mxu0 0.0
        %1079 = vmatprep.subr.mxu0 0.0
        %1080 = vmatpush1.xpose.msra.mxu0 0.0
        %1081 = vmatprep.subr.mxu0 0.0
        %1082 = vmatpush1.xpose.msra.mxu0 0.0
        %1083 = vmatprep.subr.mxu0 0.0
        %1084 = vmatpush1.xpose.msra.mxu0 0.0
        %1085 = vmatprep.subr.mxu0 0.0
        %1086 = vmatpush1.xpose.msra.mxu0 0.0
        %1087 = vmatprep.subr.mxu0 0.0
        %1088 = vmatpush1.xpose.msra.mxu0 0.0
        %1089 = vmatprep.subr.mxu0 0.0
        %1090 = vmatpush1.xpose.msra.mxu0 0.0
        %1091 = vmatprep.subr.mxu0 0.0
        %1092 = vmatpush1.xpose.msra.mxu0 0.0
        %1093 = vmatprep.subr.mxu0 0.0
        %1094 = vmatpush1.xpose.msra.mxu0 0.0
        %1095 = vmatprep.subr.mxu0 0.0
        %1096 = vmatpush1.xpose.msra.mxu0 0.0
        %1097 = vmatprep.subr.mxu0 0.0
        %1098 = vmatpush1.xpose.msra.mxu0 0.0
        %1099 = vmatprep.subr.mxu0 0.0
        %1100 = vmatpush1.xpose.msra.mxu0 0.0
        %1101 = vmatprep.subr.mxu0 0.0
        %1102 = vmatpush1.xpose.msra.mxu0 %v1069
        %1103 = vmatprep.subr.mxu0 0.0
        %1104 = vmatpush2.xpose.msra.mxu0 0.0
        %1105 = vmatprep.subr.mxu0 0.0
        %1106 = vmatpush2.xpose.msra.mxu0 0.0
        %1107 = vmatprep.subr.mxu0 0.0
        %1108 = vmatpush2.xpose.msra.mxu0 0.0
        %1109 = vmatprep.subr.mxu0 0.0
        %1110 = vmatpush2.xpose.msra.mxu0 0.0
        %1111 = vmatprep.subr.mxu0 0.0
        %1112 = vmatpush2.xpose.msra.mxu0 0.0
        %1113 = vmatprep.subr.mxu0 0.0
        %1114 = vmatpush2.xpose.msra.mxu0 0.0
        %1115 = vmatprep.subr.mxu0 0.0
        %1116 = vmatpush2.xpose.msra.mxu0 0.0
        %1117 = vmatprep.subr.mxu0 0.0
        %1118 = vmatpush2.xpose.msra.mxu0 0.0
        %1119 = vmatprep.subr.mxu0 0.0
        %1120 = vmatpush2.xpose.msra.mxu0 0.0
        %1121 = vmatprep.subr.mxu0 0.0
        %1122 = vmatpush2.xpose.msra.mxu0 0.0
        %1123 = vmatprep.subr.mxu0 0.0
        %1124 = vmatpush2.xpose.msra.mxu0 0.0
        %1125 = vmatprep.subr.mxu0 0.0
        %1126 = vmatpush2.xpose.msra.mxu0 0.0
        %1127 = vmatprep.subr.mxu0 0.0
        %1128 = vmatpush2.xpose.msra.mxu0 0.0
        %1129 = vmatprep.subr.mxu0 0.0
        %1130 = vmatpush2.xpose.msra.mxu0 0.0
        %1131 = vmatprep.subr.mxu0 0.0
        %1132 = vmatpush2.xpose.msra.mxu0 0.0
        %1133 = vmatprep.subr.mxu0 0.0
        %1134 = vmatpush2.xpose.msra.mxu0 0.0
        %1135 = vmatprep.mubr.f32.mxu0 0.0
        %1136 = vmatmul.mubr.f32.gmra.mxu0 %v1067
        %v1137 = vpop.f32.mrf.mxu0
        %v1138 = vadd.f32 0.0, %v1137
        %v1139 = vpop.f32.mrf.mxu0
        %1140 = vdwg.mxu0
        %1141 = vrot.lane.b32.xlu0 %v446, 118
        %v1142 = vpop.permute.xlu0 %1141
        %v1143 = vsel %vm458, %v446, 0
        %v1145 = vsel %vm458, %v1142, 0
        %1147 = vmatprep.subr.mxu0 0.0
        %1148 = vmatpush1.xpose.msra.mxu0 0.0
        %1149 = vmatprep.subr.mxu0 0.0
        %1150 = vmatpush1.xpose.msra.mxu0 0.0
        %1151 = vmatprep.subr.mxu0 0.0
        %1152 = vmatpush1.xpose.msra.mxu0 0.0
        %1153 = vmatprep.subr.mxu0 0.0
        %1154 = vmatpush1.xpose.msra.mxu0 0.0
        %1155 = vmatprep.subr.mxu0 0.0
        %1156 = vmatpush1.xpose.msra.mxu0 0.0
        %1157 = vmatprep.subr.mxu0 0.0
        %1158 = vmatpush1.xpose.msra.mxu0 0.0
        %1159 = vmatprep.subr.mxu0 0.0
        %1160 = vmatpush1.xpose.msra.mxu0 0.0
        %1161 = vmatprep.subr.mxu0 0.0
        %1162 = vmatpush1.xpose.msra.mxu0 0.0
        %1163 = vmatprep.subr.mxu0 0.0
        %1164 = vmatpush1.xpose.msra.mxu0 0.0
        %1165 = vmatprep.subr.mxu0 0.0
        %1166 = vmatpush1.xpose.msra.mxu0 0.0
        %1167 = vmatprep.subr.mxu0 0.0
        %1168 = vmatpush1.xpose.msra.mxu0 0.0
        %1169 = vmatprep.subr.mxu0 0.0
        %1170 = vmatpush1.xpose.msra.mxu0 0.0
        %1171 = vmatprep.subr.mxu0 0.0
        %1172 = vmatpush1.xpose.msra.mxu0 0.0
        %1173 = vmatprep.subr.mxu0 0.0
        %1174 = vmatpush1.xpose.msra.mxu0 0.0
        %1175 = vmatprep.subr.mxu0 0.0
        %1176 = vmatpush1.xpose.msra.mxu0 0.0
        %1177 = vmatprep.subr.mxu0 0.0
        %1178 = vmatpush1.xpose.msra.mxu0 %v1145
        %1179 = vmatprep.subr.mxu0 0.0
        %1180 = vmatpush2.xpose.msra.mxu0 0.0
        %1181 = vmatprep.subr.mxu0 0.0
        %1182 = vmatpush2.xpose.msra.mxu0 0.0
        %1183 = vmatprep.subr.mxu0 0.0
        %1184 = vmatpush2.xpose.msra.mxu0 0.0
        %1185 = vmatprep.subr.mxu0 0.0
        %1186 = vmatpush2.xpose.msra.mxu0 0.0
        %1187 = vmatprep.subr.mxu0 0.0
        %1188 = vmatpush2.xpose.msra.mxu0 0.0
        %1189 = vmatprep.subr.mxu0 0.0
        %1190 = vmatpush2.xpose.msra.mxu0 0.0
        %1191 = vmatprep.subr.mxu0 0.0
        %1192 = vmatpush2.xpose.msra.mxu0 0.0
        %1193 = vmatprep.subr.mxu0 0.0
        %1194 = vmatpush2.xpose.msra.mxu0 0.0
        %1195 = vmatprep.subr.mxu0 0.0
        %1196 = vmatpush2.xpose.msra.mxu0 0.0
        %1197 = vmatprep.subr.mxu0 0.0
        %1198 = vmatpush2.xpose.msra.mxu0 0.0
        %1199 = vmatprep.subr.mxu0 0.0
        %1200 = vmatpush2.xpose.msra.mxu0 0.0
        %1201 = vmatprep.subr.mxu0 0.0
        %1202 = vmatpush2.xpose.msra.mxu0 0.0
        %1203 = vmatprep.subr.mxu0 0.0
        %1204 = vmatpush2.xpose.msra.mxu0 0.0
        %1205 = vmatprep.subr.mxu0 0.0
        %1206 = vmatpush2.xpose.msra.mxu0 0.0
        %1207 = vmatprep.subr.mxu0 0.0
        %1208 = vmatpush2.xpose.msra.mxu0 0.0
        %1209 = vmatprep.subr.mxu0 0.0
        %1210 = vmatpush2.xpose.msra.mxu0 0.0
        %1211 = vmatprep.mubr.f32.mxu0 0.0
        %1212 = vmatmul.mubr.f32.gmra.mxu0 %v1143
        %v1213 = vpop.f32.mrf.mxu0
        %v1214 = vadd.f32 0.0, %v1213
        %v1215 = vpop.f32.mrf.mxu0
        %1216 = vdwg.mxu0
        %1217 = vrot.lane.b32.xlu0 %v448, 118
        %v1218 = vpop.permute.xlu0 %1217
        %v1219 = vsel %vm458, %v448, 0
        %v1221 = vsel %vm458, %v1218, 0
        %1223 = vmatprep.subr.mxu0 0.0
        %1224 = vmatpush1.xpose.msra.mxu0 0.0
        %1225 = vmatprep.subr.mxu0 0.0
        %1226 = vmatpush1.xpose.msra.mxu0 0.0
        %1227 = vmatprep.subr.mxu0 0.0
        %1228 = vmatpush1.xpose.msra.mxu0 0.0
        %1229 = vmatprep.subr.mxu0 0.0
        %1230 = vmatpush1.xpose.msra.mxu0 0.0
        %1231 = vmatprep.subr.mxu0 0.0
        %1232 = vmatpush1.xpose.msra.mxu0 0.0
        %1233 = vmatprep.subr.mxu0 0.0
        %1234 = vmatpush1.xpose.msra.mxu0 0.0
        %1235 = vmatprep.subr.mxu0 0.0
        %1236 = vmatpush1.xpose.msra.mxu0 0.0
        %1237 = vmatprep.subr.mxu0 0.0
        %1238 = vmatpush1.xpose.msra.mxu0 0.0
        %1239 = vmatprep.subr.mxu0 0.0
        %1240 = vmatpush1.xpose.msra.mxu0 0.0
        %1241 = vmatprep.subr.mxu0 0.0
        %1242 = vmatpush1.xpose.msra.mxu0 0.0
        %1243 = vmatprep.subr.mxu0 0.0
        %1244 = vmatpush1.xpose.msra.mxu0 0.0
        %1245 = vmatprep.subr.mxu0 0.0
        %1246 = vmatpush1.xpose.msra.mxu0 0.0
        %1247 = vmatprep.subr.mxu0 0.0
        %1248 = vmatpush1.xpose.msra.mxu0 0.0
        %1249 = vmatprep.subr.mxu0 0.0
        %1250 = vmatpush1.xpose.msra.mxu0 0.0
        %1251 = vmatprep.subr.mxu0 0.0
        %1252 = vmatpush1.xpose.msra.mxu0 0.0
        %1253 = vmatprep.subr.mxu0 0.0
        %1254 = vmatpush1.xpose.msra.mxu0 %v1221
        %1255 = vmatprep.subr.mxu0 0.0
        %1256 = vmatpush2.xpose.msra.mxu0 0.0
        %1257 = vmatprep.subr.mxu0 0.0
        %1258 = vmatpush2.xpose.msra.mxu0 0.0
        %1259 = vmatprep.subr.mxu0 0.0
        %1260 = vmatpush2.xpose.msra.mxu0 0.0
        %1261 = vmatprep.subr.mxu0 0.0
        %1262 = vmatpush2.xpose.msra.mxu0 0.0
        %1263 = vmatprep.subr.mxu0 0.0
        %1264 = vmatpush2.xpose.msra.mxu0 0.0
        %1265 = vmatprep.subr.mxu0 0.0
        %1266 = vmatpush2.xpose.msra.mxu0 0.0
        %1267 = vmatprep.subr.mxu0 0.0
        %1268 = vmatpush2.xpose.msra.mxu0 0.0
        %1269 = vmatprep.subr.mxu0 0.0
        %1270 = vmatpush2.xpose.msra.mxu0 0.0
        %1271 = vmatprep.subr.mxu0 0.0
        %1272 = vmatpush2.xpose.msra.mxu0 0.0
        %1273 = vmatprep.subr.mxu0 0.0
        %1274 = vmatpush2.xpose.msra.mxu0 0.0
        %1275 = vmatprep.subr.mxu0 0.0
        %1276 = vmatpush2.xpose.msra.mxu0 0.0
        %1277 = vmatprep.subr.mxu0 0.0
        %1278 = vmatpush2.xpose.msra.mxu0 0.0
        %1279 = vmatprep.subr.mxu0 0.0
        %1280 = vmatpush2.xpose.msra.mxu0 0.0
        %1281 = vmatprep.subr.mxu0 0.0
        %1282 = vmatpush2.xpose.msra.mxu0 0.0
        %1283 = vmatprep.subr.mxu0 0.0
        %1284 = vmatpush2.xpose.msra.mxu0 0.0
        %1285 = vmatprep.subr.mxu0 0.0
        %1286 = vmatpush2.xpose.msra.mxu0 0.0
        %1287 = vmatprep.mubr.f32.mxu0 0.0
        %1288 = vmatmul.mubr.f32.gmra.mxu0 %v1219
        %v1289 = vpop.f32.mrf.mxu0
        %v1290 = vadd.f32 0.0, %v1289
        %v1291 = vpop.f32.mrf.mxu0
        %1292 = vdwg.mxu0
        %1293 = vrot.lane.b32.xlu0 %v450, 118
        %v1294 = vpop.permute.xlu0 %1293
        %v1295 = vsel %vm458, %v450, 0
        %v1297 = vsel %vm458, %v1294, 0
        %1299 = vmatprep.subr.mxu0 0.0
        %1300 = vmatpush1.xpose.msra.mxu0 0.0
        %1301 = vmatprep.subr.mxu0 0.0
        %1302 = vmatpush1.xpose.msra.mxu0 0.0
        %1303 = vmatprep.subr.mxu0 0.0
        %1304 = vmatpush1.xpose.msra.mxu0 0.0
        %1305 = vmatprep.subr.mxu0 0.0
        %1306 = vmatpush1.xpose.msra.mxu0 0.0
        %1307 = vmatprep.subr.mxu0 0.0
        %1308 = vmatpush1.xpose.msra.mxu0 0.0
        %1309 = vmatprep.subr.mxu0 0.0
        %1310 = vmatpush1.xpose.msra.mxu0 0.0
        %1311 = vmatprep.subr.mxu0 0.0
        %1312 = vmatpush1.xpose.msra.mxu0 0.0
        %1313 = vmatprep.subr.mxu0 0.0
        %1314 = vmatpush1.xpose.msra.mxu0 0.0
        %1315 = vmatprep.subr.mxu0 0.0
        %1316 = vmatpush1.xpose.msra.mxu0 0.0
        %1317 = vmatprep.subr.mxu0 0.0
        %1318 = vmatpush1.xpose.msra.mxu0 0.0
        %1319 = vmatprep.subr.mxu0 0.0
        %1320 = vmatpush1.xpose.msra.mxu0 0.0
        %1321 = vmatprep.subr.mxu0 0.0
        %1322 = vmatpush1.xpose.msra.mxu0 0.0
        %1323 = vmatprep.subr.mxu0 0.0
        %1324 = vmatpush1.xpose.msra.mxu0 0.0
        %1325 = vmatprep.subr.mxu0 0.0
        %1326 = vmatpush1.xpose.msra.mxu0 0.0
        %1327 = vmatprep.subr.mxu0 0.0
        %1328 = vmatpush1.xpose.msra.mxu0 0.0
        %1329 = vmatprep.subr.mxu0 0.0
        %1330 = vmatpush1.xpose.msra.mxu0 %v1297
        %1331 = vmatprep.subr.mxu0 0.0
        %1332 = vmatpush2.xpose.msra.mxu0 0.0
        %1333 = vmatprep.subr.mxu0 0.0
        %1334 = vmatpush2.xpose.msra.mxu0 0.0
        %1335 = vmatprep.subr.mxu0 0.0
        %1336 = vmatpush2.xpose.msra.mxu0 0.0
        %1337 = vmatprep.subr.mxu0 0.0
        %1338 = vmatpush2.xpose.msra.mxu0 0.0
        %1339 = vmatprep.subr.mxu0 0.0
        %1340 = vmatpush2.xpose.msra.mxu0 0.0
        %1341 = vmatprep.subr.mxu0 0.0
        %1342 = vmatpush2.xpose.msra.mxu0 0.0
        %1343 = vmatprep.subr.mxu0 0.0
        %1344 = vmatpush2.xpose.msra.mxu0 0.0
        %1345 = vmatprep.subr.mxu0 0.0
        %1346 = vmatpush2.xpose.msra.mxu0 0.0
        %1347 = vmatprep.subr.mxu0 0.0
        %1348 = vmatpush2.xpose.msra.mxu0 0.0
        %1349 = vmatprep.subr.mxu0 0.0
        %1350 = vmatpush2.xpose.msra.mxu0 0.0
        %1351 = vmatprep.subr.mxu0 0.0
        %1352 = vmatpush2.xpose.msra.mxu0 0.0
        %1353 = vmatprep.subr.mxu0 0.0
        %1354 = vmatpush2.xpose.msra.mxu0 0.0
        %1355 = vmatprep.subr.mxu0 0.0
        %1356 = vmatpush2.xpose.msra.mxu0 0.0
        %1357 = vmatprep.subr.mxu0 0.0
        %1358 = vmatpush2.xpose.msra.mxu0 0.0
        %1359 = vmatprep.subr.mxu0 0.0
        %1360 = vmatpush2.xpose.msra.mxu0 0.0
        %1361 = vmatprep.subr.mxu0 0.0
        %1362 = vmatpush2.xpose.msra.mxu0 0.0
        %1363 = vmatprep.mubr.f32.mxu0 0.0
        %1364 = vmatmul.mubr.f32.gmra.mxu0 %v1295
        %v1365 = vpop.f32.mrf.mxu0
        %v1366 = vadd.f32 0.0, %v1365
        %v1367 = vpop.f32.mrf.mxu0
        %1368 = vdwg.mxu0
        %v1369 = vsel %vm455, 1, 0
        %vm1370 = vcmp.eq.s32.totalorder %v1369, 1
        %v1371 = vsel %vm1370, %v530, -1e+30
        %v1372 = vsel %vm1370, %v606, -1e+30
        %v1373 = vsel %vm1370, %v682, -1e+30
        %v1374 = vsel %vm1370, %v758, -1e+30
        %v1375 = vsel %vm1370, %v834, -1e+30
        %v1376 = vsel %vm1370, %v910, -1e+30
        %v1377 = vsel %vm1370, %v986, -1e+30
        %v1378 = vsel %vm1370, %v1062, -1e+30
        %v1379 = vsel %vm1370, %v1138, -1e+30
        %v1380 = vsel %vm1370, %v1214, -1e+30
        %v1381 = vsel %vm1370, %v1290, -1e+30
        %v1382 = vsel %vm1370, %v1366, -1e+30
        %v1383 = vsel %vm444, %v1371, -inf
        %1384 = vmax.xlane.f32.xlu0 %v1383
        %v1385 = vpop.xlane.xlu0 %1384
        %v1386 = vsel %vm444, %v1372, -inf
        %1387 = vmax.xlane.f32.xlu0 %v1386
        %v1388 = vpop.xlane.xlu0 %1387
        %v1389 = vsel %vm444, %v1373, -inf
        %1390 = vmax.xlane.f32.xlu0 %v1389
        %v1391 = vpop.xlane.xlu0 %1390
        %v1392 = vsel %vm444, %v1374, -inf
        %1393 = vmax.xlane.f32.xlu0 %v1392
        %v1394 = vpop.xlane.xlu0 %1393
        %v1395 = vsel %vm444, %v1375, -inf
        %1396 = vmax.xlane.f32.xlu0 %v1395
        %v1397 = vpop.xlane.xlu0 %1396
        %v1398 = vsel %vm444, %v1376, -inf
        %1399 = vmax.xlane.f32.xlu0 %v1398
        %v1400 = vpop.xlane.xlu0 %1399
        %v1401 = vsel %vm444, %v1377, -inf
        %1402 = vmax.xlane.f32.xlu0 %v1401
        %v1403 = vpop.xlane.xlu0 %1402
        %v1404 = vsel %vm444, %v1378, -inf
        %1405 = vmax.xlane.f32.xlu0 %v1404
        %v1406 = vpop.xlane.xlu0 %1405
        %v1407 = vsel %vm444, %v1379, -inf
        %1408 = vmax.xlane.f32.xlu0 %v1407
        %v1409 = vpop.xlane.xlu0 %1408
        %v1410 = vsel %vm444, %v1380, -inf
        %1411 = vmax.xlane.f32.xlu0 %v1410
        %v1412 = vpop.xlane.xlu0 %1411
        %v1413 = vsel %vm444, %v1381, -inf
        %1414 = vmax.xlane.f32.xlu0 %v1413
        %v1415 = vpop.xlane.xlu0 %1414
        %v1416 = vsel %vm444, %v1382, -inf
        %1417 = vmax.xlane.f32.xlu0 %v1416
        %v1418 = vpop.xlane.xlu0 %1417
        %v1419 = vsub.f32 %v1371, %v1385
        %v1420 = vsub.f32 %v1372, %v1388
        %v1421 = vsub.f32 %v1373, %v1391
        %v1422 = vsub.f32 %v1374, %v1394
        %v1423 = vsub.f32 %v1375, %v1397
        %v1424 = vsub.f32 %v1376, %v1400
        %v1425 = vsub.f32 %v1377, %v1403
        %v1426 = vsub.f32 %v1378, %v1406
        %v1427 = vsub.f32 %v1379, %v1409
        %v1428 = vsub.f32 %v1380, %v1412
        %v1429 = vsub.f32 %v1381, %v1415
        %v1430 = vsub.f32 %v1382, %v1418
        %v1431 = vmul.f32 %v1419, 1.442695
        %v1432 = vpow.pop %v1431
        %v1433 = vmul.f32 %v1420, 1.442695
        %v1434 = vpow.pop %v1433
        %v1435 = vmul.f32 %v1421, 1.442695
        %v1436 = vpow.pop %v1435
        %v1437 = vmul.f32 %v1422, 1.442695
        %v1438 = vpow.pop %v1437
        %v1439 = vmul.f32 %v1423, 1.442695
        %v1440 = vpow.pop %v1439
        %v1441 = vmul.f32 %v1424, 1.442695
        %v1442 = vpow.pop %v1441
        %v1443 = vmul.f32 %v1425, 1.442695
        %v1444 = vpow.pop %v1443
        %v1445 = vmul.f32 %v1426, 1.442695
        %v1446 = vpow.pop %v1445
        %v1447 = vmul.f32 %v1427, 1.442695
        %v1448 = vpow.pop %v1447
        %v1449 = vmul.f32 %v1428, 1.442695
        %v1450 = vpow.pop %v1449
        %v1451 = vmul.f32 %v1429, 1.442695
        %v1452 = vpow.pop %v1451
        %v1453 = vmul.f32 %v1430, 1.442695
        %v1454 = vpow.pop %v1453
        %v1455 = vsel %vm444, %v1432, 0.0
        %1456 = vadd.xlane.f32.xlu0 %v1455
        %v1457 = vpop.xlane.xlu0 %1456
        %v1458 = vsel %vm444, %v1434, 0.0
        %1459 = vadd.xlane.f32.xlu0 %v1458
        %v1460 = vpop.xlane.xlu0 %1459
        %v1461 = vsel %vm444, %v1436, 0.0
        %1462 = vadd.xlane.f32.xlu0 %v1461
        %v1463 = vpop.xlane.xlu0 %1462
        %v1464 = vsel %vm444, %v1438, 0.0
        %1465 = vadd.xlane.f32.xlu0 %v1464
        %v1466 = vpop.xlane.xlu0 %1465
        %v1467 = vsel %vm444, %v1440, 0.0
        %1468 = vadd.xlane.f32.xlu0 %v1467
        %v1469 = vpop.xlane.xlu0 %1468
        %v1470 = vsel %vm444, %v1442, 0.0
        %1471 = vadd.xlane.f32.xlu0 %v1470
        %v1472 = vpop.xlane.xlu0 %1471
        %v1473 = vsel %vm444, %v1444, 0.0
        %1474 = vadd.xlane.f32.xlu0 %v1473
        %v1475 = vpop.xlane.xlu0 %1474
        %v1476 = vsel %vm444, %v1446, 0.0
        %1477 = vadd.xlane.f32.xlu0 %v1476
        %v1478 = vpop.xlane.xlu0 %1477
        %v1479 = vsel %vm444, %v1448, 0.0
        %1480 = vadd.xlane.f32.xlu0 %v1479
        %v1481 = vpop.xlane.xlu0 %1480
        %v1482 = vsel %vm444, %v1450, 0.0
        %1483 = vadd.xlane.f32.xlu0 %v1482
        %v1484 = vpop.xlane.xlu0 %1483
        %v1485 = vsel %vm444, %v1452, 0.0
        %1486 = vadd.xlane.f32.xlu0 %v1485
        %v1487 = vpop.xlane.xlu0 %1486
        %v1488 = vsel %vm444, %v1454, 0.0
        %1489 = vadd.xlane.f32.xlu0 %v1488
        %v1490 = vpop.xlane.xlu0 %1489
        %v1491 = vrcp.pop %v1457
        %v1492 = vrcp.pop %v1460
        %v1493 = vrcp.pop %v1463
        %v1494 = vrcp.pop %v1466
        %v1495 = vrcp.pop %v1469
        %v1496 = vrcp.pop %v1472
        %v1497 = vrcp.pop %v1475
        %v1498 = vrcp.pop %v1478
        %v1499 = vrcp.pop %v1481
        %v1500 = vrcp.pop %v1484
        %v1501 = vrcp.pop %v1487
        %v1502 = vrcp.pop %v1490
        %v1503 = vmul.f32 %v1432, %v1491
        %v1504 = vmul.f32 %v1434, %v1492
        %v1505 = vmul.f32 %v1436, %v1493
        %v1506 = vmul.f32 %v1438, %v1494
        %v1507 = vmul.f32 %v1440, %v1495
        %v1508 = vmul.f32 %v1442, %v1496
        %v1509 = vmul.f32 %v1444, %v1497
        %v1510 = vmul.f32 %v1446, %v1498
        %v1511 = vmul.f32 %v1448, %v1499
        %v1512 = vmul.f32 %v1450, %v1500
        %v1513 = vmul.f32 %v1452, %v1501
        %v1514 = vmul.f32 %v1454, %v1502
        %1515 = vrot.lane.b32.xlu0 %v410, 108
        %v1516 = vpop.permute.xlu0 %1515
        %v1519 = vsel %vm444, %v1503, 0
        %1521 = vmatprep.subr.mxu0 0.0
        %1522 = vmatpush1.msra.mxu0 0.0
        %1523 = vmatprep.subr.mxu0 0.0
        %1524 = vmatpush1.msra.mxu0 0.0
        %1525 = vmatprep.subr.mxu0 0.0
        %1526 = vmatpush1.msra.mxu0 0.0
        %1527 = vmatprep.subr.mxu0 0.0
        %1528 = vmatpush1.msra.mxu0 0.0
        %1529 = vmatprep.subr.mxu0 0.0
        %1530 = vmatpush1.msra.mxu0 0.0
        %1531 = vmatprep.subr.mxu0 0.0
        %1532 = vmatpush1.msra.mxu0 0.0
        %1533 = vmatprep.subr.mxu0 0.0
        %1534 = vmatpush1.msra.mxu0 0.0
        %1535 = vmatprep.subr.mxu0 0.0
        %1536 = vmatpush1.msra.mxu0 0.0
        %1537 = vmatprep.subr.mxu0 0.0
        %1538 = vmatpush1.msra.mxu0 0.0
        %1539 = vmatprep.subr.mxu0 0.0
        %1540 = vmatpush1.msra.mxu0 0.0
        %1541 = vmatprep.subr.mxu0 0.0
        %1542 = vmatpush1.msra.mxu0 0.0
        %1543 = vmatprep.subr.mxu0 0.0
        %1544 = vmatpush1.msra.mxu0 0.0
        %1545 = vmatprep.subr.mxu0 0.0
        %1546 = vmatpush1.msra.mxu0 0.0
        %1547 = vmatprep.subr.mxu0 0.0
        %1548 = vmatpush1.msra.mxu0 0.0
        %1549 = vmatprep.subr.mxu0 0.0
        %1550 = vmatpush1.msra.mxu0 0.0
        %1551 = vmatprep.subr.mxu0 0.0
        %1552 = vmatpush1.msra.mxu0 %v1516
        %1553 = vmatprep.subr.mxu0 0.0
        %1554 = vmatpush2.msra.mxu0 0.0
        %1555 = vmatprep.subr.mxu0 0.0
        %1556 = vmatpush2.msra.mxu0 0.0
        %1557 = vmatprep.subr.mxu0 0.0
        %1558 = vmatpush2.msra.mxu0 0.0
        %1559 = vmatprep.subr.mxu0 0.0
        %1560 = vmatpush2.msra.mxu0 0.0
        %1561 = vmatprep.subr.mxu0 0.0
        %1562 = vmatpush2.msra.mxu0 0.0
        %1563 = vmatprep.subr.mxu0 0.0
        %1564 = vmatpush2.msra.mxu0 0.0
        %1565 = vmatprep.subr.mxu0 0.0
        %1566 = vmatpush2.msra.mxu0 0.0
        %1567 = vmatprep.subr.mxu0 0.0
        %1568 = vmatpush2.msra.mxu0 0.0
        %1569 = vmatprep.subr.mxu0 0.0
        %1570 = vmatpush2.msra.mxu0 0.0
        %1571 = vmatprep.subr.mxu0 0.0
        %1572 = vmatpush2.msra.mxu0 0.0
        %1573 = vmatprep.subr.mxu0 0.0
        %1574 = vmatpush2.msra.mxu0 0.0
        %1575 = vmatprep.subr.mxu0 0.0
        %1576 = vmatpush2.msra.mxu0 0.0
        %1577 = vmatprep.subr.mxu0 0.0
        %1578 = vmatpush2.msra.mxu0 0.0
        %1579 = vmatprep.subr.mxu0 0.0
        %1580 = vmatpush2.msra.mxu0 0.0
        %1581 = vmatprep.subr.mxu0 0.0
        %1582 = vmatpush2.msra.mxu0 0.0
        %1583 = vmatprep.subr.mxu0 0.0
        %1584 = vmatpush2.msra.mxu0 0.0
        %1585 = vmatprep.mubr.f32.mxu0 0.0
        %1586 = vmatmul.mubr.f32.gmra.mxu0 %v1519
        %v1587 = vpop.f32.mrf.mxu0
        %v1588 = vadd.f32 0.0, %v1587
        %v1589 = vpop.f32.mrf.mxu0
        %1590 = vdwg.mxu0
        %1591 = vrot.lane.b32.xlu0 %v416, 108
        %v1592 = vpop.permute.xlu0 %1591
        %v1595 = vsel %vm444, %v1504, 0
        %1597 = vmatprep.subr.mxu0 0.0
        %1598 = vmatpush1.msra.mxu0 0.0
        %1599 = vmatprep.subr.mxu0 0.0
        %1600 = vmatpush1.msra.mxu0 0.0
        %1601 = vmatprep.subr.mxu0 0.0
        %1602 = vmatpush1.msra.mxu0 0.0
        %1603 = vmatprep.subr.mxu0 0.0
        %1604 = vmatpush1.msra.mxu0 0.0
        %1605 = vmatprep.subr.mxu0 0.0
        %1606 = vmatpush1.msra.mxu0 0.0
        %1607 = vmatprep.subr.mxu0 0.0
        %1608 = vmatpush1.msra.mxu0 0.0
        %1609 = vmatprep.subr.mxu0 0.0
        %1610 = vmatpush1.msra.mxu0 0.0
        %1611 = vmatprep.subr.mxu0 0.0
        %1612 = vmatpush1.msra.mxu0 0.0
        %1613 = vmatprep.subr.mxu0 0.0
        %1614 = vmatpush1.msra.mxu0 0.0
        %1615 = vmatprep.subr.mxu0 0.0
        %1616 = vmatpush1.msra.mxu0 0.0
        %1617 = vmatprep.subr.mxu0 0.0
        %1618 = vmatpush1.msra.mxu0 0.0
        %1619 = vmatprep.subr.mxu0 0.0
        %1620 = vmatpush1.msra.mxu0 0.0
        %1621 = vmatprep.subr.mxu0 0.0
        %1622 = vmatpush1.msra.mxu0 0.0
        %1623 = vmatprep.subr.mxu0 0.0
        %1624 = vmatpush1.msra.mxu0 0.0
        %1625 = vmatprep.subr.mxu0 0.0
        %1626 = vmatpush1.msra.mxu0 0.0
        %1627 = vmatprep.subr.mxu0 0.0
        %1628 = vmatpush1.msra.mxu0 %v1592
        %1629 = vmatprep.subr.mxu0 0.0
        %1630 = vmatpush2.msra.mxu0 0.0
        %1631 = vmatprep.subr.mxu0 0.0
        %1632 = vmatpush2.msra.mxu0 0.0
        %1633 = vmatprep.subr.mxu0 0.0
        %1634 = vmatpush2.msra.mxu0 0.0
        %1635 = vmatprep.subr.mxu0 0.0
        %1636 = vmatpush2.msra.mxu0 0.0
        %1637 = vmatprep.subr.mxu0 0.0
        %1638 = vmatpush2.msra.mxu0 0.0
        %1639 = vmatprep.subr.mxu0 0.0
        %1640 = vmatpush2.msra.mxu0 0.0
        %1641 = vmatprep.subr.mxu0 0.0
        %1642 = vmatpush2.msra.mxu0 0.0
        %1643 = vmatprep.subr.mxu0 0.0
        %1644 = vmatpush2.msra.mxu0 0.0
        %1645 = vmatprep.subr.mxu0 0.0
        %1646 = vmatpush2.msra.mxu0 0.0
        %1647 = vmatprep.subr.mxu0 0.0
        %1648 = vmatpush2.msra.mxu0 0.0
        %1649 = vmatprep.subr.mxu0 0.0
        %1650 = vmatpush2.msra.mxu0 0.0
        %1651 = vmatprep.subr.mxu0 0.0
        %1652 = vmatpush2.msra.mxu0 0.0
        %1653 = vmatprep.subr.mxu0 0.0
        %1654 = vmatpush2.msra.mxu0 0.0
        %1655 = vmatprep.subr.mxu0 0.0
        %1656 = vmatpush2.msra.mxu0 0.0
        %1657 = vmatprep.subr.mxu0 0.0
        %1658 = vmatpush2.msra.mxu0 0.0
        %1659 = vmatprep.subr.mxu0 0.0
        %1660 = vmatpush2.msra.mxu0 0.0
        %1661 = vmatprep.mubr.f32.mxu0 0.0
        %1662 = vmatmul.mubr.f32.gmra.mxu0 %v1595
        %v1663 = vpop.f32.mrf.mxu0
        %v1664 = vadd.f32 0.0, %v1663
        %v1665 = vpop.f32.mrf.mxu0
        %1666 = vdwg.mxu0
        %1667 = vrot.lane.b32.xlu0 %v423, 108
        %v1668 = vpop.permute.xlu0 %1667
        %v1671 = vsel %vm444, %v1505, 0
        %1673 = vmatprep.subr.mxu0 0.0
        %1674 = vmatpush1.msra.mxu0 0.0
        %1675 = vmatprep.subr.mxu0 0.0
        %1676 = vmatpush1.msra.mxu0 0.0
        %1677 = vmatprep.subr.mxu0 0.0
        %1678 = vmatpush1.msra.mxu0 0.0
        %1679 = vmatprep.subr.mxu0 0.0
        %1680 = vmatpush1.msra.mxu0 0.0
        %1681 = vmatprep.subr.mxu0 0.0
        %1682 = vmatpush1.msra.mxu0 0.0
        %1683 = vmatprep.subr.mxu0 0.0
        %1684 = vmatpush1.msra.mxu0 0.0
        %1685 = vmatprep.subr.mxu0 0.0
        %1686 = vmatpush1.msra.mxu0 0.0
        %1687 = vmatprep.subr.mxu0 0.0
        %1688 = vmatpush1.msra.mxu0 0.0
        %1689 = vmatprep.subr.mxu0 0.0
        %1690 = vmatpush1.msra.mxu0 0.0
        %1691 = vmatprep.subr.mxu0 0.0
        %1692 = vmatpush1.msra.mxu0 0.0
        %1693 = vmatprep.subr.mxu0 0.0
        %1694 = vmatpush1.msra.mxu0 0.0
        %1695 = vmatprep.subr.mxu0 0.0
        %1696 = vmatpush1.msra.mxu0 0.0
        %1697 = vmatprep.subr.mxu0 0.0
        %1698 = vmatpush1.msra.mxu0 0.0
        %1699 = vmatprep.subr.mxu0 0.0
        %1700 = vmatpush1.msra.mxu0 0.0
        %1701 = vmatprep.subr.mxu0 0.0
        %1702 = vmatpush1.msra.mxu0 0.0
        %1703 = vmatprep.subr.mxu0 0.0
        %1704 = vmatpush1.msra.mxu0 %v1668
        %1705 = vmatprep.subr.mxu0 0.0
        %1706 = vmatpush2.msra.mxu0 0.0
        %1707 = vmatprep.subr.mxu0 0.0
        %1708 = vmatpush2.msra.mxu0 0.0
        %1709 = vmatprep.subr.mxu0 0.0
        %1710 = vmatpush2.msra.mxu0 0.0
        %1711 = vmatprep.subr.mxu0 0.0
        %1712 = vmatpush2.msra.mxu0 0.0
        %1713 = vmatprep.subr.mxu0 0.0
        %1714 = vmatpush2.msra.mxu0 0.0
        %1715 = vmatprep.subr.mxu0 0.0
        %1716 = vmatpush2.msra.mxu0 0.0
        %1717 = vmatprep.subr.mxu0 0.0
        %1718 = vmatpush2.msra.mxu0 0.0
        %1719 = vmatprep.subr.mxu0 0.0
        %1720 = vmatpush2.msra.mxu0 0.0
        %1721 = vmatprep.subr.mxu0 0.0
        %1722 = vmatpush2.msra.mxu0 0.0
        %1723 = vmatprep.subr.mxu0 0.0
        %1724 = vmatpush2.msra.mxu0 0.0
        %1725 = vmatprep.subr.mxu0 0.0
        %1726 = vmatpush2.msra.mxu0 0.0
        %1727 = vmatprep.subr.mxu0 0.0
        %1728 = vmatpush2.msra.mxu0 0.0
        %1729 = vmatprep.subr.mxu0 0.0
        %1730 = vmatpush2.msra.mxu0 0.0
        %1731 = vmatprep.subr.mxu0 0.0
        %1732 = vmatpush2.msra.mxu0 0.0
        %1733 = vmatprep.subr.mxu0 0.0
        %1734 = vmatpush2.msra.mxu0 0.0
        %1735 = vmatprep.subr.mxu0 0.0
        %1736 = vmatpush2.msra.mxu0 0.0
        %1737 = vmatprep.mubr.f32.mxu0 0.0
        %1738 = vmatmul.mubr.f32.gmra.mxu0 %v1671
        %v1739 = vpop.f32.mrf.mxu0
        %v1740 = vadd.f32 0.0, %v1739
        %v1741 = vpop.f32.mrf.mxu0
        %1742 = vdwg.mxu0
        %1743 = vrot.lane.b32.xlu0 %v425, 108
        %v1744 = vpop.permute.xlu0 %1743
        %v1747 = vsel %vm444, %v1506, 0
        %1749 = vmatprep.subr.mxu0 0.0
        %1750 = vmatpush1.msra.mxu0 0.0
        %1751 = vmatprep.subr.mxu0 0.0
        %1752 = vmatpush1.msra.mxu0 0.0
        %1753 = vmatprep.subr.mxu0 0.0
        %1754 = vmatpush1.msra.mxu0 0.0
        %1755 = vmatprep.subr.mxu0 0.0
        %1756 = vmatpush1.msra.mxu0 0.0
        %1757 = vmatprep.subr.mxu0 0.0
        %1758 = vmatpush1.msra.mxu0 0.0
        %1759 = vmatprep.subr.mxu0 0.0
        %1760 = vmatpush1.msra.mxu0 0.0
        %1761 = vmatprep.subr.mxu0 0.0
        %1762 = vmatpush1.msra.mxu0 0.0
        %1763 = vmatprep.subr.mxu0 0.0
        %1764 = vmatpush1.msra.mxu0 0.0
        %1765 = vmatprep.subr.mxu0 0.0
        %1766 = vmatpush1.msra.mxu0 0.0
        %1767 = vmatprep.subr.mxu0 0.0
        %1768 = vmatpush1.msra.mxu0 0.0
        %1769 = vmatprep.subr.mxu0 0.0
        %1770 = vmatpush1.msra.mxu0 0.0
        %1771 = vmatprep.subr.mxu0 0.0
        %1772 = vmatpush1.msra.mxu0 0.0
        %1773 = vmatprep.subr.mxu0 0.0
        %1774 = vmatpush1.msra.mxu0 0.0
        %1775 = vmatprep.subr.mxu0 0.0
        %1776 = vmatpush1.msra.mxu0 0.0
        %1777 = vmatprep.subr.mxu0 0.0
        %1778 = vmatpush1.msra.mxu0 0.0
        %1779 = vmatprep.subr.mxu0 0.0
        %1780 = vmatpush1.msra.mxu0 %v1744
        %1781 = vmatprep.subr.mxu0 0.0
        %1782 = vmatpush2.msra.mxu0 0.0
        %1783 = vmatprep.subr.mxu0 0.0
        %1784 = vmatpush2.msra.mxu0 0.0
        %1785 = vmatprep.subr.mxu0 0.0
        %1786 = vmatpush2.msra.mxu0 0.0
        %1787 = vmatprep.subr.mxu0 0.0
        %1788 = vmatpush2.msra.mxu0 0.0
        %1789 = vmatprep.subr.mxu0 0.0
        %1790 = vmatpush2.msra.mxu0 0.0
        %1791 = vmatprep.subr.mxu0 0.0
        %1792 = vmatpush2.msra.mxu0 0.0
        %1793 = vmatprep.subr.mxu0 0.0
        %1794 = vmatpush2.msra.mxu0 0.0
        %1795 = vmatprep.subr.mxu0 0.0
        %1796 = vmatpush2.msra.mxu0 0.0
        %1797 = vmatprep.subr.mxu0 0.0
        %1798 = vmatpush2.msra.mxu0 0.0
        %1799 = vmatprep.subr.mxu0 0.0
        %1800 = vmatpush2.msra.mxu0 0.0
        %1801 = vmatprep.subr.mxu0 0.0
        %1802 = vmatpush2.msra.mxu0 0.0
        %1803 = vmatprep.subr.mxu0 0.0
        %1804 = vmatpush2.msra.mxu0 0.0
        %1805 = vmatprep.subr.mxu0 0.0
        %1806 = vmatpush2.msra.mxu0 0.0
        %1807 = vmatprep.subr.mxu0 0.0
        %1808 = vmatpush2.msra.mxu0 0.0
        %1809 = vmatprep.subr.mxu0 0.0
        %1810 = vmatpush2.msra.mxu0 0.0
        %1811 = vmatprep.subr.mxu0 0.0
        %1812 = vmatpush2.msra.mxu0 0.0
        %1813 = vmatprep.mubr.f32.mxu0 0.0
        %1814 = vmatmul.mubr.f32.gmra.mxu0 %v1747
        %v1815 = vpop.f32.mrf.mxu0
        %v1816 = vadd.f32 0.0, %v1815
        %v1817 = vpop.f32.mrf.mxu0
        %1818 = vdwg.mxu0
        %1819 = vrot.lane.b32.xlu0 %v427, 108
        %v1820 = vpop.permute.xlu0 %1819
        %v1823 = vsel %vm444, %v1507, 0
        %1825 = vmatprep.subr.mxu0 0.0
        %1826 = vmatpush1.msra.mxu0 0.0
        %1827 = vmatprep.subr.mxu0 0.0
        %1828 = vmatpush1.msra.mxu0 0.0
        %1829 = vmatprep.subr.mxu0 0.0
        %1830 = vmatpush1.msra.mxu0 0.0
        %1831 = vmatprep.subr.mxu0 0.0
        %1832 = vmatpush1.msra.mxu0 0.0
        %1833 = vmatprep.subr.mxu0 0.0
        %1834 = vmatpush1.msra.mxu0 0.0
        %1835 = vmatprep.subr.mxu0 0.0
        %1836 = vmatpush1.msra.mxu0 0.0
        %1837 = vmatprep.subr.mxu0 0.0
        %1838 = vmatpush1.msra.mxu0 0.0
        %1839 = vmatprep.subr.mxu0 0.0
        %1840 = vmatpush1.msra.mxu0 0.0
        %1841 = vmatprep.subr.mxu0 0.0
        %1842 = vmatpush1.msra.mxu0 0.0
        %1843 = vmatprep.subr.mxu0 0.0
        %1844 = vmatpush1.msra.mxu0 0.0
        %1845 = vmatprep.subr.mxu0 0.0
        %1846 = vmatpush1.msra.mxu0 0.0
        %1847 = vmatprep.subr.mxu0 0.0
        %1848 = vmatpush1.msra.mxu0 0.0
        %1849 = vmatprep.subr.mxu0 0.0
        %1850 = vmatpush1.msra.mxu0 0.0
        %1851 = vmatprep.subr.mxu0 0.0
        %1852 = vmatpush1.msra.mxu0 0.0
        %1853 = vmatprep.subr.mxu0 0.0
        %1854 = vmatpush1.msra.mxu0 0.0
        %1855 = vmatprep.subr.mxu0 0.0
        %1856 = vmatpush1.msra.mxu0 %v1820
        %1857 = vmatprep.subr.mxu0 0.0
        %1858 = vmatpush2.msra.mxu0 0.0
        %1859 = vmatprep.subr.mxu0 0.0
        %1860 = vmatpush2.msra.mxu0 0.0
        %1861 = vmatprep.subr.mxu0 0.0
        %1862 = vmatpush2.msra.mxu0 0.0
        %1863 = vmatprep.subr.mxu0 0.0
        %1864 = vmatpush2.msra.mxu0 0.0
        %1865 = vmatprep.subr.mxu0 0.0
        %1866 = vmatpush2.msra.mxu0 0.0
        %1867 = vmatprep.subr.mxu0 0.0
        %1868 = vmatpush2.msra.mxu0 0.0
        %1869 = vmatprep.subr.mxu0 0.0
        %1870 = vmatpush2.msra.mxu0 0.0
        %1871 = vmatprep.subr.mxu0 0.0
        %1872 = vmatpush2.msra.mxu0 0.0
        %1873 = vmatprep.subr.mxu0 0.0
        %1874 = vmatpush2.msra.mxu0 0.0
        %1875 = vmatprep.subr.mxu0 0.0
        %1876 = vmatpush2.msra.mxu0 0.0
        %1877 = vmatprep.subr.mxu0 0.0
        %1878 = vmatpush2.msra.mxu0 0.0
        %1879 = vmatprep.subr.mxu0 0.0
        %1880 = vmatpush2.msra.mxu0 0.0
        %1881 = vmatprep.subr.mxu0 0.0
        %1882 = vmatpush2.msra.mxu0 0.0
        %1883 = vmatprep.subr.mxu0 0.0
        %1884 = vmatpush2.msra.mxu0 0.0
        %1885 = vmatprep.subr.mxu0 0.0
        %1886 = vmatpush2.msra.mxu0 0.0
        %1887 = vmatprep.subr.mxu0 0.0
        %1888 = vmatpush2.msra.mxu0 0.0
        %1889 = vmatprep.mubr.f32.mxu0 0.0
        %1890 = vmatmul.mubr.f32.gmra.mxu0 %v1823
        %v1891 = vpop.f32.mrf.mxu0
        %v1892 = vadd.f32 0.0, %v1891
        %v1893 = vpop.f32.mrf.mxu0
        %1894 = vdwg.mxu0
        %1895 = vrot.lane.b32.xlu0 %v429, 108
        %v1896 = vpop.permute.xlu0 %1895
        %v1899 = vsel %vm444, %v1508, 0
        %1901 = vmatprep.subr.mxu0 0.0
        %1902 = vmatpush1.msra.mxu0 0.0
        %1903 = vmatprep.subr.mxu0 0.0
        %1904 = vmatpush1.msra.mxu0 0.0
        %1905 = vmatprep.subr.mxu0 0.0
        %1906 = vmatpush1.msra.mxu0 0.0
        %1907 = vmatprep.subr.mxu0 0.0
        %1908 = vmatpush1.msra.mxu0 0.0
        %1909 = vmatprep.subr.mxu0 0.0
        %1910 = vmatpush1.msra.mxu0 0.0
        %1911 = vmatprep.subr.mxu0 0.0
        %1912 = vmatpush1.msra.mxu0 0.0
        %1913 = vmatprep.subr.mxu0 0.0
        %1914 = vmatpush1.msra.mxu0 0.0
        %1915 = vmatprep.subr.mxu0 0.0
        %1916 = vmatpush1.msra.mxu0 0.0
        %1917 = vmatprep.subr.mxu0 0.0
        %1918 = vmatpush1.msra.mxu0 0.0
        %1919 = vmatprep.subr.mxu0 0.0
        %1920 = vmatpush1.msra.mxu0 0.0
        %1921 = vmatprep.subr.mxu0 0.0
        %1922 = vmatpush1.msra.mxu0 0.0
        %1923 = vmatprep.subr.mxu0 0.0
        %1924 = vmatpush1.msra.mxu0 0.0
        %1925 = vmatprep.subr.mxu0 0.0
        %1926 = vmatpush1.msra.mxu0 0.0
        %1927 = vmatprep.subr.mxu0 0.0
        %1928 = vmatpush1.msra.mxu0 0.0
        %1929 = vmatprep.subr.mxu0 0.0
        %1930 = vmatpush1.msra.mxu0 0.0
        %1931 = vmatprep.subr.mxu0 0.0
        %1932 = vmatpush1.msra.mxu0 %v1896
        %1933 = vmatprep.subr.mxu0 0.0
        %1934 = vmatpush2.msra.mxu0 0.0
        %1935 = vmatprep.subr.mxu0 0.0
        %1936 = vmatpush2.msra.mxu0 0.0
        %1937 = vmatprep.subr.mxu0 0.0
        %1938 = vmatpush2.msra.mxu0 0.0
        %1939 = vmatprep.subr.mxu0 0.0
        %1940 = vmatpush2.msra.mxu0 0.0
        %1941 = vmatprep.subr.mxu0 0.0
        %1942 = vmatpush2.msra.mxu0 0.0
        %1943 = vmatprep.subr.mxu0 0.0
        %1944 = vmatpush2.msra.mxu0 0.0
        %1945 = vmatprep.subr.mxu0 0.0
        %1946 = vmatpush2.msra.mxu0 0.0
        %1947 = vmatprep.subr.mxu0 0.0
        %1948 = vmatpush2.msra.mxu0 0.0
        %1949 = vmatprep.subr.mxu0 0.0
        %1950 = vmatpush2.msra.mxu0 0.0
        %1951 = vmatprep.subr.mxu0 0.0
        %1952 = vmatpush2.msra.mxu0 0.0
        %1953 = vmatprep.subr.mxu0 0.0
        %1954 = vmatpush2.msra.mxu0 0.0
        %1955 = vmatprep.subr.mxu0 0.0
        %1956 = vmatpush2.msra.mxu0 0.0
        %1957 = vmatprep.subr.mxu0 0.0
        %1958 = vmatpush2.msra.mxu0 0.0
        %1959 = vmatprep.subr.mxu0 0.0
        %1960 = vmatpush2.msra.mxu0 0.0
        %1961 = vmatprep.subr.mxu0 0.0
        %1962 = vmatpush2.msra.mxu0 0.0
        %1963 = vmatprep.subr.mxu0 0.0
        %1964 = vmatpush2.msra.mxu0 0.0
        %1965 = vmatprep.mubr.f32.mxu0 0.0
        %1966 = vmatmul.mubr.f32.gmra.mxu0 %v1899
        %v1967 = vpop.f32.mrf.mxu0
        %v1968 = vadd.f32 0.0, %v1967
        %v1969 = vpop.f32.mrf.mxu0
        %1970 = vdwg.mxu0
        %1971 = vrot.lane.b32.xlu0 %v431, 108
        %v1972 = vpop.permute.xlu0 %1971
        %v1975 = vsel %vm444, %v1509, 0
        %1977 = vmatprep.subr.mxu0 0.0
        %1978 = vmatpush1.msra.mxu0 0.0
        %1979 = vmatprep.subr.mxu0 0.0
        %1980 = vmatpush1.msra.mxu0 0.0
        %1981 = vmatprep.subr.mxu0 0.0
        %1982 = vmatpush1.msra.mxu0 0.0
        %1983 = vmatprep.subr.mxu0 0.0
        %1984 = vmatpush1.msra.mxu0 0.0
        %1985 = vmatprep.subr.mxu0 0.0
        %1986 = vmatpush1.msra.mxu0 0.0
        %1987 = vmatprep.subr.mxu0 0.0
        %1988 = vmatpush1.msra.mxu0 0.0
        %1989 = vmatprep.subr.mxu0 0.0
        %1990 = vmatpush1.msra.mxu0 0.0
        %1991 = vmatprep.subr.mxu0 0.0
        %1992 = vmatpush1.msra.mxu0 0.0
        %1993 = vmatprep.subr.mxu0 0.0
        %1994 = vmatpush1.msra.mxu0 0.0
        %1995 = vmatprep.subr.mxu0 0.0
        %1996 = vmatpush1.msra.mxu0 0.0
        %1997 = vmatprep.subr.mxu0 0.0
        %1998 = vmatpush1.msra.mxu0 0.0
        %1999 = vmatprep.subr.mxu0 0.0
        %2000 = vmatpush1.msra.mxu0 0.0
        %2001 = vmatprep.subr.mxu0 0.0
        %2002 = vmatpush1.msra.mxu0 0.0
        %2003 = vmatprep.subr.mxu0 0.0
        %2004 = vmatpush1.msra.mxu0 0.0
        %2005 = vmatprep.subr.mxu0 0.0
        %2006 = vmatpush1.msra.mxu0 0.0
        %2007 = vmatprep.subr.mxu0 0.0
        %2008 = vmatpush1.msra.mxu0 %v1972
        %2009 = vmatprep.subr.mxu0 0.0
        %2010 = vmatpush2.msra.mxu0 0.0
        %2011 = vmatprep.subr.mxu0 0.0
        %2012 = vmatpush2.msra.mxu0 0.0
        %2013 = vmatprep.subr.mxu0 0.0
        %2014 = vmatpush2.msra.mxu0 0.0
        %2015 = vmatprep.subr.mxu0 0.0
        %2016 = vmatpush2.msra.mxu0 0.0
        %2017 = vmatprep.subr.mxu0 0.0
        %2018 = vmatpush2.msra.mxu0 0.0
        %2019 = vmatprep.subr.mxu0 0.0
        %2020 = vmatpush2.msra.mxu0 0.0
        %2021 = vmatprep.subr.mxu0 0.0
        %2022 = vmatpush2.msra.mxu0 0.0
        %2023 = vmatprep.subr.mxu0 0.0
        %2024 = vmatpush2.msra.mxu0 0.0
        %2025 = vmatprep.subr.mxu0 0.0
        %2026 = vmatpush2.msra.mxu0 0.0
        %2027 = vmatprep.subr.mxu0 0.0
        %2028 = vmatpush2.msra.mxu0 0.0
        %2029 = vmatprep.subr.mxu0 0.0
        %2030 = vmatpush2.msra.mxu0 0.0
        %2031 = vmatprep.subr.mxu0 0.0
        %2032 = vmatpush2.msra.mxu0 0.0
        %2033 = vmatprep.subr.mxu0 0.0
        %2034 = vmatpush2.msra.mxu0 0.0
        %2035 = vmatprep.subr.mxu0 0.0
        %2036 = vmatpush2.msra.mxu0 0.0
        %2037 = vmatprep.subr.mxu0 0.0
        %2038 = vmatpush2.msra.mxu0 0.0
        %2039 = vmatprep.subr.mxu0 0.0
        %2040 = vmatpush2.msra.mxu0 0.0
        %2041 = vmatprep.mubr.f32.mxu0 0.0
        %2042 = vmatmul.mubr.f32.gmra.mxu0 %v1975
        %v2043 = vpop.f32.mrf.mxu0
        %v2044 = vadd.f32 0.0, %v2043
        %v2045 = vpop.f32.mrf.mxu0
        %2046 = vdwg.mxu0
        %2047 = vrot.lane.b32.xlu0 %v433, 108
        %v2048 = vpop.permute.xlu0 %2047
        %v2051 = vsel %vm444, %v1510, 0
        %2053 = vmatprep.subr.mxu0 0.0
        %2054 = vmatpush1.msra.mxu0 0.0
        %2055 = vmatprep.subr.mxu0 0.0
        %2056 = vmatpush1.msra.mxu0 0.0
        %2057 = vmatprep.subr.mxu0 0.0
        %2058 = vmatpush1.msra.mxu0 0.0
        %2059 = vmatprep.subr.mxu0 0.0
        %2060 = vmatpush1.msra.mxu0 0.0
        %2061 = vmatprep.subr.mxu0 0.0
        %2062 = vmatpush1.msra.mxu0 0.0
        %2063 = vmatprep.subr.mxu0 0.0
        %2064 = vmatpush1.msra.mxu0 0.0
        %2065 = vmatprep.subr.mxu0 0.0
        %2066 = vmatpush1.msra.mxu0 0.0
        %2067 = vmatprep.subr.mxu0 0.0
        %2068 = vmatpush1.msra.mxu0 0.0
        %2069 = vmatprep.subr.mxu0 0.0
        %2070 = vmatpush1.msra.mxu0 0.0
        %2071 = vmatprep.subr.mxu0 0.0
        %2072 = vmatpush1.msra.mxu0 0.0
        %2073 = vmatprep.subr.mxu0 0.0
        %2074 = vmatpush1.msra.mxu0 0.0
        %2075 = vmatprep.subr.mxu0 0.0
        %2076 = vmatpush1.msra.mxu0 0.0
        %2077 = vmatprep.subr.mxu0 0.0
        %2078 = vmatpush1.msra.mxu0 0.0
        %2079 = vmatprep.subr.mxu0 0.0
        %2080 = vmatpush1.msra.mxu0 0.0
        %2081 = vmatprep.subr.mxu0 0.0
        %2082 = vmatpush1.msra.mxu0 0.0
        %2083 = vmatprep.subr.mxu0 0.0
        %2084 = vmatpush1.msra.mxu0 %v2048
        %2085 = vmatprep.subr.mxu0 0.0
        %2086 = vmatpush2.msra.mxu0 0.0
        %2087 = vmatprep.subr.mxu0 0.0
        %2088 = vmatpush2.msra.mxu0 0.0
        %2089 = vmatprep.subr.mxu0 0.0
        %2090 = vmatpush2.msra.mxu0 0.0
        %2091 = vmatprep.subr.mxu0 0.0
        %2092 = vmatpush2.msra.mxu0 0.0
        %2093 = vmatprep.subr.mxu0 0.0
        %2094 = vmatpush2.msra.mxu0 0.0
        %2095 = vmatprep.subr.mxu0 0.0
        %2096 = vmatpush2.msra.mxu0 0.0
        %2097 = vmatprep.subr.mxu0 0.0
        %2098 = vmatpush2.msra.mxu0 0.0
        %2099 = vmatprep.subr.mxu0 0.0
        %2100 = vmatpush2.msra.mxu0 0.0
        %2101 = vmatprep.subr.mxu0 0.0
        %2102 = vmatpush2.msra.mxu0 0.0
        %2103 = vmatprep.subr.mxu0 0.0
        %2104 = vmatpush2.msra.mxu0 0.0
        %2105 = vmatprep.subr.mxu0 0.0
        %2106 = vmatpush2.msra.mxu0 0.0
        %2107 = vmatprep.subr.mxu0 0.0
        %2108 = vmatpush2.msra.mxu0 0.0
        %2109 = vmatprep.subr.mxu0 0.0
        %2110 = vmatpush2.msra.mxu0 0.0
        %2111 = vmatprep.subr.mxu0 0.0
        %2112 = vmatpush2.msra.mxu0 0.0
        %2113 = vmatprep.subr.mxu0 0.0
        %2114 = vmatpush2.msra.mxu0 0.0
        %2115 = vmatprep.subr.mxu0 0.0
        %2116 = vmatpush2.msra.mxu0 0.0
        %2117 = vmatprep.mubr.f32.mxu0 0.0
        %2118 = vmatmul.mubr.f32.gmra.mxu0 %v2051
        %v2119 = vpop.f32.mrf.mxu0
        %v2120 = vadd.f32 0.0, %v2119
        %v2121 = vpop.f32.mrf.mxu0
        %2122 = vdwg.mxu0
        %2123 = vrot.lane.b32.xlu0 %v445, 108
        %v2124 = vpop.permute.xlu0 %2123
        %v2127 = vsel %vm444, %v1511, 0
        %2129 = vmatprep.subr.mxu0 0.0
        %2130 = vmatpush1.msra.mxu0 0.0
        %2131 = vmatprep.subr.mxu0 0.0
        %2132 = vmatpush1.msra.mxu0 0.0
        %2133 = vmatprep.subr.mxu0 0.0
        %2134 = vmatpush1.msra.mxu0 0.0
        %2135 = vmatprep.subr.mxu0 0.0
        %2136 = vmatpush1.msra.mxu0 0.0
        %2137 = vmatprep.subr.mxu0 0.0
        %2138 = vmatpush1.msra.mxu0 0.0
        %2139 = vmatprep.subr.mxu0 0.0
        %2140 = vmatpush1.msra.mxu0 0.0
        %2141 = vmatprep.subr.mxu0 0.0
        %2142 = vmatpush1.msra.mxu0 0.0
        %2143 = vmatprep.subr.mxu0 0.0
        %2144 = vmatpush1.msra.mxu0 0.0
        %2145 = vmatprep.subr.mxu0 0.0
        %2146 = vmatpush1.msra.mxu0 0.0
        %2147 = vmatprep.subr.mxu0 0.0
        %2148 = vmatpush1.msra.mxu0 0.0
        %2149 = vmatprep.subr.mxu0 0.0
        %2150 = vmatpush1.msra.mxu0 0.0
        %2151 = vmatprep.subr.mxu0 0.0
        %2152 = vmatpush1.msra.mxu0 0.0
        %2153 = vmatprep.subr.mxu0 0.0
        %2154 = vmatpush1.msra.mxu0 0.0
        %2155 = vmatprep.subr.mxu0 0.0
        %2156 = vmatpush1.msra.mxu0 0.0
        %2157 = vmatprep.subr.mxu0 0.0
        %2158 = vmatpush1.msra.mxu0 0.0
        %2159 = vmatprep.subr.mxu0 0.0
        %2160 = vmatpush1.msra.mxu0 %v2124
        %2161 = vmatprep.subr.mxu0 0.0
        %2162 = vmatpush2.msra.mxu0 0.0
        %2163 = vmatprep.subr.mxu0 0.0
        %2164 = vmatpush2.msra.mxu0 0.0
        %2165 = vmatprep.subr.mxu0 0.0
        %2166 = vmatpush2.msra.mxu0 0.0
        %2167 = vmatprep.subr.mxu0 0.0
        %2168 = vmatpush2.msra.mxu0 0.0
        %2169 = vmatprep.subr.mxu0 0.0
        %2170 = vmatpush2.msra.mxu0 0.0
        %2171 = vmatprep.subr.mxu0 0.0
        %2172 = vmatpush2.msra.mxu0 0.0
        %2173 = vmatprep.subr.mxu0 0.0
        %2174 = vmatpush2.msra.mxu0 0.0
        %2175 = vmatprep.subr.mxu0 0.0
        %2176 = vmatpush2.msra.mxu0 0.0
        %2177 = vmatprep.subr.mxu0 0.0
        %2178 = vmatpush2.msra.mxu0 0.0
        %2179 = vmatprep.subr.mxu0 0.0
        %2180 = vmatpush2.msra.mxu0 0.0
        %2181 = vmatprep.subr.mxu0 0.0
        %2182 = vmatpush2.msra.mxu0 0.0
        %2183 = vmatprep.subr.mxu0 0.0
        %2184 = vmatpush2.msra.mxu0 0.0
        %2185 = vmatprep.subr.mxu0 0.0
        %2186 = vmatpush2.msra.mxu0 0.0
        %2187 = vmatprep.subr.mxu0 0.0
        %2188 = vmatpush2.msra.mxu0 0.0
        %2189 = vmatprep.subr.mxu0 0.0
        %2190 = vmatpush2.msra.mxu0 0.0
        %2191 = vmatprep.subr.mxu0 0.0
        %2192 = vmatpush2.msra.mxu0 0.0
        %2193 = vmatprep.mubr.f32.mxu0 0.0
        %2194 = vmatmul.mubr.f32.gmra.mxu0 %v2127
        %v2195 = vpop.f32.mrf.mxu0
        %v2196 = vadd.f32 0.0, %v2195
        %v2197 = vpop.f32.mrf.mxu0
        %2198 = vdwg.mxu0
        %2199 = vrot.lane.b32.xlu0 %v446, 108
        %v2200 = vpop.permute.xlu0 %2199
        %v2203 = vsel %vm444, %v1512, 0
        %2205 = vmatprep.subr.mxu0 0.0
        %2206 = vmatpush1.msra.mxu0 0.0
        %2207 = vmatprep.subr.mxu0 0.0
        %2208 = vmatpush1.msra.mxu0 0.0
        %2209 = vmatprep.subr.mxu0 0.0
        %2210 = vmatpush1.msra.mxu0 0.0
        %2211 = vmatprep.subr.mxu0 0.0
        %2212 = vmatpush1.msra.mxu0 0.0
        %2213 = vmatprep.subr.mxu0 0.0
        %2214 = vmatpush1.msra.mxu0 0.0
        %2215 = vmatprep.subr.mxu0 0.0
        %2216 = vmatpush1.msra.mxu0 0.0
        %2217 = vmatprep.subr.mxu0 0.0
        %2218 = vmatpush1.msra.mxu0 0.0
        %2219 = vmatprep.subr.mxu0 0.0
        %2220 = vmatpush1.msra.mxu0 0.0
        %2221 = vmatprep.subr.mxu0 0.0
        %2222 = vmatpush1.msra.mxu0 0.0
        %2223 = vmatprep.subr.mxu0 0.0
        %2224 = vmatpush1.msra.mxu0 0.0
        %2225 = vmatprep.subr.mxu0 0.0
        %2226 = vmatpush1.msra.mxu0 0.0
        %2227 = vmatprep.subr.mxu0 0.0
        %2228 = vmatpush1.msra.mxu0 0.0
        %2229 = vmatprep.subr.mxu0 0.0
        %2230 = vmatpush1.msra.mxu0 0.0
        %2231 = vmatprep.subr.mxu0 0.0
        %2232 = vmatpush1.msra.mxu0 0.0
        %2233 = vmatprep.subr.mxu0 0.0
        %2234 = vmatpush1.msra.mxu0 0.0
        %2235 = vmatprep.subr.mxu0 0.0
        %2236 = vmatpush1.msra.mxu0 %v2200
        %2237 = vmatprep.subr.mxu0 0.0
        %2238 = vmatpush2.msra.mxu0 0.0
        %2239 = vmatprep.subr.mxu0 0.0
        %2240 = vmatpush2.msra.mxu0 0.0
        %2241 = vmatprep.subr.mxu0 0.0
        %2242 = vmatpush2.msra.mxu0 0.0
        %2243 = vmatprep.subr.mxu0 0.0
        %2244 = vmatpush2.msra.mxu0 0.0
        %2245 = vmatprep.subr.mxu0 0.0
        %2246 = vmatpush2.msra.mxu0 0.0
        %2247 = vmatprep.subr.mxu0 0.0
        %2248 = vmatpush2.msra.mxu0 0.0
        %2249 = vmatprep.subr.mxu0 0.0
        %2250 = vmatpush2.msra.mxu0 0.0
        %2251 = vmatprep.subr.mxu0 0.0
        %2252 = vmatpush2.msra.mxu0 0.0
        %2253 = vmatprep.subr.mxu0 0.0
        %2254 = vmatpush2.msra.mxu0 0.0
        %2255 = vmatprep.subr.mxu0 0.0
        %2256 = vmatpush2.msra.mxu0 0.0
        %2257 = vmatprep.subr.mxu0 0.0
        %2258 = vmatpush2.msra.mxu0 0.0
        %2259 = vmatprep.subr.mxu0 0.0
        %2260 = vmatpush2.msra.mxu0 0.0
        %2261 = vmatprep.subr.mxu0 0.0
        %2262 = vmatpush2.msra.mxu0 0.0
        %2263 = vmatprep.subr.mxu0 0.0
        %2264 = vmatpush2.msra.mxu0 0.0
        %2265 = vmatprep.subr.mxu0 0.0
        %2266 = vmatpush2.msra.mxu0 0.0
        %2267 = vmatprep.subr.mxu0 0.0
        %2268 = vmatpush2.msra.mxu0 0.0
        %2269 = vmatprep.mubr.f32.mxu0 0.0
        %2270 = vmatmul.mubr.f32.gmra.mxu0 %v2203
        %v2271 = vpop.f32.mrf.mxu0
        %v2272 = vadd.f32 0.0, %v2271
        %v2273 = vpop.f32.mrf.mxu0
        %2274 = vdwg.mxu0
        %2275 = vrot.lane.b32.xlu0 %v448, 108
        %v2276 = vpop.permute.xlu0 %2275
        %v2279 = vsel %vm444, %v1513, 0
        %2281 = vmatprep.subr.mxu0 0.0
        %2282 = vmatpush1.msra.mxu0 0.0
        %2283 = vmatprep.subr.mxu0 0.0
        %2284 = vmatpush1.msra.mxu0 0.0
        %2285 = vmatprep.subr.mxu0 0.0
        %2286 = vmatpush1.msra.mxu0 0.0
        %2287 = vmatprep.subr.mxu0 0.0
        %2288 = vmatpush1.msra.mxu0 0.0
        %2289 = vmatprep.subr.mxu0 0.0
        %2290 = vmatpush1.msra.mxu0 0.0
        %2291 = vmatprep.subr.mxu0 0.0
        %2292 = vmatpush1.msra.mxu0 0.0
        %2293 = vmatprep.subr.mxu0 0.0
        %2294 = vmatpush1.msra.mxu0 0.0
        %2295 = vmatprep.subr.mxu0 0.0
        %2296 = vmatpush1.msra.mxu0 0.0
        %2297 = vmatprep.subr.mxu0 0.0
        %2298 = vmatpush1.msra.mxu0 0.0
        %2299 = vmatprep.subr.mxu0 0.0
        %2300 = vmatpush1.msra.mxu0 0.0
        %2301 = vmatprep.subr.mxu0 0.0
        %2302 = vmatpush1.msra.mxu0 0.0
        %2303 = vmatprep.subr.mxu0 0.0
        %2304 = vmatpush1.msra.mxu0 0.0
        %2305 = vmatprep.subr.mxu0 0.0
        %2306 = vmatpush1.msra.mxu0 0.0
        %2307 = vmatprep.subr.mxu0 0.0
        %2308 = vmatpush1.msra.mxu0 0.0
        %2309 = vmatprep.subr.mxu0 0.0
        %2310 = vmatpush1.msra.mxu0 0.0
        %2311 = vmatprep.subr.mxu0 0.0
        %2312 = vmatpush1.msra.mxu0 %v2276
        %2313 = vmatprep.subr.mxu0 0.0
        %2314 = vmatpush2.msra.mxu0 0.0
        %2315 = vmatprep.subr.mxu0 0.0
        %2316 = vmatpush2.msra.mxu0 0.0
        %2317 = vmatprep.subr.mxu0 0.0
        %2318 = vmatpush2.msra.mxu0 0.0
        %2319 = vmatprep.subr.mxu0 0.0
        %2320 = vmatpush2.msra.mxu0 0.0
        %2321 = vmatprep.subr.mxu0 0.0
        %2322 = vmatpush2.msra.mxu0 0.0
        %2323 = vmatprep.subr.mxu0 0.0
        %2324 = vmatpush2.msra.mxu0 0.0
        %2325 = vmatprep.subr.mxu0 0.0
        %2326 = vmatpush2.msra.mxu0 0.0
        %2327 = vmatprep.subr.mxu0 0.0
        %2328 = vmatpush2.msra.mxu0 0.0
        %2329 = vmatprep.subr.mxu0 0.0
        %2330 = vmatpush2.msra.mxu0 0.0
        %2331 = vmatprep.subr.mxu0 0.0
        %2332 = vmatpush2.msra.mxu0 0.0
        %2333 = vmatprep.subr.mxu0 0.0
        %2334 = vmatpush2.msra.mxu0 0.0
        %2335 = vmatprep.subr.mxu0 0.0
        %2336 = vmatpush2.msra.mxu0 0.0
        %2337 = vmatprep.subr.mxu0 0.0
        %2338 = vmatpush2.msra.mxu0 0.0
        %2339 = vmatprep.subr.mxu0 0.0
        %2340 = vmatpush2.msra.mxu0 0.0
        %2341 = vmatprep.subr.mxu0 0.0
        %2342 = vmatpush2.msra.mxu0 0.0
        %2343 = vmatprep.subr.mxu0 0.0
        %2344 = vmatpush2.msra.mxu0 0.0
        %2345 = vmatprep.mubr.f32.mxu0 0.0
        %2346 = vmatmul.mubr.f32.gmra.mxu0 %v2279
        %v2347 = vpop.f32.mrf.mxu0
        %v2348 = vadd.f32 0.0, %v2347
        %v2349 = vpop.f32.mrf.mxu0
        %2350 = vdwg.mxu0
        %2351 = vrot.lane.b32.xlu0 %v450, 108
        %v2352 = vpop.permute.xlu0 %2351
        %v2355 = vsel %vm444, %v1514, 0
        %2357 = vmatprep.subr.mxu0 0.0
        %2358 = vmatpush1.msra.mxu0 0.0
        %2359 = vmatprep.subr.mxu0 0.0
        %2360 = vmatpush1.msra.mxu0 0.0
        %2361 = vmatprep.subr.mxu0 0.0
        %2362 = vmatpush1.msra.mxu0 0.0
        %2363 = vmatprep.subr.mxu0 0.0
        %2364 = vmatpush1.msra.mxu0 0.0
        %2365 = vmatprep.subr.mxu0 0.0
        %2366 = vmatpush1.msra.mxu0 0.0
        %2367 = vmatprep.subr.mxu0 0.0
        %2368 = vmatpush1.msra.mxu0 0.0
        %2369 = vmatprep.subr.mxu0 0.0
        %2370 = vmatpush1.msra.mxu0 0.0
        %2371 = vmatprep.subr.mxu0 0.0
        %2372 = vmatpush1.msra.mxu0 0.0
        %2373 = vmatprep.subr.mxu0 0.0
        %2374 = vmatpush1.msra.mxu0 0.0
        %2375 = vmatprep.subr.mxu0 0.0
        %2376 = vmatpush1.msra.mxu0 0.0
        %2377 = vmatprep.subr.mxu0 0.0
        %2378 = vmatpush1.msra.mxu0 0.0
        %2379 = vmatprep.subr.mxu0 0.0
        %2380 = vmatpush1.msra.mxu0 0.0
        %2381 = vmatprep.subr.mxu0 0.0
        %2382 = vmatpush1.msra.mxu0 0.0
        %2383 = vmatprep.subr.mxu0 0.0
        %2384 = vmatpush1.msra.mxu0 0.0
        %2385 = vmatprep.subr.mxu0 0.0
        %2386 = vmatpush1.msra.mxu0 0.0
        %2387 = vmatprep.subr.mxu0 0.0
        %2388 = vmatpush1.msra.mxu0 %v2352
        %2389 = vmatprep.subr.mxu0 0.0
        %2390 = vmatpush2.msra.mxu0 0.0
        %2391 = vmatprep.subr.mxu0 0.0
        %2392 = vmatpush2.msra.mxu0 0.0
        %2393 = vmatprep.subr.mxu0 0.0
        %2394 = vmatpush2.msra.mxu0 0.0
        %2395 = vmatprep.subr.mxu0 0.0
        %2396 = vmatpush2.msra.mxu0 0.0
        %2397 = vmatprep.subr.mxu0 0.0
        %2398 = vmatpush2.msra.mxu0 0.0
        %2399 = vmatprep.subr.mxu0 0.0
        %2400 = vmatpush2.msra.mxu0 0.0
        %2401 = vmatprep.subr.mxu0 0.0
        %2402 = vmatpush2.msra.mxu0 0.0
        %2403 = vmatprep.subr.mxu0 0.0
        %2404 = vmatpush2.msra.mxu0 0.0
        %2405 = vmatprep.subr.mxu0 0.0
        %2406 = vmatpush2.msra.mxu0 0.0
        %2407 = vmatprep.subr.mxu0 0.0
        %2408 = vmatpush2.msra.mxu0 0.0
        %2409 = vmatprep.subr.mxu0 0.0
        %2410 = vmatpush2.msra.mxu0 0.0
        %2411 = vmatprep.subr.mxu0 0.0
        %2412 = vmatpush2.msra.mxu0 0.0
        %2413 = vmatprep.subr.mxu0 0.0
        %2414 = vmatpush2.msra.mxu0 0.0
        %2415 = vmatprep.subr.mxu0 0.0
        %2416 = vmatpush2.msra.mxu0 0.0
        %2417 = vmatprep.subr.mxu0 0.0
        %2418 = vmatpush2.msra.mxu0 0.0
        %2419 = vmatprep.subr.mxu0 0.0
        %2420 = vmatpush2.msra.mxu0 0.0
        %2421 = vmatprep.mubr.f32.mxu0 0.0
        %2422 = vmatmul.mubr.f32.gmra.mxu0 %v2355
        %v2423 = vpop.f32.mrf.mxu0
        %v2424 = vadd.f32 0.0, %v2423
        %v2425 = vpop.f32.mrf.mxu0
        %2426 = vdwg.mxu0
        %v2427 = vld [vmem:[%s3] sm:$0xff]
        %v2428 = vld [vmem:[%s3 + $0x8] sm:$0x3]
        %v2429 = vld [vmem:[%s3 + $0x10] sm:$0xff]
        %v2430 = vld [vmem:[%s3 + $0x18] sm:$0x3]
        %v2431 = vld [vmem:[%s3 + $0x20] sm:$0xff]
        %v2432 = vld [vmem:[%s3 + $0x28] sm:$0x3]
        %v2433 = vld [vmem:[%s3 + $0x30] sm:$0xff]
        %v2434 = vld [vmem:[%s3 + $0x38] sm:$0x3]
        %v2435 = vld [vmem:[%s3 + $0x40] sm:$0xff]
        %v2436 = vld [vmem:[%s3 + $0x48] sm:$0x3]
        %v2437 = vld [vmem:[%s3 + $0x50] sm:$0xff]
        %v2438 = vld [vmem:[%s3 + $0x58] sm:$0x3]
        %v2440 = vsel %vm458, %v1588, 0
        %v2443 = vsel %vm458, %v1664, 0
        %vm2445 = vcmask 1041408
        %v2447 = vsel %vm2445, %v2428, 0
        %2449 = vmatprep.subr.mxu0 0.0
        %2450 = vmatpush1.msra.mxu0 0.0
        %2451 = vmatprep.subr.mxu0 0.0
        %2452 = vmatpush1.msra.mxu0 0.0
        %2453 = vmatprep.subr.mxu0 0.0
        %2454 = vmatpush1.msra.mxu0 0.0
        %2455 = vmatprep.subr.mxu0 0.0
        %2456 = vmatpush1.msra.mxu0 0.0
        %2457 = vmatprep.subr.mxu0 0.0
        %2458 = vmatpush1.msra.mxu0 0.0
        %2459 = vmatprep.subr.mxu0 0.0
        %2460 = vmatpush1.msra.mxu0 0.0
        %2461 = vmatprep.subr.mxu0 0.0
        %2462 = vmatpush1.msra.mxu0 0.0
        %2463 = vmatprep.subr.mxu0 0.0
        %2464 = vmatpush1.msra.mxu0 0.0
        %2465 = vmatprep.subr.mxu0 0.0
        %2466 = vmatpush1.msra.mxu0 0.0
        %2467 = vmatprep.subr.mxu0 0.0
        %2468 = vmatpush1.msra.mxu0 0.0
        %2469 = vmatprep.subr.mxu0 0.0
        %2470 = vmatpush1.msra.mxu0 0.0
        %2471 = vmatprep.subr.mxu0 0.0
        %2472 = vmatpush1.msra.mxu0 0.0
        %2473 = vmatprep.subr.mxu0 0.0
        %2474 = vmatpush1.msra.mxu0 0.0
        %2475 = vmatprep.subr.mxu0 0.0
        %2476 = vmatpush1.msra.mxu0 0.0
        %2477 = vmatprep.subr.mxu0 0.0
        %2478 = vmatpush1.msra.mxu0 %v2447
        %2479 = vmatprep.subr.mxu0 0.0
        %2480 = vmatpush1.msra.mxu0 %v2427
        %2481 = vmatprep.subr.mxu0 0.0
        %2482 = vmatpush2.msra.mxu0 0.0
        %2483 = vmatprep.subr.mxu0 0.0
        %2484 = vmatpush2.msra.mxu0 0.0
        %2485 = vmatprep.subr.mxu0 0.0
        %2486 = vmatpush2.msra.mxu0 0.0
        %2487 = vmatprep.subr.mxu0 0.0
        %2488 = vmatpush2.msra.mxu0 0.0
        %2489 = vmatprep.subr.mxu0 0.0
        %2490 = vmatpush2.msra.mxu0 0.0
        %2491 = vmatprep.subr.mxu0 0.0
        %2492 = vmatpush2.msra.mxu0 0.0
        %2493 = vmatprep.subr.mxu0 0.0
        %2494 = vmatpush2.msra.mxu0 0.0
        %2495 = vmatprep.subr.mxu0 0.0
        %2496 = vmatpush2.msra.mxu0 0.0
        %2497 = vmatprep.subr.mxu0 0.0
        %2498 = vmatpush2.msra.mxu0 0.0
        %2499 = vmatprep.subr.mxu0 0.0
        %2500 = vmatpush2.msra.mxu0 0.0
        %2501 = vmatprep.subr.mxu0 0.0
        %2502 = vmatpush2.msra.mxu0 0.0
        %2503 = vmatprep.subr.mxu0 0.0
        %2504 = vmatpush2.msra.mxu0 0.0
        %2505 = vmatprep.subr.mxu0 0.0
        %2506 = vmatpush2.msra.mxu0 0.0
        %2507 = vmatprep.subr.mxu0 0.0
        %2508 = vmatpush2.msra.mxu0 0.0
        %2509 = vmatprep.subr.mxu0 0.0
        %2510 = vmatpush2.msra.mxu0 0.0
        %2511 = vmatprep.subr.mxu0 0.0
        %2512 = vmatpush2.msra.mxu0 0.0
        %2513 = vmatprep.mubr.f32.mxu0 0.0
        %2514 = vmatmul.mubr.f32.gmra.mxu0 %v2440
        %v2515 = vpop.f32.mrf.mxu0
        %v2516 = vadd.f32 0.0, %v2515
        %v2517 = vpop.f32.mrf.mxu0
        %2518 = vmatprep.mubr.f32.mxu0 0.0
        %2519 = vmatmul.mubr.f32.gmra.mxu0 %v2443
        %v2520 = vpop.f32.mrf.mxu0
        %v2521 = vadd.f32 0.0, %v2520
        %v2522 = vpop.f32.mrf.mxu0
        %2523 = vdwg.mxu0
        %v2525 = vsel %vm458, %v1740, 0
        %v2528 = vsel %vm458, %v1816, 0
        %v2531 = vsel %vm2445, %v2430, 0
        %2533 = vmatprep.subr.mxu0 0.0
        %2534 = vmatpush1.msra.mxu0 0.0
        %2535 = vmatprep.subr.mxu0 0.0
        %2536 = vmatpush1.msra.mxu0 0.0
        %2537 = vmatprep.subr.mxu0 0.0
        %2538 = vmatpush1.msra.mxu0 0.0
        %2539 = vmatprep.subr.mxu0 0.0
        %2540 = vmatpush1.msra.mxu0 0.0
        %2541 = vmatprep.subr.mxu0 0.0
        %2542 = vmatpush1.msra.mxu0 0.0
        %2543 = vmatprep.subr.mxu0 0.0
        %2544 = vmatpush1.msra.mxu0 0.0
        %2545 = vmatprep.subr.mxu0 0.0
        %2546 = vmatpush1.msra.mxu0 0.0
        %2547 = vmatprep.subr.mxu0 0.0
        %2548 = vmatpush1.msra.mxu0 0.0
        %2549 = vmatprep.subr.mxu0 0.0
        %2550 = vmatpush1.msra.mxu0 0.0
        %2551 = vmatprep.subr.mxu0 0.0
        %2552 = vmatpush1.msra.mxu0 0.0
        %2553 = vmatprep.subr.mxu0 0.0
        %2554 = vmatpush1.msra.mxu0 0.0
        %2555 = vmatprep.subr.mxu0 0.0
        %2556 = vmatpush1.msra.mxu0 0.0
        %2557 = vmatprep.subr.mxu0 0.0
        %2558 = vmatpush1.msra.mxu0 0.0
        %2559 = vmatprep.subr.mxu0 0.0
        %2560 = vmatpush1.msra.mxu0 0.0
        %2561 = vmatprep.subr.mxu0 0.0
        %2562 = vmatpush1.msra.mxu0 %v2531
        %2563 = vmatprep.subr.mxu0 0.0
        %2564 = vmatpush1.msra.mxu0 %v2429
        %2565 = vmatprep.subr.mxu0 0.0
        %2566 = vmatpush2.msra.mxu0 0.0
        %2567 = vmatprep.subr.mxu0 0.0
        %2568 = vmatpush2.msra.mxu0 0.0
        %2569 = vmatprep.subr.mxu0 0.0
        %2570 = vmatpush2.msra.mxu0 0.0
        %2571 = vmatprep.subr.mxu0 0.0
        %2572 = vmatpush2.msra.mxu0 0.0
        %2573 = vmatprep.subr.mxu0 0.0
        %2574 = vmatpush2.msra.mxu0 0.0
        %2575 = vmatprep.subr.mxu0 0.0
        %2576 = vmatpush2.msra.mxu0 0.0
        %2577 = vmatprep.subr.mxu0 0.0
        %2578 = vmatpush2.msra.mxu0 0.0
        %2579 = vmatprep.subr.mxu0 0.0
        %2580 = vmatpush2.msra.mxu0 0.0
        %2581 = vmatprep.subr.mxu0 0.0
        %2582 = vmatpush2.msra.mxu0 0.0
        %2583 = vmatprep.subr.mxu0 0.0
        %2584 = vmatpush2.msra.mxu0 0.0
        %2585 = vmatprep.subr.mxu0 0.0
        %2586 = vmatpush2.msra.mxu0 0.0
        %2587 = vmatprep.subr.mxu0 0.0
        %2588 = vmatpush2.msra.mxu0 0.0
        %2589 = vmatprep.subr.mxu0 0.0
        %2590 = vmatpush2.msra.mxu0 0.0
        %2591 = vmatprep.subr.mxu0 0.0
        %2592 = vmatpush2.msra.mxu0 0.0
        %2593 = vmatprep.subr.mxu0 0.0
        %2594 = vmatpush2.msra.mxu0 0.0
        %2595 = vmatprep.subr.mxu0 0.0
        %2596 = vmatpush2.msra.mxu0 0.0
        %2597 = vmatprep.mubr.f32.mxu0 0.0
        %2598 = vmatmul.mubr.f32.gmra.mxu0 %v2525
        %v2599 = vpop.f32.mrf.mxu0
        %v2600 = vadd.f32 0.0, %v2599
        %v2601 = vpop.f32.mrf.mxu0
        %2602 = vmatprep.mubr.f32.mxu0 0.0
        %2603 = vmatmul.mubr.f32.gmra.mxu0 %v2528
        %v2604 = vpop.f32.mrf.mxu0
        %v2605 = vadd.f32 0.0, %v2604
        %v2606 = vpop.f32.mrf.mxu0
        %2607 = vdwg.mxu0
        %v2609 = vsel %vm458, %v1892, 0
        %v2612 = vsel %vm458, %v1968, 0
        %v2615 = vsel %vm2445, %v2432, 0
        %2617 = vmatprep.subr.mxu0 0.0
        %2618 = vmatpush1.msra.mxu0 0.0
        %2619 = vmatprep.subr.mxu0 0.0
        %2620 = vmatpush1.msra.mxu0 0.0
        %2621 = vmatprep.subr.mxu0 0.0
        %2622 = vmatpush1.msra.mxu0 0.0
        %2623 = vmatprep.subr.mxu0 0.0
        %2624 = vmatpush1.msra.mxu0 0.0
        %2625 = vmatprep.subr.mxu0 0.0
        %2626 = vmatpush1.msra.mxu0 0.0
        %2627 = vmatprep.subr.mxu0 0.0
        %2628 = vmatpush1.msra.mxu0 0.0
        %2629 = vmatprep.subr.mxu0 0.0
        %2630 = vmatpush1.msra.mxu0 0.0
        %2631 = vmatprep.subr.mxu0 0.0
        %2632 = vmatpush1.msra.mxu0 0.0
        %2633 = vmatprep.subr.mxu0 0.0
        %2634 = vmatpush1.msra.mxu0 0.0
        %2635 = vmatprep.subr.mxu0 0.0
        %2636 = vmatpush1.msra.mxu0 0.0
        %2637 = vmatprep.subr.mxu0 0.0
        %2638 = vmatpush1.msra.mxu0 0.0
        %2639 = vmatprep.subr.mxu0 0.0
        %2640 = vmatpush1.msra.mxu0 0.0
        %2641 = vmatprep.subr.mxu0 0.0
        %2642 = vmatpush1.msra.mxu0 0.0
        %2643 = vmatprep.subr.mxu0 0.0
        %2644 = vmatpush1.msra.mxu0 0.0
        %2645 = vmatprep.subr.mxu0 0.0
        %2646 = vmatpush1.msra.mxu0 %v2615
        %2647 = vmatprep.subr.mxu0 0.0
        %2648 = vmatpush1.msra.mxu0 %v2431
        %2649 = vmatprep.subr.mxu0 0.0
        %2650 = vmatpush2.msra.mxu0 0.0
        %2651 = vmatprep.subr.mxu0 0.0
        %2652 = vmatpush2.msra.mxu0 0.0
        %2653 = vmatprep.subr.mxu0 0.0
        %2654 = vmatpush2.msra.mxu0 0.0
        %2655 = vmatprep.subr.mxu0 0.0
        %2656 = vmatpush2.msra.mxu0 0.0
        %2657 = vmatprep.subr.mxu0 0.0
        %2658 = vmatpush2.msra.mxu0 0.0
        %2659 = vmatprep.subr.mxu0 0.0
        %2660 = vmatpush2.msra.mxu0 0.0
        %2661 = vmatprep.subr.mxu0 0.0
        %2662 = vmatpush2.msra.mxu0 0.0
        %2663 = vmatprep.subr.mxu0 0.0
        %2664 = vmatpush2.msra.mxu0 0.0
        %2665 = vmatprep.subr.mxu0 0.0
        %2666 = vmatpush2.msra.mxu0 0.0
        %2667 = vmatprep.subr.mxu0 0.0
        %2668 = vmatpush2.msra.mxu0 0.0
        %2669 = vmatprep.subr.mxu0 0.0
        %2670 = vmatpush2.msra.mxu0 0.0
        %2671 = vmatprep.subr.mxu0 0.0
        %2672 = vmatpush2.msra.mxu0 0.0
        %2673 = vmatprep.subr.mxu0 0.0
        %2674 = vmatpush2.msra.mxu0 0.0
        %2675 = vmatprep.subr.mxu0 0.0
        %2676 = vmatpush2.msra.mxu0 0.0
        %2677 = vmatprep.subr.mxu0 0.0
        %2678 = vmatpush2.msra.mxu0 0.0
        %2679 = vmatprep.subr.mxu0 0.0
        %2680 = vmatpush2.msra.mxu0 0.0
        %2681 = vmatprep.mubr.f32.mxu0 0.0
        %2682 = vmatmul.mubr.f32.gmra.mxu0 %v2609
        %v2683 = vpop.f32.mrf.mxu0
        %v2684 = vadd.f32 0.0, %v2683
        %v2685 = vpop.f32.mrf.mxu0
        %2686 = vmatprep.mubr.f32.mxu0 0.0
        %2687 = vmatmul.mubr.f32.gmra.mxu0 %v2612
        %v2688 = vpop.f32.mrf.mxu0
        %v2689 = vadd.f32 0.0, %v2688
        %v2690 = vpop.f32.mrf.mxu0
        %2691 = vdwg.mxu0
        %v2693 = vsel %vm458, %v2044, 0
        %v2696 = vsel %vm458, %v2120, 0
        %v2699 = vsel %vm2445, %v2434, 0
        %2701 = vmatprep.subr.mxu0 0.0
        %2702 = vmatpush1.msra.mxu0 0.0
        %2703 = vmatprep.subr.mxu0 0.0
        %2704 = vmatpush1.msra.mxu0 0.0
        %2705 = vmatprep.subr.mxu0 0.0
        %2706 = vmatpush1.msra.mxu0 0.0
        %2707 = vmatprep.subr.mxu0 0.0
        %2708 = vmatpush1.msra.mxu0 0.0
        %2709 = vmatprep.subr.mxu0 0.0
        %2710 = vmatpush1.msra.mxu0 0.0
        %2711 = vmatprep.subr.mxu0 0.0
        %2712 = vmatpush1.msra.mxu0 0.0
        %2713 = vmatprep.subr.mxu0 0.0
        %2714 = vmatpush1.msra.mxu0 0.0
        %2715 = vmatprep.subr.mxu0 0.0
        %2716 = vmatpush1.msra.mxu0 0.0
        %2717 = vmatprep.subr.mxu0 0.0
        %2718 = vmatpush1.msra.mxu0 0.0
        %2719 = vmatprep.subr.mxu0 0.0
        %2720 = vmatpush1.msra.mxu0 0.0
        %2721 = vmatprep.subr.mxu0 0.0
        %2722 = vmatpush1.msra.mxu0 0.0
        %2723 = vmatprep.subr.mxu0 0.0
        %2724 = vmatpush1.msra.mxu0 0.0
        %2725 = vmatprep.subr.mxu0 0.0
        %2726 = vmatpush1.msra.mxu0 0.0
        %2727 = vmatprep.subr.mxu0 0.0
        %2728 = vmatpush1.msra.mxu0 0.0
        %2729 = vmatprep.subr.mxu0 0.0
        %2730 = vmatpush1.msra.mxu0 %v2699
        %2731 = vmatprep.subr.mxu0 0.0
        %2732 = vmatpush1.msra.mxu0 %v2433
        %2733 = vmatprep.subr.mxu0 0.0
        %2734 = vmatpush2.msra.mxu0 0.0
        %2735 = vmatprep.subr.mxu0 0.0
        %2736 = vmatpush2.msra.mxu0 0.0
        %2737 = vmatprep.subr.mxu0 0.0
        %2738 = vmatpush2.msra.mxu0 0.0
        %2739 = vmatprep.subr.mxu0 0.0
        %2740 = vmatpush2.msra.mxu0 0.0
        %2741 = vmatprep.subr.mxu0 0.0
        %2742 = vmatpush2.msra.mxu0 0.0
        %2743 = vmatprep.subr.mxu0 0.0
        %2744 = vmatpush2.msra.mxu0 0.0
        %2745 = vmatprep.subr.mxu0 0.0
        %2746 = vmatpush2.msra.mxu0 0.0
        %2747 = vmatprep.subr.mxu0 0.0
        %2748 = vmatpush2.msra.mxu0 0.0
        %2749 = vmatprep.subr.mxu0 0.0
        %2750 = vmatpush2.msra.mxu0 0.0
        %2751 = vmatprep.subr.mxu0 0.0
        %2752 = vmatpush2.msra.mxu0 0.0
        %2753 = vmatprep.subr.mxu0 0.0
        %2754 = vmatpush2.msra.mxu0 0.0
        %2755 = vmatprep.subr.mxu0 0.0
        %2756 = vmatpush2.msra.mxu0 0.0
        %2757 = vmatprep.subr.mxu0 0.0
        %2758 = vmatpush2.msra.mxu0 0.0
        %2759 = vmatprep.subr.mxu0 0.0
        %2760 = vmatpush2.msra.mxu0 0.0
        %2761 = vmatprep.subr.mxu0 0.0
        %2762 = vmatpush2.msra.mxu0 0.0
        %2763 = vmatprep.subr.mxu0 0.0
        %2764 = vmatpush2.msra.mxu0 0.0
        %2765 = vmatprep.mubr.f32.mxu0 0.0
        %2766 = vmatmul.mubr.f32.gmra.mxu0 %v2693
        %v2767 = vpop.f32.mrf.mxu0
        %v2768 = vadd.f32 0.0, %v2767
        %v2769 = vpop.f32.mrf.mxu0
        %2770 = vmatprep.mubr.f32.mxu0 0.0
        %2771 = vmatmul.mubr.f32.gmra.mxu0 %v2696
        %v2772 = vpop.f32.mrf.mxu0
        %v2773 = vadd.f32 0.0, %v2772
        %v2774 = vpop.f32.mrf.mxu0
        %2775 = vdwg.mxu0
        %v2777 = vsel %vm458, %v2196, 0
        %v2780 = vsel %vm458, %v2272, 0
        %v2783 = vsel %vm2445, %v2436, 0
        %2785 = vmatprep.subr.mxu0 0.0
        %2786 = vmatpush1.msra.mxu0 0.0
        %2787 = vmatprep.subr.mxu0 0.0
        %2788 = vmatpush1.msra.mxu0 0.0
        %2789 = vmatprep.subr.mxu0 0.0
        %2790 = vmatpush1.msra.mxu0 0.0
        %2791 = vmatprep.subr.mxu0 0.0
        %2792 = vmatpush1.msra.mxu0 0.0
        %2793 = vmatprep.subr.mxu0 0.0
        %2794 = vmatpush1.msra.mxu0 0.0
        %2795 = vmatprep.subr.mxu0 0.0
        %2796 = vmatpush1.msra.mxu0 0.0
        %2797 = vmatprep.subr.mxu0 0.0
        %2798 = vmatpush1.msra.mxu0 0.0
        %2799 = vmatprep.subr.mxu0 0.0
        %2800 = vmatpush1.msra.mxu0 0.0
        %2801 = vmatprep.subr.mxu0 0.0
        %2802 = vmatpush1.msra.mxu0 0.0
        %2803 = vmatprep.subr.mxu0 0.0
        %2804 = vmatpush1.msra.mxu0 0.0
        %2805 = vmatprep.subr.mxu0 0.0
        %2806 = vmatpush1.msra.mxu0 0.0
        %2807 = vmatprep.subr.mxu0 0.0
        %2808 = vmatpush1.msra.mxu0 0.0
        %2809 = vmatprep.subr.mxu0 0.0
        %2810 = vmatpush1.msra.mxu0 0.0
        %2811 = vmatprep.subr.mxu0 0.0
        %2812 = vmatpush1.msra.mxu0 0.0
        %2813 = vmatprep.subr.mxu0 0.0
        %2814 = vmatpush1.msra.mxu0 %v2783
        %2815 = vmatprep.subr.mxu0 0.0
        %2816 = vmatpush1.msra.mxu0 %v2435
        %2817 = vmatprep.subr.mxu0 0.0
        %2818 = vmatpush2.msra.mxu0 0.0
        %2819 = vmatprep.subr.mxu0 0.0
        %2820 = vmatpush2.msra.mxu0 0.0
        %2821 = vmatprep.subr.mxu0 0.0
        %2822 = vmatpush2.msra.mxu0 0.0
        %2823 = vmatprep.subr.mxu0 0.0
        %2824 = vmatpush2.msra.mxu0 0.0
        %2825 = vmatprep.subr.mxu0 0.0
        %2826 = vmatpush2.msra.mxu0 0.0
        %2827 = vmatprep.subr.mxu0 0.0
        %2828 = vmatpush2.msra.mxu0 0.0
        %2829 = vmatprep.subr.mxu0 0.0
        %2830 = vmatpush2.msra.mxu0 0.0
        %2831 = vmatprep.subr.mxu0 0.0
        %2832 = vmatpush2.msra.mxu0 0.0
        %2833 = vmatprep.subr.mxu0 0.0
        %2834 = vmatpush2.msra.mxu0 0.0
        %2835 = vmatprep.subr.mxu0 0.0
        %2836 = vmatpush2.msra.mxu0 0.0
        %2837 = vmatprep.subr.mxu0 0.0
        %2838 = vmatpush2.msra.mxu0 0.0
        %2839 = vmatprep.subr.mxu0 0.0
        %2840 = vmatpush2.msra.mxu0 0.0
        %2841 = vmatprep.subr.mxu0 0.0
        %2842 = vmatpush2.msra.mxu0 0.0
        %2843 = vmatprep.subr.mxu0 0.0
        %2844 = vmatpush2.msra.mxu0 0.0
        %2845 = vmatprep.subr.mxu0 0.0
        %2846 = vmatpush2.msra.mxu0 0.0
        %2847 = vmatprep.subr.mxu0 0.0
        %2848 = vmatpush2.msra.mxu0 0.0
        %2849 = vmatprep.mubr.f32.mxu0 0.0
        %2850 = vmatmul.mubr.f32.gmra.mxu0 %v2777
        %v2851 = vpop.f32.mrf.mxu0
        %v2852 = vadd.f32 0.0, %v2851
        %v2853 = vpop.f32.mrf.mxu0
        %2854 = vmatprep.mubr.f32.mxu0 0.0
        %2855 = vmatmul.mubr.f32.gmra.mxu0 %v2780
        %v2856 = vpop.f32.mrf.mxu0
        %v2857 = vadd.f32 0.0, %v2856
        %v2858 = vpop.f32.mrf.mxu0
        %2859 = vdwg.mxu0
        %v2861 = vsel %vm458, %v2348, 0
        %v2864 = vsel %vm458, %v2424, 0
        %v2867 = vsel %vm2445, %v2438, 0
        %2869 = vmatprep.subr.mxu0 0.0
        %2870 = vmatpush1.msra.mxu0 0.0
        %2871 = vmatprep.subr.mxu0 0.0
        %2872 = vmatpush1.msra.mxu0 0.0
        %2873 = vmatprep.subr.mxu0 0.0
        %2874 = vmatpush1.msra.mxu0 0.0
        %2875 = vmatprep.subr.mxu0 0.0
        %2876 = vmatpush1.msra.mxu0 0.0
        %2877 = vmatprep.subr.mxu0 0.0
        %2878 = vmatpush1.msra.mxu0 0.0
        %2879 = vmatprep.subr.mxu0 0.0
        %2880 = vmatpush1.msra.mxu0 0.0
        %2881 = vmatprep.subr.mxu0 0.0
        %2882 = vmatpush1.msra.mxu0 0.0
        %2883 = vmatprep.subr.mxu0 0.0
        %2884 = vmatpush1.msra.mxu0 0.0
        %2885 = vmatprep.subr.mxu0 0.0
        %2886 = vmatpush1.msra.mxu0 0.0
        %2887 = vmatprep.subr.mxu0 0.0
        %2888 = vmatpush1.msra.mxu0 0.0
        %2889 = vmatprep.subr.mxu0 0.0
        %2890 = vmatpush1.msra.mxu0 0.0
        %2891 = vmatprep.subr.mxu0 0.0
        %2892 = vmatpush1.msra.mxu0 0.0
        %2893 = vmatprep.subr.mxu0 0.0
        %2894 = vmatpush1.msra.mxu0 0.0
        %2895 = vmatprep.subr.mxu0 0.0
        %2896 = vmatpush1.msra.mxu0 0.0
        %2897 = vmatprep.subr.mxu0 0.0
        %2898 = vmatpush1.msra.mxu0 %v2867
        %2899 = vmatprep.subr.mxu0 0.0
        %2900 = vmatpush1.msra.mxu0 %v2437
        %2901 = vmatprep.subr.mxu0 0.0
        %2902 = vmatpush2.msra.mxu0 0.0
        %2903 = vmatprep.subr.mxu0 0.0
        %2904 = vmatpush2.msra.mxu0 0.0
        %2905 = vmatprep.subr.mxu0 0.0
        %2906 = vmatpush2.msra.mxu0 0.0
        %2907 = vmatprep.subr.mxu0 0.0
        %2908 = vmatpush2.msra.mxu0 0.0
        %2909 = vmatprep.subr.mxu0 0.0
        %2910 = vmatpush2.msra.mxu0 0.0
        %2911 = vmatprep.subr.mxu0 0.0
        %2912 = vmatpush2.msra.mxu0 0.0
        %2913 = vmatprep.subr.mxu0 0.0
        %2914 = vmatpush2.msra.mxu0 0.0
        %2915 = vmatprep.subr.mxu0 0.0
        %2916 = vmatpush2.msra.mxu0 0.0
        %2917 = vmatprep.subr.mxu0 0.0
        %2918 = vmatpush2.msra.mxu0 0.0
        %2919 = vmatprep.subr.mxu0 0.0
        %2920 = vmatpush2.msra.mxu0 0.0
        %2921 = vmatprep.subr.mxu0 0.0
        %2922 = vmatpush2.msra.mxu0 0.0
        %2923 = vmatprep.subr.mxu0 0.0
        %2924 = vmatpush2.msra.mxu0 0.0
        %2925 = vmatprep.subr.mxu0 0.0
        %2926 = vmatpush2.msra.mxu0 0.0
        %2927 = vmatprep.subr.mxu0 0.0
        %2928 = vmatpush2.msra.mxu0 0.0
        %2929 = vmatprep.subr.mxu0 0.0
        %2930 = vmatpush2.msra.mxu0 0.0
        %2931 = vmatprep.subr.mxu0 0.0
        %2932 = vmatpush2.msra.mxu0 0.0
        %2933 = vmatprep.mubr.f32.mxu0 0.0
        %2934 = vmatmul.mubr.f32.gmra.mxu0 %v2861
        %v2935 = vpop.f32.mrf.mxu0
        %v2936 = vadd.f32 0.0, %v2935
        %v2937 = vpop.f32.mrf.mxu0
        %2938 = vmatprep.mubr.f32.mxu0 0.0
        %2939 = vmatmul.mubr.f32.gmra.mxu0 %v2864
        %v2940 = vpop.f32.mrf.mxu0
        %v2941 = vadd.f32 0.0, %v2940
        %v2942 = vpop.f32.mrf.mxu0
        %2943 = vdwg.mxu0
        %v2944 = vsel %vm261, %v2516, 0.0
        %v2945 = vsel %vm261, %v2600, 0.0
        %v2946 = vadd.f32 %v2944, %v2945
        %v2947 = vsel %vm261, %v2684, 0.0
        %v2948 = vadd.f32 %v2946, %v2947
        %v2949 = vsel %vm261, %v2768, 0.0
        %v2950 = vadd.f32 %v2948, %v2949
        %v2951 = vsel %vm261, %v2852, 0.0
        %v2952 = vadd.f32 %v2950, %v2951
        %v2953 = vsel %vm261, %v2936, 0.0
        %v2954 = vadd.f32 %v2952, %v2953
        %v2955 = vsel %vm261, %v2521, 0.0
        %v2956 = vsel %vm261, %v2605, 0.0
        %v2957 = vadd.f32 %v2955, %v2956
        %v2958 = vsel %vm261, %v2689, 0.0
        %v2959 = vadd.f32 %v2957, %v2958
        %v2960 = vsel %vm261, %v2773, 0.0
        %v2961 = vadd.f32 %v2959, %v2960
        %v2962 = vsel %vm261, %v2857, 0.0
        %v2963 = vadd.f32 %v2961, %v2962
        %v2964 = vsel %vm261, %v2941, 0.0
        %v2965 = vadd.f32 %v2963, %v2964
        %v2966 = vlaneseq
        %v2967 = vshrl.u32 %v2966, 7
        %v2968 = vsub.s32 0, %v2967
        %v2969 = vrot.slane %v259, %v2968
        %v2970 = vadd.f32 %v2954, %v2969
        %v2971 = vadd.f32 %v2965, %v2969
        %v2972 = vadd.f32 %v253, %v2970
        %v2973 = vadd.f32 %v254, %v2971
        %v2974 = vsel %vm261, %v2972, 0.0
        %2975 = vadd.xlane.f32.xlu0 %v2974
        %v2976 = vpop.xlane.xlu0 %2975
        %v2977 = vsel %vm261, %v2973, 0.0
        %2978 = vadd.xlane.f32.xlu0 %v2977
        %v2979 = vpop.xlane.xlu0 %2978
        %v2980 = vmul.f32 %v2976, %v268
        %v2981 = vmul.f32 %v2979, %v268
        %v2982 = vsub.f32 %v2972, %v2980
        %v2983 = vsub.f32 %v2973, %v2981
        %v2984 = vmul.f32 %v2982, %v2982
        %v2985 = vmul.f32 %v2983, %v2983
        %v2986 = vsel %vm261, %v2984, 0.0
        %2987 = vadd.xlane.f32.xlu0 %v2986
        %v2988 = vpop.xlane.xlu0 %2987
        %v2989 = vsel %vm261, %v2985, 0.0
        %2990 = vadd.xlane.f32.xlu0 %v2989
        %v2991 = vpop.xlane.xlu0 %2990
        %v2992 = vmul.f32 %v2988, %v268
        %v2993 = vmul.f32 %v2991, %v268
        %v2994 = vadd.f32 %v2992, 1e-05
        %v2995 = vadd.f32 %v2993, 1e-05
        %v2996 = vrsqrt.pop %v2994
        %v2997 = vrsqrt.pop %v2995
        %v2998 = vmul.f32 %v2982, %v2996
        %v2999 = vmul.f32 %v2983, %v2997
        %v3000 = vlaneseq
        %v3001 = vshrl.u32 %v3000, 7
        %v3002 = vsub.s32 0, %v3001
        %v3003 = vrot.slane %v257, %v3002
        %v3004 = vmul.f32 %v2998, %v3003
        %v3005 = vmul.f32 %v2999, %v3003
        %v3006 = vlaneseq
        %v3007 = vshrl.u32 %v3006, 7
        %v3008 = vsub.s32 0, %v3007
        %v3009 = vrot.slane %v258, %v3008
        %v3010 = vadd.f32 %v3004, %v3009
        %v3011 = vadd.f32 %v3005, %v3009
        %v3012 = vld [vmem:[%s4] sm:$0xff]
        %v3013 = vld [vmem:[%s4 + $0x8] sm:$0xff]
        %v3014 = vld [vmem:[%s4 + $0x10] sm:$0xff]
        %v3015 = vld [vmem:[%s4 + $0x18] sm:$0xff]
        %v3016 = vld [vmem:[%s4 + $0x20] sm:$0xff]
        %v3017 = vld [vmem:[%s4 + $0x28] sm:$0xff]
        %v3018 = vld [vmem:[%s4 + $0x30] sm:$0xff]
        %v3019 = vld [vmem:[%s4 + $0x38] sm:$0xff]
        %v3020 = vld [vmem:[%s4 + $0x40] sm:$0xff]
        %v3021 = vld [vmem:[%s4 + $0x48] sm:$0xff]
        %v3022 = vld [vmem:[%s4 + $0x50] sm:$0xff]
        %v3023 = vld [vmem:[%s4 + $0x58] sm:$0xff]
        %v3024 = vld [vmem:[%s4 + $0x60] sm:$0xff]
        %v3025 = vld [vmem:[%s4 + $0x68] sm:$0xff]
        %v3026 = vld [vmem:[%s4 + $0x70] sm:$0xf]
        %v3027 = vld [vmem:[%s4 + $0x78] sm:$0xf]
        %s3028 = scalar_lea.vmem %s4, 116
        %v3029 = vld [vmem:[%s3028] ss:$8 sm:$0x3]
        %v3031 = vlaneseq
        %v3032 = vshrl.u32 %v3031, 7
        %v3033 = vsub.s32 0, %v3032
        %v3034 = vrot.slane %v3029, %v3033
        %v3035 = vlaneseq
        %v3036 = vshrl.u32 %v3035, 7
        %v3037 = vsub.s32 1, %v3036
        %v3038 = vrot.slane %v3029, %v3037
        %v3042 = vsel %vm261, %v3010, 0
        %v3045 = vsel %vm261, %v3011, 0
        %v3048 = vsel %vm336, %v3026, 0
        %v3051 = vsel %vm336, %v3027, 0
        %3053 = vmatprep.subr.mxu0 0.0
        %3054 = vmatpush1.msra.mxu0 0.0
        %3055 = vmatprep.subr.mxu0 0.0
        %3056 = vmatpush1.msra.mxu0 0.0
        %3057 = vmatprep.subr.mxu0 0.0
        %3058 = vmatpush1.msra.mxu0 0.0
        %3059 = vmatprep.subr.mxu0 0.0
        %3060 = vmatpush1.msra.mxu0 0.0
        %3061 = vmatprep.subr.mxu0 0.0
        %3062 = vmatpush1.msra.mxu0 0.0
        %3063 = vmatprep.subr.mxu0 0.0
        %3064 = vmatpush1.msra.mxu0 0.0
        %3065 = vmatprep.subr.mxu0 0.0
        %3066 = vmatpush1.msra.mxu0 0.0
        %3067 = vmatprep.subr.mxu0 0.0
        %3068 = vmatpush1.msra.mxu0 0.0
        %3069 = vmatprep.subr.mxu0 %v3051
        %3070 = vmatpush1.msra.mxu0 %v3048
        %3071 = vmatprep.subr.mxu0 %v3025
        %3072 = vmatpush1.msra.mxu0 %v3024
        %3073 = vmatprep.subr.mxu0 %v3023
        %3074 = vmatpush1.msra.mxu0 %v3022
        %3075 = vmatprep.subr.mxu0 %v3021
        %3076 = vmatpush1.msra.mxu0 %v3020
        %3077 = vmatprep.subr.mxu0 %v3019
        %3078 = vmatpush1.msra.mxu0 %v3018
        %3079 = vmatprep.subr.mxu0 %v3017
        %3080 = vmatpush1.msra.mxu0 %v3016
        %3081 = vmatprep.subr.mxu0 %v3015
        %3082 = vmatpush1.msra.mxu0 %v3014
        %3083 = vmatprep.subr.mxu0 %v3013
        %3084 = vmatpush1.msra.mxu0 %v3012
        %3085 = vmatprep.subr.mxu0 0.0
        %3086 = vmatpush2.msra.mxu0 0.0
        %3087 = vmatprep.subr.mxu0 0.0
        %3088 = vmatpush2.msra.mxu0 0.0
        %3089 = vmatprep.subr.mxu0 0.0
        %3090 = vmatpush2.msra.mxu0 0.0
        %3091 = vmatprep.subr.mxu0 0.0
        %3092 = vmatpush2.msra.mxu0 0.0
        %3093 = vmatprep.subr.mxu0 0.0
        %3094 = vmatpush2.msra.mxu0 0.0
        %3095 = vmatprep.subr.mxu0 0.0
        %3096 = vmatpush2.msra.mxu0 0.0
        %3097 = vmatprep.subr.mxu0 0.0
        %3098 = vmatpush2.msra.mxu0 0.0
        %3099 = vmatprep.subr.mxu0 0.0
        %3100 = vmatpush2.msra.mxu0 0.0
        %3101 = vmatprep.subr.mxu0 0.0
        %3102 = vmatpush2.msra.mxu0 0.0
        %3103 = vmatprep.subr.mxu0 0.0
        %3104 = vmatpush2.msra.mxu0 0.0
        %3105 = vmatprep.subr.mxu0 0.0
        %3106 = vmatpush2.msra.mxu0 0.0
        %3107 = vmatprep.subr.mxu0 0.0
        %3108 = vmatpush2.msra.mxu0 0.0
        %3109 = vmatprep.subr.mxu0 0.0
        %3110 = vmatpush2.msra.mxu0 0.0
        %3111 = vmatprep.subr.mxu0 0.0
        %3112 = vmatpush2.msra.mxu0 0.0
        %3113 = vmatprep.subr.mxu0 0.0
        %3114 = vmatpush2.msra.mxu0 0.0
        %3115 = vmatprep.subr.mxu0 0.0
        %3116 = vmatpush2.msra.mxu0 0.0
        %3117 = vmatprep.mubr.f32.mxu0 0.0
        %3118 = vmatmul.mubr.f32.gmra.mxu0 %v3042
        %v3119 = vpop.f32.mrf.mxu0
        %v3120 = vadd.f32 %v3034, %v3119
        %v3121 = vpop.f32.mrf.mxu0
        %v3122 = vadd.f32 %v3038, %v3121
        %3123 = vmatprep.mubr.f32.mxu0 0.0
        %3124 = vmatmul.mubr.f32.gmra.mxu0 %v3045
        %v3125 = vpop.f32.mrf.mxu0
        %v3126 = vadd.f32 %v3034, %v3125
        %v3127 = vpop.f32.mrf.mxu0
        %v3128 = vadd.f32 %v3038, %v3127
        %3129 = vdwg.mxu0
        %v3130 = vmax.f32 %v3120, 0.0
        %v3131 = vmax.f32 %v3122, 0.0
        %v3132 = vmax.f32 %v3126, 0.0
        %v3133 = vmax.f32 %v3128, 0.0
        %v3134 = vld [vmem:[%s5] sm:$0xff]
        %v3135 = vld [vmem:[%s5 + $0x8] sm:$0xff]
        %v3136 = vld [vmem:[%s5 + $0x10] sm:$0xff]
        %v3137 = vld [vmem:[%s5 + $0x18] sm:$0xff]
        %v3138 = vld [vmem:[%s5 + $0x20] sm:$0xff]
        %v3139 = vld [vmem:[%s5 + $0x28] sm:$0xff]
        %v3140 = vld [vmem:[%s5 + $0x30] sm:$0xff]
        %v3141 = vld [vmem:[%s5 + $0x38] sm:$0xff]
        %v3142 = vld [vmem:[%s5 + $0x40] sm:$0xff]
        %v3143 = vld [vmem:[%s5 + $0x48] sm:$0xff]
        %v3144 = vld [vmem:[%s5 + $0x50] sm:$0xff]
        %v3145 = vld [vmem:[%s5 + $0x58] sm:$0xff]
        %v3146 = vld [vmem:[%s5 + $0x60] sm:$0xff]
        %v3147 = vld [vmem:[%s5 + $0x68] sm:$0xff]
        %v3148 = vld [vmem:[%s5 + $0x70] sm:$0xff]
        %v3149 = vld [vmem:[%s5 + $0x78] sm:$0xff]
        %v3150 = vld [vmem:[%s5 + $0x80] sm:$0xff]
        %v3151 = vld [vmem:[%s5 + $0x88] sm:$0xff]
        %v3152 = vld [vmem:[%s5 + $0x90] sm:$0xff]
        %v3153 = vld [vmem:[%s5 + $0x98] sm:$0xff]
        %v3154 = vld [vmem:[%s5 + $0xa0] sm:$0xff]
        %v3155 = vld [vmem:[%s5 + $0xa8] sm:$0xff]
        %v3156 = vld [vmem:[%s5 + $0xb0] sm:$0xff]
        %v3157 = vld [vmem:[%s5 + $0xb8] sm:$0xff]
        %v3158 = vld [vmem:[%s5 + $0xc0] sm:$0xff]
        %v3159 = vld [vmem:[%s5 + $0xc8] sm:$0xff]
        %v3160 = vld [vmem:[%s5 + $0xd0] sm:$0xff]
        %v3161 = vld [vmem:[%s5 + $0xd8] sm:$0xff]
        %v3162 = vld [vmem:[%s5 + $0xe0] sm:$0xff]
        %v3163 = vld [vmem:[%s5 + $0xe8] sm:$0xff]
        %v3164 = vld [vmem:[%s5 + $0xf0] sm:$0xff]
        %v3165 = vld [vmem:[%s5 + $0xf8] sm:$0xff]
        %v3166 = vlaneseq
        %v3167 = vshrl.u32 %v3166, 7
        %v3168 = vsub.s32 0, %v3167
        %v3169 = vrot.slane %v260, %v3168
        %3170 = vmatprep.subr.mxu0 0.0
        %3171 = vmatpush1.msra.mxu0 %v3149
        %3172 = vmatprep.subr.mxu0 0.0
        %3173 = vmatpush1.msra.mxu0 %v3148
        %3174 = vmatprep.subr.mxu0 0.0
        %3175 = vmatpush1.msra.mxu0 %v3147
        %3176 = vmatprep.subr.mxu0 0.0
        %3177 = vmatpush1.msra.mxu0 %v3146
        %3178 = vmatprep.subr.mxu0 0.0
        %3179 = vmatpush1.msra.mxu0 %v3145
        %3180 = vmatprep.subr.mxu0 0.0
        %3181 = vmatpush1.msra.mxu0 %v3144
        %3182 = vmatprep.subr.mxu0 0.0
        %3183 = vmatpush1.msra.mxu0 %v3143
        %3184 = vmatprep.subr.mxu0 0.0
        %3185 = vmatpush1.msra.mxu0 %v3142
        %3186 = vmatprep.subr.mxu0 0.0
        %3187 = vmatpush1.msra.mxu0 %v3141
        %3188 = vmatprep.subr.mxu0 0.0
        %3189 = vmatpush1.msra.mxu0 %v3140
        %3190 = vmatprep.subr.mxu0 0.0
        %3191 = vmatpush1.msra.mxu0 %v3139
        %3192 = vmatprep.subr.mxu0 0.0
        %3193 = vmatpush1.msra.mxu0 %v3138
        %3194 = vmatprep.subr.mxu0 0.0
        %3195 = vmatpush1.msra.mxu0 %v3137
        %3196 = vmatprep.subr.mxu0 0.0
        %3197 = vmatpush1.msra.mxu0 %v3136
        %3198 = vmatprep.subr.mxu0 0.0
        %3199 = vmatpush1.msra.mxu0 %v3135
        %3200 = vmatprep.subr.mxu0 0.0
        %3201 = vmatpush1.msra.mxu0 %v3134
        %3202 = vmatprep.subr.mxu0 0.0
        %3203 = vmatpush2.msra.mxu0 %v3165
        %3204 = vmatprep.subr.mxu0 0.0
        %3205 = vmatpush2.msra.mxu0 %v3164
        %3206 = vmatprep.subr.mxu0 0.0
        %3207 = vmatpush2.msra.mxu0 %v3163
        %3208 = vmatprep.subr.mxu0 0.0
        %3209 = vmatpush2.msra.mxu0 %v3162
        %3210 = vmatprep.subr.mxu0 0.0
        %3211 = vmatpush2.msra.mxu0 %v3161
        %3212 = vmatprep.subr.mxu0 0.0
        %3213 = vmatpush2.msra.mxu0 %v3160
        %3214 = vmatprep.subr.mxu0 0.0
        %3215 = vmatpush2.msra.mxu0 %v3159
        %3216 = vmatprep.subr.mxu0 0.0
        %3217 = vmatpush2.msra.mxu0 %v3158
        %3218 = vmatprep.subr.mxu0 0.0
        %3219 = vmatpush2.msra.mxu0 %v3157
        %3220 = vmatprep.subr.mxu0 0.0
        %3221 = vmatpush2.msra.mxu0 %v3156
        %3222 = vmatprep.subr.mxu0 0.0
        %3223 = vmatpush2.msra.mxu0 %v3155
        %3224 = vmatprep.subr.mxu0 0.0
        %3225 = vmatpush2.msra.mxu0 %v3154
        %3226 = vmatprep.subr.mxu0 0.0
        %3227 = vmatpush2.msra.mxu0 %v3153
        %3228 = vmatprep.subr.mxu0 0.0
        %3229 = vmatpush2.msra.mxu0 %v3152
        %3230 = vmatprep.subr.mxu0 0.0
        %3231 = vmatpush2.msra.mxu0 %v3151
        %3232 = vmatprep.subr.mxu0 0.0
        %3233 = vmatpush2.msra.mxu0 %v3150
        %3234 = vmatprep.mubr.f32.mxu0 %v3131
        %3235 = vmatmul.mubr.f32.gmra.mxu0 %v3130
        %v3236 = vpop.f32.mrf.mxu0
        %v3237 = vadd.f32 %v3169, %v3236
        %v3238 = vpop.f32.mrf.mxu0
        %3239 = vmatprep.mubr.f32.mxu0 %v3133
        %3240 = vmatmul.mubr.f32.gmra.mxu0 %v3132
        %v3241 = vpop.f32.mrf.mxu0
        %v3242 = vadd.f32 %v3169, %v3241
        %v3243 = vpop.f32.mrf.mxu0
        %3244 = vdwg.mxu0
        %v3245 = vadd.f32 %v2972, %v3237
        %v3246 = vadd.f32 %v2973, %v3242
        %3247 = vst.msk [vmem:[%s245] sm:$0xff] %vm261, %v3245
        %3248 = vst.msk [vmem:[%s245 + $0x8] sm:$0xff] %vm261, %v3246
        %s3249 = sand.u32 %s159, 1
        %s3250 = scalar_lea.sflag [#allocation3], %s3249
        %s3251 = sand.u32 %s159, 1
        %s3252 = smul.addr %s3251, 16
        %s3253 = scalar_lea.vmem [#allocation2], %s3252
        // Predicated region
        $region45: #{tpu_custom_call.1} parent=43 // pred_check
          %p3254 = pneg %p169
        $region46: #{tpu_custom_call.1} parent=43 // pred_check_branch
          %3256 = sbr.rel (%p3254) target = $region48
        $region47: #{tpu_custom_call.1} parent=43 // pred_region
          %s3257 = smul.u32 2, %s20
          %s3259 = ssub.s32 256, 256
          %3260 = vsyncadd %s3250, %s3259
          %s3261 = smul.addr %s3257, 128
          %s3262 = scalar_lea.hbm %s6, %s3261
          %s3263 = sshll.u32 %s3253, 4
          %s3264 = int_to_ptr.vmem [resolvable:$true] %s3263
          %3269 = dma.vmem_to_hbm [thread:$0]  %s3264, 256, %s3262, %s3250, 128, 128, 8
        $region48: #{tpu_custom_call.1} parent=43 // pred_fallthru
          _
      $region44: #{tpu_custom_call.1} parent=5 // pred_fallthru
        _
      %p3270 = scmp.le.s32.totalorder 2, %s15
      // Predicated region
      $region49: #{tpu_custom_call.1} parent=5 // pred_check
        %p3271 = pneg %p3270
      $region50: #{tpu_custom_call.1} parent=5 // pred_check_branch
        %3273 = sbr.rel (%p3271) target = $region52
      $region51: #{tpu_custom_call.1} parent=5 // pred_region
        %s3274 = ssub.s32 %s15, 2
        // Predicated region
        $region53: #{tpu_custom_call.1} parent=51 // pred_check
          %p3275 = pneg %p175
        $region54: #{tpu_custom_call.1} parent=51 // pred_check_branch
          %3277 = sbr.rel (%p3275) target = $region56
        $region55: #{tpu_custom_call.1} parent=51 // pred_region
          %s3278 = sand.u32 %s160, 1
          %s3279 = scalar_lea.sflag [#allocation3], %s3278
          %s3280 = sand.u32 %s160, 1
          %s3281 = smul.addr %s3280, 16
          %s3282 = scalar_lea.vmem [#allocation2], %s3281
          %3283 = dma.done %s3279, 256
        $region56: #{tpu_custom_call.1} parent=51 // pred_fallthru
          _
      $region52: #{tpu_custom_call.1} parent=5 // pred_fallthru
        _
    $region6: #{tpu_custom_call.1} parent=1 // loop_footer
      %s19 = sadd.s32 1, %s15
    $region7: #{tpu_custom_call.1} parent=1 // loop_footer_branch
      %14 = sbr.rel target = $region3
    $region8: #{tpu_custom_call.1} parent=1 // loop_exit
      _
    %3284 = vsyncpa [#allocation3], 1
    %s3285 = scalar_lea.sflag [#allocation3], 1
    %3286 = vsyncpa %s3285, 1

</llo_original>
